<compile_context>
chip_gen: v7x
topology: tpu7x:2x2x1
jax: 0.10.0
libtpu: 0.0.40
codegen_flags: <defaults>
</compile_context>

<pallas_src>
import jax
import jax.numpy as jnp
from jax.experimental import pallas as pl
from jax.experimental.pallas import tpu as pltpu


IN_FEATURES = 28 * 28          # 784 (multiple of 8; kept unpadded on x / w1 rows)
HIDDEN = 200
OUT_FEATURES = 10

# Lane-aligned (multiples of 128) padded dims for hidden/output features.
HID_PAD = 256                  # 2 * 128
OUT_PAD = 128                  # 1 * 128

# Batch tile.  256 fills the v6e/v7x 256x256 MXU in M and amortizes per-step
# pipeline overhead; VMEM stays far below limits on all generations.
TB = 256


def _mlp_kernel(x_ref,
                w1_ref, b1_ref,
                w2_ref, b2_ref,
                w3_ref, b3_ref,
                w4_ref, b4_ref,
                o_ref):
    """One (TB, 784) bf16 batch tile through all four layers.

    bf16 operands on the MXU, f32 accumulation; bias-add and ReLU on the VPU
    in f32; bf16 lane-dense store.
    """
    h = jnp.dot(x_ref[...], w1_ref[...],
                preferred_element_type=jnp.float32) + b1_ref[...]
    h = jnp.maximum(h, 0.0)                                   # (TB, 256) f32

    h = jnp.dot(h.astype(jnp.bfloat16), w2_ref[...],
                preferred_element_type=jnp.float32) + b2_ref[...]
    h = jnp.maximum(h, 0.0)                                   # (TB, 256)

    h = jnp.dot(h.astype(jnp.bfloat16), w3_ref[...],
                preferred_element_type=jnp.float32) + b3_ref[...]
    h = jnp.maximum(h, 0.0)                                   # (TB, 256)

    h = jnp.dot(h.astype(jnp.bfloat16), w4_ref[...],
                preferred_element_type=jnp.float32) + b4_ref[...]
    h = jnp.maximum(h, 0.0)                                   # (TB, 128)

    o_ref[...] = h.astype(o_ref.dtype)                        # bf16 lane-dense store


def mlp_forward(x, p):
    """x: (B, 784) float32 or bfloat16.  p: params from pad_and_cast_params."""
    B = x.shape[0]
    num_tiles = pl.cdiv(B, TB)
    Bp = num_tiles * TB

    # bf16 activation stream; pad the batch axis only if needed (no feature pad).
    x_in = x if x.dtype == jnp.bfloat16 else x.astype(jnp.bfloat16)
    if Bp != B:
        x_in = jnp.pad(x_in, ((0, Bp - B), (0, 0)))

    args = (
        x_in,
        p["w1"], p["b1"],
        p["w2"], p["b2"],
        p["w3"], p["b3"],
        p["w4"], p["b4"],
    )

    # x / out are tiled over the batch grid; weights & biases get a constant
    # index_map so they are DMA'd once and stay resident in VMEM.
    resident = lambda a: pl.BlockSpec(a.shape, lambda i: (0, 0))
    in_specs = [pl.BlockSpec((TB, IN_FEATURES), lambda i: (i, 0))] + \
               [resident(a) for a in args[1:]]
    out_specs = pl.BlockSpec((TB, OUT_PAD), lambda i: (i, 0))

    weight_bytes = sum(int(a.size) * a.dtype.itemsize for a in args[1:])
    flops = 2 * Bp * (IN_FEATURES * HID_PAD
                      + 2 * HID_PAD * HID_PAD
                      + HID_PAD * OUT_PAD)
    bytes_accessed = int(x_in.size) * 2 + Bp * OUT_PAD * 2 + weight_bytes

    out = pl.pallas_call(
        _mlp_kernel,
        out_shape=jax.ShapeDtypeStruct((Bp, OUT_PAD), jnp.bfloat16),
        grid=(num_tiles,),
        in_specs=in_specs,
        out_specs=out_specs,
        compiler_params=pltpu.CompilerParams(
            dimension_semantics=("parallel",)),
        cost_estimate=pl.CostEstimate(
            flops=flops, transcendentals=0, bytes_accessed=bytes_accessed),
    )(*args)

    return out[:B, :OUT_FEATURES].astype(jnp.float32)


def init_params(key):
    """PyTorch nn.Linear default init: U(-k, k), k = 1/sqrt(fan_in).
    Weights stored transposed vs. torch, i.e. (in_features, out_features)."""
    dims = [(IN_FEATURES, HIDDEN), (HIDDEN, HIDDEN),
            (HIDDEN, HIDDEN), (HIDDEN, OUT_FEATURES)]
    params = {}
    keys = jax.random.split(key, 2 * len(dims))
    for i, (fan_in, fan_out) in enumerate(dims):
        bound = 1.0 / (fan_in ** 0.5)
        params[f"w{i+1}"] = jax.random.uniform(
            keys[2 * i], (fan_in, fan_out), jnp.float32, -bound, bound)
        params[f"b{i+1}"] = jax.random.uniform(
            keys[2 * i + 1], (1, fan_out), jnp.float32, -bound, bound)
    return params


def pad_and_cast_params(params):
    """Zero-pad weight columns / hidden rows to lane-aligned shapes; weights -> bf16.

    w1 keeps its 784 input rows (x feature dim is not padded)."""
    dims = [(IN_FEATURES, HID_PAD), (HID_PAD, HID_PAD),
            (HID_PAD, HID_PAD), (HID_PAD, OUT_PAD)]
    out = {}
    for i, (rp, cp) in enumerate(dims, start=1):
        w = params[f"w{i}"]
        b = params[f"b{i}"]
        out[f"w{i}"] = jnp.pad(
            w, ((0, rp - w.shape[0]), (0, cp - w.shape[1]))).astype(jnp.bfloat16)
        out[f"b{i}"] = jnp.pad(b, ((0, 0), (0, cp - b.shape[1])))  # stays f32
    return out


def _reference_bf16(x, p):
    """Mirrors the kernel's math (bf16 operands, f32 accumulation, bf16 out)."""
    h = x.astype(jnp.bfloat16)
    for i in range(1, 5):
        h = jnp.maximum(
            jnp.dot(h, p[f"w{i}"], preferred_element_type=jnp.float32)
            + p[f"b{i}"], 0.0)
        if i < 4:
            h = h.astype(jnp.bfloat16)
    return h.astype(jnp.bfloat16).astype(jnp.float32)[:, :OUT_FEATURES]


def _reference_f32(x, params):
    """Full-f32 equivalent of the torch module (sanity check, loose tol)."""
    h = x
    for i in range(1, 5):
        h = jnp.maximum(h @ params[f"w{i}"] + params[f"b{i}"], 0.0)
    return h


if __name__ == "__main__":
    key = jax.random.PRNGKey(0)
    pkey, xkey = jax.random.split(key)

    params = init_params(pkey)
    padded = pad_and_cast_params(params)

    batch = 8
    x = jax.random.normal(xkey, (batch, IN_FEATURES), jnp.float32)

    out = jax.block_until_ready(mlp_forward(x, padded))
    assert out.shape == (batch, OUT_FEATURES)

    # Tight check against a reference using the exact same bf16 math.
    ref_bf16 = _reference_bf16(x, padded)
    assert jnp.allclose(out, ref_bf16, atol=1e-2, rtol=1e-2)

    # Loose sanity check against the full-f32 torch-equivalent forward
    # (differences come only from bf16 rounding of inputs/weights/output).
    ref_f32 = _reference_f32(x, params)
    assert jnp.allclose(out, ref_f32, atol=6e-2, rtol=6e-2)

    print("KERNEL_OK")
</pallas_src>

<mosaic_0001>
module attributes {stable_mosaic.version = 11 : i64} {
  func.func @_mlp_kernel(%arg0: i32, %arg1: memref<256x784xbf16, #tpu.memory_space<vmem>>, %arg2: memref<784x256xbf16, #tpu.memory_space<vmem>>, %arg3: memref<1x256xf32, #tpu.memory_space<vmem>>, %arg4: memref<256x256xbf16, #tpu.memory_space<vmem>>, %arg5: memref<1x256xf32, #tpu.memory_space<vmem>>, %arg6: memref<256x256xbf16, #tpu.memory_space<vmem>>, %arg7: memref<1x256xf32, #tpu.memory_space<vmem>>, %arg8: memref<256x128xbf16, #tpu.memory_space<vmem>>, %arg9: memref<1x128xf32, #tpu.memory_space<vmem>>, %arg10: memref<256x128xbf16, #tpu.memory_space<vmem>>) attributes {dimension_semantics = [#tpu.dimension_semantics<parallel>], iteration_bounds = array<i64: 1>, scalar_prefetch = 0 : i64, scratch_operands = 0 : i64, tpu.core_type = #tpu.core_type<tc>, window_params = [{transform_indices = @transform_0, window_bounds = array<i64: 256, 784>}, {pipeline_mode = #tpu.pipeline_mode<synchronous>, transform_indices = @transform_1, window_bounds = array<i64: 784, 256>}, {pipeline_mode = #tpu.pipeline_mode<synchronous>, transform_indices = @transform_2, window_bounds = array<i64: 1, 256>}, {pipeline_mode = #tpu.pipeline_mode<synchronous>, transform_indices = @transform_3, window_bounds = array<i64: 256, 256>}, {pipeline_mode = #tpu.pipeline_mode<synchronous>, transform_indices = @transform_4, window_bounds = array<i64: 1, 256>}, {pipeline_mode = #tpu.pipeline_mode<synchronous>, transform_indices = @transform_5, window_bounds = array<i64: 256, 256>}, {pipeline_mode = #tpu.pipeline_mode<synchronous>, transform_indices = @transform_6, window_bounds = array<i64: 1, 256>}, {pipeline_mode = #tpu.pipeline_mode<synchronous>, transform_indices = @transform_7, window_bounds = array<i64: 256, 128>}, {pipeline_mode = #tpu.pipeline_mode<synchronous>, transform_indices = @transform_8, window_bounds = array<i64: 1, 128>}, {transform_indices = @transform_9, window_bounds = array<i64: 256, 128>}]} {
    %c0 = arith.constant 0 : index
    %c0_0 = arith.constant 0 : index
    %0 = vector.load %arg1[%c0, %c0_0] : memref<256x784xbf16, #tpu.memory_space<vmem>>, vector<256x784xbf16>
    %c0_1 = arith.constant 0 : index
    %c0_2 = arith.constant 0 : index
    %1 = vector.load %arg2[%c0_1, %c0_2] : memref<784x256xbf16, #tpu.memory_space<vmem>>, vector<784x256xbf16>
    %cst = arith.constant dense<0.000000e+00> : vector<256x256xf32>
    %2 = tpu.matmul %0, %1, %cst {dimension_numbers = #tpu.dot_dimension_numbers<[1], [0], [0], [1], [0, 0, 1, 1], [], []>} : vector<256x784xbf16>, vector<784x256xbf16>, vector<256x256xf32> -> vector<256x256xf32>
    %c0_3 = arith.constant 0 : index
    %c0_4 = arith.constant 0 : index
    %3 = vector.load %arg3[%c0_3, %c0_4] : memref<1x256xf32, #tpu.memory_space<vmem>>, vector<1x256xf32>
    %4 = vector.broadcast %3 : vector<1x256xf32> to vector<256x256xf32>
    %5 = arith.addf %2, %4 : vector<256x256xf32>
    %cst_5 = arith.constant 0.000000e+00 : f32
    %6 = vector.broadcast %cst_5 : f32 to vector<256x256xf32>
    %7 = arith.maximumf %5, %6 : vector<256x256xf32>
    %8 = arith.truncf %7 : vector<256x256xf32> to vector<256x256xbf16>
    %c0_6 = arith.constant 0 : index
    %c0_7 = arith.constant 0 : index
    %9 = vector.load %arg4[%c0_6, %c0_7] : memref<256x256xbf16, #tpu.memory_space<vmem>>, vector<256x256xbf16>
    %cst_8 = arith.constant dense<0.000000e+00> : vector<256x256xf32>
    %10 = tpu.matmul %8, %9, %cst_8 {dimension_numbers = #tpu.dot_dimension_numbers<[1], [0], [0], [1], [0, 0, 1, 1], [], []>} : vector<256x256xbf16>, vector<256x256xbf16>, vector<256x256xf32> -> vector<256x256xf32>
    %c0_9 = arith.constant 0 : index
    %c0_10 = arith.constant 0 : index
    %11 = vector.load %arg5[%c0_9, %c0_10] : memref<1x256xf32, #tpu.memory_space<vmem>>, vector<1x256xf32>
    %12 = vector.broadcast %11 : vector<1x256xf32> to vector<256x256xf32>
    %13 = arith.addf %10, %12 : vector<256x256xf32>
    %cst_11 = arith.constant 0.000000e+00 : f32
    %14 = vector.broadcast %cst_11 : f32 to vector<256x256xf32>
    %15 = arith.maximumf %13, %14 : vector<256x256xf32>
    %16 = arith.truncf %15 : vector<256x256xf32> to vector<256x256xbf16>
    %c0_12 = arith.constant 0 : index
    %c0_13 = arith.constant 0 : index
    %17 = vector.load %arg6[%c0_12, %c0_13] : memref<256x256xbf16, #tpu.memory_space<vmem>>, vector<256x256xbf16>
    %cst_14 = arith.constant dense<0.000000e+00> : vector<256x256xf32>
    %18 = tpu.matmul %16, %17, %cst_14 {dimension_numbers = #tpu.dot_dimension_numbers<[1], [0], [0], [1], [0, 0, 1, 1], [], []>} : vector<256x256xbf16>, vector<256x256xbf16>, vector<256x256xf32> -> vector<256x256xf32>
    %c0_15 = arith.constant 0 : index
    %c0_16 = arith.constant 0 : index
    %19 = vector.load %arg7[%c0_15, %c0_16] : memref<1x256xf32, #tpu.memory_space<vmem>>, vector<1x256xf32>
    %20 = vector.broadcast %19 : vector<1x256xf32> to vector<256x256xf32>
    %21 = arith.addf %18, %20 : vector<256x256xf32>
    %cst_17 = arith.constant 0.000000e+00 : f32
    %22 = vector.broadcast %cst_17 : f32 to vector<256x256xf32>
    %23 = arith.maximumf %21, %22 : vector<256x256xf32>
    %24 = arith.truncf %23 : vector<256x256xf32> to vector<256x256xbf16>
    %c0_18 = arith.constant 0 : index
    %c0_19 = arith.constant 0 : index
    %25 = vector.load %arg8[%c0_18, %c0_19] : memref<256x128xbf16, #tpu.memory_space<vmem>>, vector<256x128xbf16>
    %cst_20 = arith.constant dense<0.000000e+00> : vector<256x128xf32>
    %26 = tpu.matmul %24, %25, %cst_20 {dimension_numbers = #tpu.dot_dimension_numbers<[1], [0], [0], [1], [0, 0, 1, 1], [], []>} : vector<256x256xbf16>, vector<256x128xbf16>, vector<256x128xf32> -> vector<256x128xf32>
    %c0_21 = arith.constant 0 : index
    %c0_22 = arith.constant 0 : index
    %27 = vector.load %arg9[%c0_21, %c0_22] : memref<1x128xf32, #tpu.memory_space<vmem>>, vector<1x128xf32>
    %28 = vector.broadcast %27 : vector<1x128xf32> to vector<256x128xf32>
    %29 = arith.addf %26, %28 : vector<256x128xf32>
    %cst_23 = arith.constant 0.000000e+00 : f32
    %30 = vector.broadcast %cst_23 : f32 to vector<256x128xf32>
    %31 = arith.maximumf %29, %30 : vector<256x128xf32>
    %32 = arith.truncf %31 : vector<256x128xf32> to vector<256x128xbf16>
    %c0_24 = arith.constant 0 : index
    %c0_25 = arith.constant 0 : index
    %33 = vector.load %arg10[%c0_24, %c0_25] : memref<256x128xbf16, #tpu.memory_space<vmem>>, vector<256x128xbf16>
    tpu.vector_store %arg10[%c0_24, %c0_25], %32 {strides = array<i32>} : memref<256x128xbf16, #tpu.memory_space<vmem>>, vector<256x128xbf16>,
    return
  }
  func.func @transform_0(%arg0: i32) -> (i32, i32) {
    %c0_i32 = arith.constant 0 : i32
    %c0_i32_0 = arith.constant 0 : i32
    return %arg0, %c0_i32 : i32, i32
  }
  func.func @transform_1(%arg0: i32) -> (i32, i32) {
    %c0_i32 = arith.constant 0 : i32
    %c0_i32_0 = arith.constant 0 : i32
    %c0_i32_1 = arith.constant 0 : i32
    return %c0_i32, %c0_i32_0 : i32, i32
  }
  func.func @transform_2(%arg0: i32) -> (i32, i32) {
    %c0_i32 = arith.constant 0 : i32
    %c0_i32_0 = arith.constant 0 : i32
    %c0_i32_1 = arith.constant 0 : i32
    return %c0_i32, %c0_i32_0 : i32, i32
  }
  func.func @transform_3(%arg0: i32) -> (i32, i32) {
    %c0_i32 = arith.constant 0 : i32
    %c0_i32_0 = arith.constant 0 : i32
    %c0_i32_1 = arith.constant 0 : i32
    return %c0_i32, %c0_i32_0 : i32, i32
  }
  func.func @transform_4(%arg0: i32) -> (i32, i32) {
    %c0_i32 = arith.constant 0 : i32
    %c0_i32_0 = arith.constant 0 : i32
    %c0_i32_1 = arith.constant 0 : i32
    return %c0_i32, %c0_i32_0 : i32, i32
  }
  func.func @transform_5(%arg0: i32) -> (i32, i32) {
    %c0_i32 = arith.constant 0 : i32
    %c0_i32_0 = arith.constant 0 : i32
    %c0_i32_1 = arith.constant 0 : i32
    return %c0_i32, %c0_i32_0 : i32, i32
  }
  func.func @transform_6(%arg0: i32) -> (i32, i32) {
    %c0_i32 = arith.constant 0 : i32
    %c0_i32_0 = arith.constant 0 : i32
    %c0_i32_1 = arith.constant 0 : i32
    return %c0_i32, %c0_i32_0 : i32, i32
  }
  func.func @transform_7(%arg0: i32) -> (i32, i32) {
    %c0_i32 = arith.constant 0 : i32
    %c0_i32_0 = arith.constant 0 : i32
    %c0_i32_1 = arith.constant 0 : i32
    return %c0_i32, %c0_i32_0 : i32, i32
  }
  func.func @transform_8(%arg0: i32) -> (i32, i32) {
    %c0_i32 = arith.constant 0 : i32
    %c0_i32_0 = arith.constant 0 : i32
    %c0_i32_1 = arith.constant 0 : i32
    return %c0_i32, %c0_i32_0 : i32, i32
  }
  func.func @transform_9(%arg0: i32) -> (i32, i32) {
    %c0_i32 = arith.constant 0 : i32
    %c0_i32_0 = arith.constant 0 : i32
    return %arg0, %c0_i32 : i32, i32
  }
}

</mosaic_0001>

<llo_original>
// kernel: tpu_custom_call.1
$region0: #{tpu_custom_call.1}
  #allocation0 [shape = 'u32[]', space=smem, size = 0x4, offset = 0x4, fixed_abs, tag = 'smem constant byte address 0x4 - core index']
  #allocation1 [shape = 'u32[144,128]{1,0:T(1,128)}', space=vmem, size = 0x12000, scoped, tag = 'internal scratch']
  %s0 = inlined_call_operand.vmem [shape: bf16[256,784], index: 0, kind: input, shape index: {}]
  %s1 = inlined_call_operand.vmem [shape: bf16[784,256], index: 1, kind: input, shape index: {}]
  %s2 = inlined_call_operand.vmem [shape: f32[1,256], index: 2, kind: input, shape index: {}]
  %s3 = inlined_call_operand.vmem [shape: bf16[256,256], index: 3, kind: input, shape index: {}]
  %s4 = inlined_call_operand.vmem [shape: f32[1,256], index: 4, kind: input, shape index: {}]
  %s5 = inlined_call_operand.vmem [shape: bf16[256,256], index: 5, kind: input, shape index: {}]
  %s6 = inlined_call_operand.vmem [shape: f32[1,256], index: 6, kind: input, shape index: {}]
  %s7 = inlined_call_operand.vmem [shape: bf16[256,128], index: 7, kind: input, shape index: {}]
  %s8 = inlined_call_operand.vmem [shape: f32[1,128], index: 8, kind: input, shape index: {}]
  %s9 = inlined_call_operand.hbm [shape: bf16[256,128], index: 9, kind: output, shape index: {}]
  %s10 = sld [smem:[#allocation0]]
  $region46: #{tpu_custom_call.1} parent=0
    _
  %s12 = ssub.s32 1, %s10
  %s13 = scalar_select 0, %s12, %s10
  $region1: #{tpu_custom_call.1} parent=0
    #allocation2 [shape = 'u8[65536]{0}', space=vmem, size = 0x10000, scoped, tag = 'output window, operand 0, single buffered']
    #allocation3 [shape = 's32[1]{0}', space=sflag, size = 0x4, scoped, tag = 'scoped memory for tpu_custom_call.1']
    %14 = vsyncpa [#allocation3], 0
    // Predicated region
    $region2: #{tpu_custom_call.1} parent=1 // pred_check
      _
    $region3: #{tpu_custom_call.1} parent=1 // pred_check_branch
      %16 = sbr.rel (0) target = $region5
    $region4: #{tpu_custom_call.1} parent=1 // pred_region
      _
    $region5: #{tpu_custom_call.1} parent=1 // pred_fallthru
      _
    // Predicated region
    $region6: #{tpu_custom_call.1} parent=1 // pred_check
      _
    $region7: #{tpu_custom_call.1} parent=1 // pred_check_branch
      %18 = sbr.rel (0) target = $region9
    $region8: #{tpu_custom_call.1} parent=1 // pred_region
      _
    $region9: #{tpu_custom_call.1} parent=1 // pred_fallthru
      _
    // Predicated region
    $region10: #{tpu_custom_call.1} parent=1 // pred_check
      _
    $region11: #{tpu_custom_call.1} parent=1 // pred_check_branch
      %20 = sbr.rel (0) target = $region13
    $region12: #{tpu_custom_call.1} parent=1 // pred_region
      _
    $region13: #{tpu_custom_call.1} parent=1 // pred_fallthru
      _
    // Predicated region
    $region14: #{tpu_custom_call.1} parent=1 // pred_check
      _
    $region15: #{tpu_custom_call.1} parent=1 // pred_check_branch
      %22 = sbr.rel (0) target = $region17
    $region16: #{tpu_custom_call.1} parent=1 // pred_region
      _
    $region17: #{tpu_custom_call.1} parent=1 // pred_fallthru
      _
    // Predicated region
    $region18: #{tpu_custom_call.1} parent=1 // pred_check
      _
    $region19: #{tpu_custom_call.1} parent=1 // pred_check_branch
      %24 = sbr.rel (0) target = $region21
    $region20: #{tpu_custom_call.1} parent=1 // pred_region
      _
    $region21: #{tpu_custom_call.1} parent=1 // pred_fallthru
      _
    // Predicated region
    $region22: #{tpu_custom_call.1} parent=1 // pred_check
      _
    $region23: #{tpu_custom_call.1} parent=1 // pred_check_branch
      %26 = sbr.rel (0) target = $region25
    $region24: #{tpu_custom_call.1} parent=1 // pred_region
      _
    $region25: #{tpu_custom_call.1} parent=1 // pred_fallthru
      _
    // Predicated region
    $region26: #{tpu_custom_call.1} parent=1 // pred_check
      _
    $region27: #{tpu_custom_call.1} parent=1 // pred_check_branch
      %28 = sbr.rel (0) target = $region29
    $region28: #{tpu_custom_call.1} parent=1 // pred_region
      _
    $region29: #{tpu_custom_call.1} parent=1 // pred_fallthru
      _
    // Predicated region
    $region30: #{tpu_custom_call.1} parent=1 // pred_check
      _
    $region31: #{tpu_custom_call.1} parent=1 // pred_check_branch
      %30 = sbr.rel (0) target = $region33
    $region32: #{tpu_custom_call.1} parent=1 // pred_region
      _
    $region33: #{tpu_custom_call.1} parent=1 // pred_fallthru
      _
    // Predicated region
    $region34: #{tpu_custom_call.1} parent=1 // pred_check
      _
    $region35: #{tpu_custom_call.1} parent=1 // pred_check_branch
      %32 = sbr.rel (0) target = $region37
    $region36: #{tpu_custom_call.1} parent=1 // pred_region
      _
    $region37: #{tpu_custom_call.1} parent=1 // pred_fallthru
      _
    %v34 = vld [vmem:[%s0] sm:$0xff]
    %v35 = vld [vmem:[%s0 + $0x8] sm:$0xff]
    %v36 = vld [vmem:[%s0 + $0x10] sm:$0xff]
    %v37 = vld [vmem:[%s0 + $0x18] sm:$0xf]
    %v38 = vld [vmem:[%s0 + $0x1c] sm:$0xff]
    %v39 = vld [vmem:[%s0 + $0x24] sm:$0xff]
    %v40 = vld [vmem:[%s0 + $0x2c] sm:$0xff]
    %v41 = vld [vmem:[%s0 + $0x34] sm:$0xf]
    %v42 = vld [vmem:[%s0 + $0x38] sm:$0xff]
    %v43 = vld [vmem:[%s0 + $0x40] sm:$0xff]
    %v44 = vld [vmem:[%s0 + $0x48] sm:$0xff]
    %v45 = vld [vmem:[%s0 + $0x50] sm:$0xf]
    %v46 = vld [vmem:[%s0 + $0x54] sm:$0xff]
    %v47 = vld [vmem:[%s0 + $0x5c] sm:$0xff]
    %v48 = vld [vmem:[%s0 + $0x64] sm:$0xff]
    %v49 = vld [vmem:[%s0 + $0x6c] sm:$0xf]
    %v50 = vld [vmem:[%s0 + $0x70] sm:$0xff]
    %v51 = vld [vmem:[%s0 + $0x78] sm:$0xff]
    %v52 = vld [vmem:[%s0 + $0x80] sm:$0xff]
    %v53 = vld [vmem:[%s0 + $0x88] sm:$0xf]
    %v54 = vld [vmem:[%s0 + $0x8c] sm:$0xff]
    %v55 = vld [vmem:[%s0 + $0x94] sm:$0xff]
    %v56 = vld [vmem:[%s0 + $0x9c] sm:$0xff]
    %v57 = vld [vmem:[%s0 + $0xa4] sm:$0xf]
    %v58 = vld [vmem:[%s0 + $0xa8] sm:$0xff]
    %v59 = vld [vmem:[%s0 + $0xb0] sm:$0xff]
    %v60 = vld [vmem:[%s0 + $0xb8] sm:$0xff]
    %v61 = vld [vmem:[%s0 + $0xc0] sm:$0xf]
    %v62 = vld [vmem:[%s0 + $0xc4] sm:$0xff]
    %v63 = vld [vmem:[%s0 + $0xcc] sm:$0xff]
    %v64 = vld [vmem:[%s0 + $0xd4] sm:$0xff]
    %v65 = vld [vmem:[%s0 + $0xdc] sm:$0xf]
    %v66 = vld [vmem:[%s0 + $0xe0] sm:$0xff]
    %v67 = vld [vmem:[%s0 + $0xe8] sm:$0xff]
    %v68 = vld [vmem:[%s0 + $0xf0] sm:$0xff]
    %v69 = vld [vmem:[%s0 + $0xf8] sm:$0xf]
    %v70 = vld [vmem:[%s0 + $0xfc] sm:$0xff]
    %v71 = vld [vmem:[%s0 + $0x104] sm:$0xff]
    %v72 = vld [vmem:[%s0 + $0x10c] sm:$0xff]
    %v73 = vld [vmem:[%s0 + $0x114] sm:$0xf]
    %v74 = vld [vmem:[%s0 + $0x118] sm:$0xff]
    %v75 = vld [vmem:[%s0 + $0x120] sm:$0xff]
    %v76 = vld [vmem:[%s0 + $0x128] sm:$0xff]
    %v77 = vld [vmem:[%s0 + $0x130] sm:$0xf]
    %v78 = vld [vmem:[%s0 + $0x134] sm:$0xff]
    %v79 = vld [vmem:[%s0 + $0x13c] sm:$0xff]
    %v80 = vld [vmem:[%s0 + $0x144] sm:$0xff]
    %v81 = vld [vmem:[%s0 + $0x14c] sm:$0xf]
    %v82 = vld [vmem:[%s0 + $0x150] sm:$0xff]
    %v83 = vld [vmem:[%s0 + $0x158] sm:$0xff]
    %v84 = vld [vmem:[%s0 + $0x160] sm:$0xff]
    %v85 = vld [vmem:[%s0 + $0x168] sm:$0xf]
    %v86 = vld [vmem:[%s0 + $0x16c] sm:$0xff]
    %v87 = vld [vmem:[%s0 + $0x174] sm:$0xff]
    %v88 = vld [vmem:[%s0 + $0x17c] sm:$0xff]
    %v89 = vld [vmem:[%s0 + $0x184] sm:$0xf]
    %v90 = vld [vmem:[%s0 + $0x188] sm:$0xff]
    %v91 = vld [vmem:[%s0 + $0x190] sm:$0xff]
    %v92 = vld [vmem:[%s0 + $0x198] sm:$0xff]
    %v93 = vld [vmem:[%s0 + $0x1a0] sm:$0xf]
    %v94 = vld [vmem:[%s0 + $0x1a4] sm:$0xff]
    %v95 = vld [vmem:[%s0 + $0x1ac] sm:$0xff]
    %v96 = vld [vmem:[%s0 + $0x1b4] sm:$0xff]
    %v97 = vld [vmem:[%s0 + $0x1bc] sm:$0xf]
    %v98 = vld [vmem:[%s0 + $0x1c0] sm:$0xff]
    %v99 = vld [vmem:[%s0 + $0x1c8] sm:$0xff]
    %v100 = vld [vmem:[%s0 + $0x1d0] sm:$0xff]
    %v101 = vld [vmem:[%s0 + $0x1d8] sm:$0xf]
    %v102 = vld [vmem:[%s0 + $0x1dc] sm:$0xff]
    %v103 = vld [vmem:[%s0 + $0x1e4] sm:$0xff]
    %v104 = vld [vmem:[%s0 + $0x1ec] sm:$0xff]
    %v105 = vld [vmem:[%s0 + $0x1f4] sm:$0xf]
    %v106 = vld [vmem:[%s0 + $0x1f8] sm:$0xff]
    %v107 = vld [vmem:[%s0 + $0x200] sm:$0xff]
    %v108 = vld [vmem:[%s0 + $0x208] sm:$0xff]
    %v109 = vld [vmem:[%s0 + $0x210] sm:$0xf]
    %v110 = vld [vmem:[%s0 + $0x214] sm:$0xff]
    %v111 = vld [vmem:[%s0 + $0x21c] sm:$0xff]
    %v112 = vld [vmem:[%s0 + $0x224] sm:$0xff]
    %v113 = vld [vmem:[%s0 + $0x22c] sm:$0xf]
    %v114 = vld [vmem:[%s0 + $0x230] sm:$0xff]
    %v115 = vld [vmem:[%s0 + $0x238] sm:$0xff]
    %v116 = vld [vmem:[%s0 + $0x240] sm:$0xff]
    %v117 = vld [vmem:[%s0 + $0x248] sm:$0xf]
    %v118 = vld [vmem:[%s0 + $0x24c] sm:$0xff]
    %v119 = vld [vmem:[%s0 + $0x254] sm:$0xff]
    %v120 = vld [vmem:[%s0 + $0x25c] sm:$0xff]
    %v121 = vld [vmem:[%s0 + $0x264] sm:$0xf]
    %v122 = vld [vmem:[%s0 + $0x268] sm:$0xff]
    %v123 = vld [vmem:[%s0 + $0x270] sm:$0xff]
    %v124 = vld [vmem:[%s0 + $0x278] sm:$0xff]
    %v125 = vld [vmem:[%s0 + $0x280] sm:$0xf]
    %v126 = vld [vmem:[%s0 + $0x284] sm:$0xff]
    %v127 = vld [vmem:[%s0 + $0x28c] sm:$0xff]
    %v128 = vld [vmem:[%s0 + $0x294] sm:$0xff]
    %v129 = vld [vmem:[%s0 + $0x29c] sm:$0xf]
    %v130 = vld [vmem:[%s0 + $0x2a0] sm:$0xff]
    %v131 = vld [vmem:[%s0 + $0x2a8] sm:$0xff]
    %v132 = vld [vmem:[%s0 + $0x2b0] sm:$0xff]
    %v133 = vld [vmem:[%s0 + $0x2b8] sm:$0xf]
    %v134 = vld [vmem:[%s0 + $0x2bc] sm:$0xff]
    %v135 = vld [vmem:[%s0 + $0x2c4] sm:$0xff]
    %v136 = vld [vmem:[%s0 + $0x2cc] sm:$0xff]
    %v137 = vld [vmem:[%s0 + $0x2d4] sm:$0xf]
    %v138 = vld [vmem:[%s0 + $0x2d8] sm:$0xff]
    %v139 = vld [vmem:[%s0 + $0x2e0] sm:$0xff]
    %v140 = vld [vmem:[%s0 + $0x2e8] sm:$0xff]
    %v141 = vld [vmem:[%s0 + $0x2f0] sm:$0xf]
    %v142 = vld [vmem:[%s0 + $0x2f4] sm:$0xff]
    %v143 = vld [vmem:[%s0 + $0x2fc] sm:$0xff]
    %v144 = vld [vmem:[%s0 + $0x304] sm:$0xff]
    %v145 = vld [vmem:[%s0 + $0x30c] sm:$0xf]
    %v146 = vld [vmem:[%s0 + $0x310] sm:$0xff]
    %v147 = vld [vmem:[%s0 + $0x318] sm:$0xff]
    %v148 = vld [vmem:[%s0 + $0x320] sm:$0xff]
    %v149 = vld [vmem:[%s0 + $0x328] sm:$0xf]
    %v150 = vld [vmem:[%s0 + $0x32c] sm:$0xff]
    %v151 = vld [vmem:[%s0 + $0x334] sm:$0xff]
    %v152 = vld [vmem:[%s0 + $0x33c] sm:$0xff]
    %v153 = vld [vmem:[%s0 + $0x344] sm:$0xf]
    %v154 = vld [vmem:[%s0 + $0x348] sm:$0xff]
    %v155 = vld [vmem:[%s0 + $0x350] sm:$0xff]
    %v156 = vld [vmem:[%s0 + $0x358] sm:$0xff]
    %v157 = vld [vmem:[%s0 + $0x360] sm:$0xf]
    %v158 = vld [vmem:[%s0 + $0x364] sm:$0xff]
    %v159 = vld [vmem:[%s0 + $0x36c] sm:$0xff]
    %v160 = vld [vmem:[%s0 + $0x374] sm:$0xff]
    %v161 = vld [vmem:[%s0 + $0x37c] sm:$0xf]
    %v162 = vld [vmem:[%s1] sm:$0xff]
    %v163 = vld [vmem:[%s1 + $0x8] sm:$0xff]
    %v164 = vld [vmem:[%s1 + $0x10] sm:$0xff]
    %v165 = vld [vmem:[%s1 + $0x18] sm:$0xff]
    %v166 = vld [vmem:[%s1 + $0x20] sm:$0xff]
    %v167 = vld [vmem:[%s1 + $0x28] sm:$0xff]
    %v168 = vld [vmem:[%s1 + $0x30] sm:$0xff]
    %v169 = vld [vmem:[%s1 + $0x38] sm:$0xff]
    %v170 = vld [vmem:[%s1 + $0x40] sm:$0xff]
    %v171 = vld [vmem:[%s1 + $0x48] sm:$0xff]
    %v172 = vld [vmem:[%s1 + $0x50] sm:$0xff]
    %v173 = vld [vmem:[%s1 + $0x58] sm:$0xff]
    %v174 = vld [vmem:[%s1 + $0x60] sm:$0xff]
    %v175 = vld [vmem:[%s1 + $0x68] sm:$0xff]
    %v176 = vld [vmem:[%s1 + $0x70] sm:$0xff]
    %v177 = vld [vmem:[%s1 + $0x78] sm:$0xff]
    %v178 = vld [vmem:[%s1 + $0x80] sm:$0xff]
    %v179 = vld [vmem:[%s1 + $0x88] sm:$0xff]
    %v180 = vld [vmem:[%s1 + $0x90] sm:$0xff]
    %v181 = vld [vmem:[%s1 + $0x98] sm:$0xff]
    %v182 = vld [vmem:[%s1 + $0xa0] sm:$0xff]
    %v183 = vld [vmem:[%s1 + $0xa8] sm:$0xff]
    %v184 = vld [vmem:[%s1 + $0xb0] sm:$0xff]
    %v185 = vld [vmem:[%s1 + $0xb8] sm:$0xff]
    %v186 = vld [vmem:[%s1 + $0xc0] sm:$0xff]
    %v187 = vld [vmem:[%s1 + $0xc8] sm:$0xff]
    %v188 = vld [vmem:[%s1 + $0xd0] sm:$0xff]
    %v189 = vld [vmem:[%s1 + $0xd8] sm:$0xff]
    %v190 = vld [vmem:[%s1 + $0xe0] sm:$0xff]
    %v191 = vld [vmem:[%s1 + $0xe8] sm:$0xff]
    %v192 = vld [vmem:[%s1 + $0xf0] sm:$0xff]
    %v193 = vld [vmem:[%s1 + $0xf8] sm:$0xff]
    %v194 = vld [vmem:[%s1 + $0x100] sm:$0xff]
    %v195 = vld [vmem:[%s1 + $0x108] sm:$0xff]
    %v196 = vld [vmem:[%s1 + $0x110] sm:$0xff]
    %v197 = vld [vmem:[%s1 + $0x118] sm:$0xff]
    %v198 = vld [vmem:[%s1 + $0x120] sm:$0xff]
    %v199 = vld [vmem:[%s1 + $0x128] sm:$0xff]
    %v200 = vld [vmem:[%s1 + $0x130] sm:$0xff]
    %v201 = vld [vmem:[%s1 + $0x138] sm:$0xff]
    %v202 = vld [vmem:[%s1 + $0x140] sm:$0xff]
    %v203 = vld [vmem:[%s1 + $0x148] sm:$0xff]
    %v204 = vld [vmem:[%s1 + $0x150] sm:$0xff]
    %v205 = vld [vmem:[%s1 + $0x158] sm:$0xff]
    %v206 = vld [vmem:[%s1 + $0x160] sm:$0xff]
    %v207 = vld [vmem:[%s1 + $0x168] sm:$0xff]
    %v208 = vld [vmem:[%s1 + $0x170] sm:$0xff]
    %v209 = vld [vmem:[%s1 + $0x178] sm:$0xff]
    %v210 = vld [vmem:[%s1 + $0x180] sm:$0xff]
    %v211 = vld [vmem:[%s1 + $0x188] sm:$0xff]
    %v212 = vld [vmem:[%s1 + $0x190] sm:$0xff]
    %v213 = vld [vmem:[%s1 + $0x198] sm:$0xff]
    %v214 = vld [vmem:[%s1 + $0x1a0] sm:$0xff]
    %v215 = vld [vmem:[%s1 + $0x1a8] sm:$0xff]
    %v216 = vld [vmem:[%s1 + $0x1b0] sm:$0xff]
    %v217 = vld [vmem:[%s1 + $0x1b8] sm:$0xff]
    %v218 = vld [vmem:[%s1 + $0x1c0] sm:$0xff]
    %v219 = vld [vmem:[%s1 + $0x1c8] sm:$0xff]
    %v220 = vld [vmem:[%s1 + $0x1d0] sm:$0xff]
    %v221 = vld [vmem:[%s1 + $0x1d8] sm:$0xff]
    %v222 = vld [vmem:[%s1 + $0x1e0] sm:$0xff]
    %v223 = vld [vmem:[%s1 + $0x1e8] sm:$0xff]
    %v224 = vld [vmem:[%s1 + $0x1f0] sm:$0xff]
    %v225 = vld [vmem:[%s1 + $0x1f8] sm:$0xff]
    %v226 = vld [vmem:[%s1 + $0x200] sm:$0xff]
    %v227 = vld [vmem:[%s1 + $0x208] sm:$0xff]
    %v228 = vld [vmem:[%s1 + $0x210] sm:$0xff]
    %v229 = vld [vmem:[%s1 + $0x218] sm:$0xff]
    %v230 = vld [vmem:[%s1 + $0x220] sm:$0xff]
    %v231 = vld [vmem:[%s1 + $0x228] sm:$0xff]
    %v232 = vld [vmem:[%s1 + $0x230] sm:$0xff]
    %v233 = vld [vmem:[%s1 + $0x238] sm:$0xff]
    %v234 = vld [vmem:[%s1 + $0x240] sm:$0xff]
    %v235 = vld [vmem:[%s1 + $0x248] sm:$0xff]
    %v236 = vld [vmem:[%s1 + $0x250] sm:$0xff]
    %v237 = vld [vmem:[%s1 + $0x258] sm:$0xff]
    %v238 = vld [vmem:[%s1 + $0x260] sm:$0xff]
    %v239 = vld [vmem:[%s1 + $0x268] sm:$0xff]
    %v240 = vld [vmem:[%s1 + $0x270] sm:$0xff]
    %v241 = vld [vmem:[%s1 + $0x278] sm:$0xff]
    %v242 = vld [vmem:[%s1 + $0x280] sm:$0xff]
    %v243 = vld [vmem:[%s1 + $0x288] sm:$0xff]
    %v244 = vld [vmem:[%s1 + $0x290] sm:$0xff]
    %v245 = vld [vmem:[%s1 + $0x298] sm:$0xff]
    %v246 = vld [vmem:[%s1 + $0x2a0] sm:$0xff]
    %v247 = vld [vmem:[%s1 + $0x2a8] sm:$0xff]
    %v248 = vld [vmem:[%s1 + $0x2b0] sm:$0xff]
    %v249 = vld [vmem:[%s1 + $0x2b8] sm:$0xff]
    %v250 = vld [vmem:[%s1 + $0x2c0] sm:$0xff]
    %v251 = vld [vmem:[%s1 + $0x2c8] sm:$0xff]
    %v252 = vld [vmem:[%s1 + $0x2d0] sm:$0xff]
    %v253 = vld [vmem:[%s1 + $0x2d8] sm:$0xff]
    %v254 = vld [vmem:[%s1 + $0x2e0] sm:$0xff]
    %v255 = vld [vmem:[%s1 + $0x2e8] sm:$0xff]
    %v256 = vld [vmem:[%s1 + $0x2f0] sm:$0xff]
    %v257 = vld [vmem:[%s1 + $0x2f8] sm:$0xff]
    %v258 = vld [vmem:[%s1 + $0x300] sm:$0xff]
    %v259 = vld [vmem:[%s1 + $0x308] sm:$0xff]
    %v260 = vld [vmem:[%s2] sm:$0x3]
    %v262 = vlaneseq
    %v263 = vshrl.u32 %v262, 7
    %v264 = vsub.s32 0, %v263
    %v265 = vrot.slane %v260, %v264
    %v266 = vlaneseq
    %v267 = vshrl.u32 %v266, 7
    %v268 = vsub.s32 1, %v267
    %v269 = vrot.slane %v260, %v268
    %v400 = vunpack.c.l.b16 %v34
    %v401 = vunpack.c.h.b16 %v34
    %v402 = vunpack.c.l.b16 %v35
    %v403 = vunpack.c.h.b16 %v35
    %v404 = vunpack.c.l.b16 %v36
    %v405 = vunpack.c.h.b16 %v36
    %v406 = vunpack.c.l.b16 %v37
    %v407 = vunpack.c.l.b16 %v38
    %v408 = vunpack.c.h.b16 %v38
    %v409 = vunpack.c.l.b16 %v39
    %v410 = vunpack.c.h.b16 %v39
    %v411 = vunpack.c.l.b16 %v40
    %v412 = vunpack.c.h.b16 %v40
    %v413 = vunpack.c.l.b16 %v41
    %v414 = vunpack.c.l.b16 %v42
    %v415 = vunpack.c.h.b16 %v42
    %v416 = vunpack.c.l.b16 %v43
    %v417 = vunpack.c.h.b16 %v43
    %v418 = vunpack.c.l.b16 %v44
    %v419 = vunpack.c.h.b16 %v44
    %v420 = vunpack.c.l.b16 %v45
    %v421 = vunpack.c.l.b16 %v46
    %v422 = vunpack.c.h.b16 %v46
    %v423 = vunpack.c.l.b16 %v47
    %v424 = vunpack.c.h.b16 %v47
    %v425 = vunpack.c.l.b16 %v48
    %v426 = vunpack.c.h.b16 %v48
    %v427 = vunpack.c.l.b16 %v49
    %v428 = vunpack.c.l.b16 %v50
    %v429 = vunpack.c.h.b16 %v50
    %v430 = vunpack.c.l.b16 %v51
    %v431 = vunpack.c.h.b16 %v51
    %v432 = vunpack.c.l.b16 %v52
    %v433 = vunpack.c.h.b16 %v52
    %v434 = vunpack.c.l.b16 %v53
    %v435 = vunpack.c.l.b16 %v54
    %v436 = vunpack.c.h.b16 %v54
    %v437 = vunpack.c.l.b16 %v55
    %v438 = vunpack.c.h.b16 %v55
    %v439 = vunpack.c.l.b16 %v56
    %v440 = vunpack.c.h.b16 %v56
    %v441 = vunpack.c.l.b16 %v57
    %v442 = vunpack.c.l.b16 %v58
    %v443 = vunpack.c.h.b16 %v58
    %v444 = vunpack.c.l.b16 %v59
    %v445 = vunpack.c.h.b16 %v59
    %v446 = vunpack.c.l.b16 %v60
    %v447 = vunpack.c.h.b16 %v60
    %v448 = vunpack.c.l.b16 %v61
    %v449 = vunpack.c.l.b16 %v62
    %v450 = vunpack.c.h.b16 %v62
    %v451 = vunpack.c.l.b16 %v63
    %v452 = vunpack.c.h.b16 %v63
    %v453 = vunpack.c.l.b16 %v64
    %v454 = vunpack.c.h.b16 %v64
    %v455 = vunpack.c.l.b16 %v65
    %v456 = vunpack.c.l.b16 %v66
    %v457 = vunpack.c.h.b16 %v66
    %v458 = vunpack.c.l.b16 %v67
    %v459 = vunpack.c.h.b16 %v67
    %v460 = vunpack.c.l.b16 %v68
    %v461 = vunpack.c.h.b16 %v68
    %v462 = vunpack.c.l.b16 %v69
    %v463 = vunpack.c.l.b16 %v70
    %v464 = vunpack.c.h.b16 %v70
    %v465 = vunpack.c.l.b16 %v71
    %v466 = vunpack.c.h.b16 %v71
    %v467 = vunpack.c.l.b16 %v72
    %v468 = vunpack.c.h.b16 %v72
    %v469 = vunpack.c.l.b16 %v73
    %v470 = vunpack.c.l.b16 %v74
    %v471 = vunpack.c.h.b16 %v74
    %v472 = vunpack.c.l.b16 %v75
    %v473 = vunpack.c.h.b16 %v75
    %v474 = vunpack.c.l.b16 %v76
    %v475 = vunpack.c.h.b16 %v76
    %v476 = vunpack.c.l.b16 %v77
    %v477 = vunpack.c.l.b16 %v78
    %v478 = vunpack.c.h.b16 %v78
    %v479 = vunpack.c.l.b16 %v79
    %v480 = vunpack.c.h.b16 %v79
    %v481 = vunpack.c.l.b16 %v80
    %v482 = vunpack.c.h.b16 %v80
    %v483 = vunpack.c.l.b16 %v81
    %v484 = vunpack.c.l.b16 %v82
    %v485 = vunpack.c.h.b16 %v82
    %v486 = vunpack.c.l.b16 %v83
    %v487 = vunpack.c.h.b16 %v83
    %v488 = vunpack.c.l.b16 %v84
    %v489 = vunpack.c.h.b16 %v84
    %v490 = vunpack.c.l.b16 %v85
    %v491 = vunpack.c.l.b16 %v86
    %v492 = vunpack.c.h.b16 %v86
    %v493 = vunpack.c.l.b16 %v87
    %v494 = vunpack.c.h.b16 %v87
    %v495 = vunpack.c.l.b16 %v88
    %v496 = vunpack.c.h.b16 %v88
    %v497 = vunpack.c.l.b16 %v89
    %v498 = vunpack.c.l.b16 %v90
    %v499 = vunpack.c.h.b16 %v90
    %v500 = vunpack.c.l.b16 %v91
    %v501 = vunpack.c.h.b16 %v91
    %v502 = vunpack.c.l.b16 %v92
    %v503 = vunpack.c.h.b16 %v92
    %v504 = vunpack.c.l.b16 %v93
    %v505 = vunpack.c.l.b16 %v94
    %v506 = vunpack.c.h.b16 %v94
    %v507 = vunpack.c.l.b16 %v95
    %v508 = vunpack.c.h.b16 %v95
    %v509 = vunpack.c.l.b16 %v96
    %v510 = vunpack.c.h.b16 %v96
    %v511 = vunpack.c.l.b16 %v97
    %v512 = vunpack.c.l.b16 %v98
    %v513 = vunpack.c.h.b16 %v98
    %v514 = vunpack.c.l.b16 %v99
    %v515 = vunpack.c.h.b16 %v99
    %v516 = vunpack.c.l.b16 %v100
    %v517 = vunpack.c.h.b16 %v100
    %v518 = vunpack.c.l.b16 %v101
    %v519 = vunpack.c.l.b16 %v102
    %v520 = vunpack.c.h.b16 %v102
    %v521 = vunpack.c.l.b16 %v103
    %v522 = vunpack.c.h.b16 %v103
    %v523 = vunpack.c.l.b16 %v104
    %v524 = vunpack.c.h.b16 %v104
    %v525 = vunpack.c.l.b16 %v105
    %v526 = vunpack.c.l.b16 %v106
    %v527 = vunpack.c.h.b16 %v106
    %v528 = vunpack.c.l.b16 %v107
    %v529 = vunpack.c.h.b16 %v107
    %v530 = vunpack.c.l.b16 %v108
    %v531 = vunpack.c.h.b16 %v108
    %v532 = vunpack.c.l.b16 %v109
    %v533 = vunpack.c.l.b16 %v110
    %v534 = vunpack.c.h.b16 %v110
    %v535 = vunpack.c.l.b16 %v111
    %v536 = vunpack.c.h.b16 %v111
    %v537 = vunpack.c.l.b16 %v112
    %v538 = vunpack.c.h.b16 %v112
    %v539 = vunpack.c.l.b16 %v113
    %v540 = vunpack.c.l.b16 %v114
    %v541 = vunpack.c.h.b16 %v114
    %v542 = vunpack.c.l.b16 %v115
    %v543 = vunpack.c.h.b16 %v115
    %v544 = vunpack.c.l.b16 %v116
    %v545 = vunpack.c.h.b16 %v116
    %v546 = vunpack.c.l.b16 %v117
    %v547 = vunpack.c.l.b16 %v118
    %v548 = vunpack.c.h.b16 %v118
    %v549 = vunpack.c.l.b16 %v119
    %v550 = vunpack.c.h.b16 %v119
    %v551 = vunpack.c.l.b16 %v120
    %v552 = vunpack.c.h.b16 %v120
    %v553 = vunpack.c.l.b16 %v121
    %v554 = vunpack.c.l.b16 %v122
    %v555 = vunpack.c.h.b16 %v122
    %v556 = vunpack.c.l.b16 %v123
    %v557 = vunpack.c.h.b16 %v123
    %v558 = vunpack.c.l.b16 %v124
    %v559 = vunpack.c.h.b16 %v124
    %v560 = vunpack.c.l.b16 %v125
    %v561 = vunpack.c.l.b16 %v126
    %v562 = vunpack.c.h.b16 %v126
    %v563 = vunpack.c.l.b16 %v127
    %v564 = vunpack.c.h.b16 %v127
    %v565 = vunpack.c.l.b16 %v128
    %v566 = vunpack.c.h.b16 %v128
    %v567 = vunpack.c.l.b16 %v129
    %v568 = vunpack.c.l.b16 %v130
    %v569 = vunpack.c.h.b16 %v130
    %v570 = vunpack.c.l.b16 %v131
    %v571 = vunpack.c.h.b16 %v131
    %v572 = vunpack.c.l.b16 %v132
    %v573 = vunpack.c.h.b16 %v132
    %v574 = vunpack.c.l.b16 %v133
    %v575 = vunpack.c.l.b16 %v134
    %v576 = vunpack.c.h.b16 %v134
    %v577 = vunpack.c.l.b16 %v135
    %v578 = vunpack.c.h.b16 %v135
    %v579 = vunpack.c.l.b16 %v136
    %v580 = vunpack.c.h.b16 %v136
    %v581 = vunpack.c.l.b16 %v137
    %v582 = vunpack.c.l.b16 %v138
    %v583 = vunpack.c.h.b16 %v138
    %v584 = vunpack.c.l.b16 %v139
    %v585 = vunpack.c.h.b16 %v139
    %v586 = vunpack.c.l.b16 %v140
    %v587 = vunpack.c.h.b16 %v140
    %v588 = vunpack.c.l.b16 %v141
    %v589 = vunpack.c.l.b16 %v142
    %v590 = vunpack.c.h.b16 %v142
    %v591 = vunpack.c.l.b16 %v143
    %v592 = vunpack.c.h.b16 %v143
    %v593 = vunpack.c.l.b16 %v144
    %v594 = vunpack.c.h.b16 %v144
    %v595 = vunpack.c.l.b16 %v145
    %v596 = vunpack.c.l.b16 %v146
    %v597 = vunpack.c.h.b16 %v146
    %v598 = vunpack.c.l.b16 %v147
    %v599 = vunpack.c.h.b16 %v147
    %v600 = vunpack.c.l.b16 %v148
    %v601 = vunpack.c.h.b16 %v148
    %v602 = vunpack.c.l.b16 %v149
    %v603 = vunpack.c.l.b16 %v150
    %v604 = vunpack.c.h.b16 %v150
    %v605 = vunpack.c.l.b16 %v151
    %v606 = vunpack.c.h.b16 %v151
    %v607 = vunpack.c.l.b16 %v152
    %v608 = vunpack.c.h.b16 %v152
    %v609 = vunpack.c.l.b16 %v153
    %v610 = vunpack.c.l.b16 %v154
    %v611 = vunpack.c.h.b16 %v154
    %v612 = vunpack.c.l.b16 %v155
    %v613 = vunpack.c.h.b16 %v155
    %v614 = vunpack.c.l.b16 %v156
    %v615 = vunpack.c.h.b16 %v156
    %v616 = vunpack.c.l.b16 %v157
    %v617 = vunpack.c.l.b16 %v158
    %v618 = vunpack.c.h.b16 %v158
    %v619 = vunpack.c.l.b16 %v159
    %v620 = vunpack.c.h.b16 %v159
    %v621 = vunpack.c.l.b16 %v160
    %v622 = vunpack.c.h.b16 %v160
    %v623 = vunpack.c.l.b16 %v161
    %v624 = vpack.c.b16 %v407, %v400
    %v625 = vpack.c.b16 %v408, %v401
    %v626 = vpack.c.b16 %v409, %v402
    %v627 = vpack.c.b16 %v410, %v403
    %v628 = vpack.c.b16 %v411, %v404
    %v629 = vpack.c.b16 %v412, %v405
    %v630 = vpack.c.b16 %v413, %v406
    %v631 = vpack.c.b16 %v421, %v414
    %v632 = vpack.c.b16 %v422, %v415
    %v633 = vpack.c.b16 %v423, %v416
    %v634 = vpack.c.b16 %v424, %v417
    %v635 = vpack.c.b16 %v425, %v418
    %v636 = vpack.c.b16 %v426, %v419
    %v637 = vpack.c.b16 %v427, %v420
    %v638 = vpack.c.b16 %v435, %v428
    %v639 = vpack.c.b16 %v436, %v429
    %v640 = vpack.c.b16 %v437, %v430
    %v641 = vpack.c.b16 %v438, %v431
    %v642 = vpack.c.b16 %v439, %v432
    %v643 = vpack.c.b16 %v440, %v433
    %v644 = vpack.c.b16 %v441, %v434
    %v645 = vpack.c.b16 %v449, %v442
    %v646 = vpack.c.b16 %v450, %v443
    %v647 = vpack.c.b16 %v451, %v444
    %v648 = vpack.c.b16 %v452, %v445
    %v649 = vpack.c.b16 %v453, %v446
    %v650 = vpack.c.b16 %v454, %v447
    %v651 = vpack.c.b16 %v455, %v448
    %v652 = vpack.c.b16 %v463, %v456
    %v653 = vpack.c.b16 %v464, %v457
    %v654 = vpack.c.b16 %v465, %v458
    %v655 = vpack.c.b16 %v466, %v459
    %v656 = vpack.c.b16 %v467, %v460
    %v657 = vpack.c.b16 %v468, %v461
    %v658 = vpack.c.b16 %v469, %v462
    %v659 = vpack.c.b16 %v477, %v470
    %v660 = vpack.c.b16 %v478, %v471
    %v661 = vpack.c.b16 %v479, %v472
    %v662 = vpack.c.b16 %v480, %v473
    %v663 = vpack.c.b16 %v481, %v474
    %v664 = vpack.c.b16 %v482, %v475
    %v665 = vpack.c.b16 %v483, %v476
    %v666 = vpack.c.b16 %v491, %v484
    %v667 = vpack.c.b16 %v492, %v485
    %v668 = vpack.c.b16 %v493, %v486
    %v669 = vpack.c.b16 %v494, %v487
    %v670 = vpack.c.b16 %v495, %v488
    %v671 = vpack.c.b16 %v496, %v489
    %v672 = vpack.c.b16 %v497, %v490
    %v673 = vpack.c.b16 %v505, %v498
    %v674 = vpack.c.b16 %v506, %v499
    %v675 = vpack.c.b16 %v507, %v500
    %v676 = vpack.c.b16 %v508, %v501
    %v677 = vpack.c.b16 %v509, %v502
    %v678 = vpack.c.b16 %v510, %v503
    %v679 = vpack.c.b16 %v511, %v504
    %v680 = vpack.c.b16 %v519, %v512
    %v681 = vpack.c.b16 %v520, %v513
    %v682 = vpack.c.b16 %v521, %v514
    %v683 = vpack.c.b16 %v522, %v515
    %v684 = vpack.c.b16 %v523, %v516
    %v685 = vpack.c.b16 %v524, %v517
    %v686 = vpack.c.b16 %v525, %v518
    %v687 = vpack.c.b16 %v533, %v526
    %v688 = vpack.c.b16 %v534, %v527
    %v689 = vpack.c.b16 %v535, %v528
    %v690 = vpack.c.b16 %v536, %v529
    %v691 = vpack.c.b16 %v537, %v530
    %v692 = vpack.c.b16 %v538, %v531
    %v693 = vpack.c.b16 %v539, %v532
    %v694 = vpack.c.b16 %v547, %v540
    %v695 = vpack.c.b16 %v548, %v541
    %v696 = vpack.c.b16 %v549, %v542
    %v697 = vpack.c.b16 %v550, %v543
    %v698 = vpack.c.b16 %v551, %v544
    %v699 = vpack.c.b16 %v552, %v545
    %v700 = vpack.c.b16 %v553, %v546
    %v701 = vpack.c.b16 %v561, %v554
    %v702 = vpack.c.b16 %v562, %v555
    %v703 = vpack.c.b16 %v563, %v556
    %v704 = vpack.c.b16 %v564, %v557
    %v705 = vpack.c.b16 %v565, %v558
    %v706 = vpack.c.b16 %v566, %v559
    %v707 = vpack.c.b16 %v567, %v560
    %v708 = vpack.c.b16 %v575, %v568
    %v709 = vpack.c.b16 %v576, %v569
    %v710 = vpack.c.b16 %v577, %v570
    %v711 = vpack.c.b16 %v578, %v571
    %v712 = vpack.c.b16 %v579, %v572
    %v713 = vpack.c.b16 %v580, %v573
    %v714 = vpack.c.b16 %v581, %v574
    %v715 = vpack.c.b16 %v589, %v582
    %v716 = vpack.c.b16 %v590, %v583
    %v717 = vpack.c.b16 %v591, %v584
    %v718 = vpack.c.b16 %v592, %v585
    %v719 = vpack.c.b16 %v593, %v586
    %v720 = vpack.c.b16 %v594, %v587
    %v721 = vpack.c.b16 %v595, %v588
    %v722 = vpack.c.b16 %v603, %v596
    %v723 = vpack.c.b16 %v604, %v597
    %v724 = vpack.c.b16 %v605, %v598
    %v725 = vpack.c.b16 %v606, %v599
    %v726 = vpack.c.b16 %v607, %v600
    %v727 = vpack.c.b16 %v608, %v601
    %v728 = vpack.c.b16 %v609, %v602
    %v729 = vpack.c.b16 %v617, %v610
    %v730 = vpack.c.b16 %v618, %v611
    %v731 = vpack.c.b16 %v619, %v612
    %v732 = vpack.c.b16 %v620, %v613
    %v733 = vpack.c.b16 %v621, %v614
    %v734 = vpack.c.b16 %v622, %v615
    %v735 = vpack.c.b16 %v623, %v616
    %v930 = vunpack.c.l.b16 %v162
    %v931 = vunpack.c.h.b16 %v162
    %v932 = vunpack.c.l.b16 %v163
    %v933 = vunpack.c.h.b16 %v163
    %v934 = vunpack.c.l.b16 %v164
    %v935 = vunpack.c.h.b16 %v164
    %v936 = vunpack.c.l.b16 %v165
    %v937 = vunpack.c.h.b16 %v165
    %v938 = vunpack.c.l.b16 %v166
    %v939 = vunpack.c.h.b16 %v166
    %v940 = vunpack.c.l.b16 %v167
    %v941 = vunpack.c.h.b16 %v167
    %v942 = vunpack.c.l.b16 %v168
    %v943 = vunpack.c.h.b16 %v168
    %v944 = vunpack.c.l.b16 %v169
    %v945 = vunpack.c.h.b16 %v169
    %v946 = vunpack.c.l.b16 %v170
    %v947 = vunpack.c.h.b16 %v170
    %v948 = vunpack.c.l.b16 %v171
    %v949 = vunpack.c.h.b16 %v171
    %v950 = vunpack.c.l.b16 %v172
    %v951 = vunpack.c.h.b16 %v172
    %v952 = vunpack.c.l.b16 %v173
    %v953 = vunpack.c.h.b16 %v173
    %v954 = vunpack.c.l.b16 %v174
    %v955 = vunpack.c.h.b16 %v174
    %v956 = vunpack.c.l.b16 %v175
    %v957 = vunpack.c.h.b16 %v175
    %v958 = vunpack.c.l.b16 %v176
    %v959 = vunpack.c.h.b16 %v176
    %v960 = vunpack.c.l.b16 %v177
    %v961 = vunpack.c.h.b16 %v177
    %v962 = vunpack.c.l.b16 %v178
    %v963 = vunpack.c.h.b16 %v178
    %v964 = vunpack.c.l.b16 %v179
    %v965 = vunpack.c.h.b16 %v179
    %v966 = vunpack.c.l.b16 %v180
    %v967 = vunpack.c.h.b16 %v180
    %v968 = vunpack.c.l.b16 %v181
    %v969 = vunpack.c.h.b16 %v181
    %v970 = vunpack.c.l.b16 %v182
    %v971 = vunpack.c.h.b16 %v182
    %v972 = vunpack.c.l.b16 %v183
    %v973 = vunpack.c.h.b16 %v183
    %v974 = vunpack.c.l.b16 %v184
    %v975 = vunpack.c.h.b16 %v184
    %v976 = vunpack.c.l.b16 %v185
    %v977 = vunpack.c.h.b16 %v185
    %v978 = vunpack.c.l.b16 %v186
    %v979 = vunpack.c.h.b16 %v186
    %v980 = vunpack.c.l.b16 %v187
    %v981 = vunpack.c.h.b16 %v187
    %v982 = vunpack.c.l.b16 %v188
    %v983 = vunpack.c.h.b16 %v188
    %v984 = vunpack.c.l.b16 %v189
    %v985 = vunpack.c.h.b16 %v189
    %v986 = vunpack.c.l.b16 %v190
    %v987 = vunpack.c.h.b16 %v190
    %v988 = vunpack.c.l.b16 %v191
    %v989 = vunpack.c.h.b16 %v191
    %v990 = vunpack.c.l.b16 %v192
    %v991 = vunpack.c.h.b16 %v192
    %v992 = vunpack.c.l.b16 %v193
    %v993 = vunpack.c.h.b16 %v193
    %v994 = vunpack.c.l.b16 %v194
    %v995 = vunpack.c.h.b16 %v194
    %v996 = vunpack.c.l.b16 %v195
    %v997 = vunpack.c.h.b16 %v195
    %v998 = vunpack.c.l.b16 %v196
    %v999 = vunpack.c.h.b16 %v196
    %v1000 = vunpack.c.l.b16 %v197
    %v1001 = vunpack.c.h.b16 %v197
    %v1002 = vunpack.c.l.b16 %v198
    %v1003 = vunpack.c.h.b16 %v198
    %v1004 = vunpack.c.l.b16 %v199
    %v1005 = vunpack.c.h.b16 %v199
    %v1006 = vunpack.c.l.b16 %v200
    %v1007 = vunpack.c.h.b16 %v200
    %v1008 = vunpack.c.l.b16 %v201
    %v1009 = vunpack.c.h.b16 %v201
    %v1010 = vunpack.c.l.b16 %v202
    %v1011 = vunpack.c.h.b16 %v202
    %v1012 = vunpack.c.l.b16 %v203
    %v1013 = vunpack.c.h.b16 %v203
    %v1014 = vunpack.c.l.b16 %v204
    %v1015 = vunpack.c.h.b16 %v204
    %v1016 = vunpack.c.l.b16 %v205
    %v1017 = vunpack.c.h.b16 %v205
    %v1018 = vunpack.c.l.b16 %v206
    %v1019 = vunpack.c.h.b16 %v206
    %v1020 = vunpack.c.l.b16 %v207
    %v1021 = vunpack.c.h.b16 %v207
    %v1022 = vunpack.c.l.b16 %v208
    %v1023 = vunpack.c.h.b16 %v208
    %v1024 = vunpack.c.l.b16 %v209
    %v1025 = vunpack.c.h.b16 %v209
    %v1026 = vunpack.c.l.b16 %v210
    %v1027 = vunpack.c.h.b16 %v210
    %v1028 = vunpack.c.l.b16 %v211
    %v1029 = vunpack.c.h.b16 %v211
    %v1030 = vunpack.c.l.b16 %v212
    %v1031 = vunpack.c.h.b16 %v212
    %v1032 = vunpack.c.l.b16 %v213
    %v1033 = vunpack.c.h.b16 %v213
    %v1034 = vunpack.c.l.b16 %v214
    %v1035 = vunpack.c.h.b16 %v214
    %v1036 = vunpack.c.l.b16 %v215
    %v1037 = vunpack.c.h.b16 %v215
    %v1038 = vunpack.c.l.b16 %v216
    %v1039 = vunpack.c.h.b16 %v216
    %v1040 = vunpack.c.l.b16 %v217
    %v1041 = vunpack.c.h.b16 %v217
    %v1042 = vunpack.c.l.b16 %v218
    %v1043 = vunpack.c.h.b16 %v218
    %v1044 = vunpack.c.l.b16 %v219
    %v1045 = vunpack.c.h.b16 %v219
    %v1046 = vunpack.c.l.b16 %v220
    %v1047 = vunpack.c.h.b16 %v220
    %v1048 = vunpack.c.l.b16 %v221
    %v1049 = vunpack.c.h.b16 %v221
    %v1050 = vunpack.c.l.b16 %v222
    %v1051 = vunpack.c.h.b16 %v222
    %v1052 = vunpack.c.l.b16 %v223
    %v1053 = vunpack.c.h.b16 %v223
    %v1054 = vunpack.c.l.b16 %v224
    %v1055 = vunpack.c.h.b16 %v224
    %v1056 = vunpack.c.l.b16 %v225
    %v1057 = vunpack.c.h.b16 %v225
    %v1058 = vunpack.c.l.b16 %v226
    %v1059 = vunpack.c.h.b16 %v226
    %v1060 = vunpack.c.l.b16 %v227
    %v1061 = vunpack.c.h.b16 %v227
    %v1062 = vunpack.c.l.b16 %v228
    %v1063 = vunpack.c.h.b16 %v228
    %v1064 = vunpack.c.l.b16 %v229
    %v1065 = vunpack.c.h.b16 %v229
    %v1066 = vunpack.c.l.b16 %v230
    %v1067 = vunpack.c.h.b16 %v230
    %v1068 = vunpack.c.l.b16 %v231
    %v1069 = vunpack.c.h.b16 %v231
    %v1070 = vunpack.c.l.b16 %v232
    %v1071 = vunpack.c.h.b16 %v232
    %v1072 = vunpack.c.l.b16 %v233
    %v1073 = vunpack.c.h.b16 %v233
    %v1074 = vunpack.c.l.b16 %v234
    %v1075 = vunpack.c.h.b16 %v234
    %v1076 = vunpack.c.l.b16 %v235
    %v1077 = vunpack.c.h.b16 %v235
    %v1078 = vunpack.c.l.b16 %v236
    %v1079 = vunpack.c.h.b16 %v236
    %v1080 = vunpack.c.l.b16 %v237
    %v1081 = vunpack.c.h.b16 %v237
    %v1082 = vunpack.c.l.b16 %v238
    %v1083 = vunpack.c.h.b16 %v238
    %v1084 = vunpack.c.l.b16 %v239
    %v1085 = vunpack.c.h.b16 %v239
    %v1086 = vunpack.c.l.b16 %v240
    %v1087 = vunpack.c.h.b16 %v240
    %v1088 = vunpack.c.l.b16 %v241
    %v1089 = vunpack.c.h.b16 %v241
    %v1090 = vunpack.c.l.b16 %v242
    %v1091 = vunpack.c.h.b16 %v242
    %v1092 = vunpack.c.l.b16 %v243
    %v1093 = vunpack.c.h.b16 %v243
    %v1094 = vunpack.c.l.b16 %v244
    %v1095 = vunpack.c.h.b16 %v244
    %v1096 = vunpack.c.l.b16 %v245
    %v1097 = vunpack.c.h.b16 %v245
    %v1098 = vunpack.c.l.b16 %v246
    %v1099 = vunpack.c.h.b16 %v246
    %v1100 = vunpack.c.l.b16 %v247
    %v1101 = vunpack.c.h.b16 %v247
    %v1102 = vunpack.c.l.b16 %v248
    %v1103 = vunpack.c.h.b16 %v248
    %v1104 = vunpack.c.l.b16 %v249
    %v1105 = vunpack.c.h.b16 %v249
    %v1106 = vunpack.c.l.b16 %v250
    %v1107 = vunpack.c.h.b16 %v250
    %v1108 = vunpack.c.l.b16 %v251
    %v1109 = vunpack.c.h.b16 %v251
    %v1110 = vunpack.c.l.b16 %v252
    %v1111 = vunpack.c.h.b16 %v252
    %v1112 = vunpack.c.l.b16 %v253
    %v1113 = vunpack.c.h.b16 %v253
    %v1114 = vunpack.c.l.b16 %v254
    %v1115 = vunpack.c.h.b16 %v254
    %v1116 = vunpack.c.l.b16 %v255
    %v1117 = vunpack.c.h.b16 %v255
    %v1118 = vunpack.c.l.b16 %v256
    %v1119 = vunpack.c.h.b16 %v256
    %v1120 = vunpack.c.l.b16 %v257
    %v1121 = vunpack.c.h.b16 %v257
    %v1122 = vunpack.c.l.b16 %v258
    %v1123 = vunpack.c.h.b16 %v258
    %v1124 = vunpack.c.l.b16 %v259
    %v1125 = vunpack.c.h.b16 %v259
    %v1126 = vpack.c.b16 %v932, %v930
    %v1127 = vpack.c.b16 %v933, %v931
    %v1128 = vpack.c.b16 %v936, %v934
    %v1129 = vpack.c.b16 %v937, %v935
    %v1130 = vpack.c.b16 %v940, %v938
    %v1131 = vpack.c.b16 %v941, %v939
    %v1132 = vpack.c.b16 %v944, %v942
    %v1133 = vpack.c.b16 %v945, %v943
    %v1134 = vpack.c.b16 %v948, %v946
    %v1135 = vpack.c.b16 %v949, %v947
    %v1136 = vpack.c.b16 %v952, %v950
    %v1137 = vpack.c.b16 %v953, %v951
    %v1138 = vpack.c.b16 %v956, %v954
    %v1139 = vpack.c.b16 %v957, %v955
    %v1140 = vpack.c.b16 %v960, %v958
    %v1141 = vpack.c.b16 %v961, %v959
    %v1142 = vpack.c.b16 %v964, %v962
    %v1143 = vpack.c.b16 %v965, %v963
    %v1144 = vpack.c.b16 %v968, %v966
    %v1145 = vpack.c.b16 %v969, %v967
    %v1146 = vpack.c.b16 %v972, %v970
    %v1147 = vpack.c.b16 %v973, %v971
    %v1148 = vpack.c.b16 %v976, %v974
    %v1149 = vpack.c.b16 %v977, %v975
    %v1150 = vpack.c.b16 %v980, %v978
    %v1151 = vpack.c.b16 %v981, %v979
    %v1152 = vpack.c.b16 %v984, %v982
    %v1153 = vpack.c.b16 %v985, %v983
    %v1154 = vpack.c.b16 %v988, %v986
    %v1155 = vpack.c.b16 %v989, %v987
    %v1156 = vpack.c.b16 %v992, %v990
    %v1157 = vpack.c.b16 %v993, %v991
    %v1158 = vpack.c.b16 %v996, %v994
    %v1159 = vpack.c.b16 %v997, %v995
    %v1160 = vpack.c.b16 %v1000, %v998
    %v1161 = vpack.c.b16 %v1001, %v999
    %v1162 = vpack.c.b16 %v1004, %v1002
    %v1163 = vpack.c.b16 %v1005, %v1003
    %v1164 = vpack.c.b16 %v1008, %v1006
    %v1165 = vpack.c.b16 %v1009, %v1007
    %v1166 = vpack.c.b16 %v1012, %v1010
    %v1167 = vpack.c.b16 %v1013, %v1011
    %v1168 = vpack.c.b16 %v1016, %v1014
    %v1169 = vpack.c.b16 %v1017, %v1015
    %v1170 = vpack.c.b16 %v1020, %v1018
    %v1171 = vpack.c.b16 %v1021, %v1019
    %v1172 = vpack.c.b16 %v1024, %v1022
    %v1173 = vpack.c.b16 %v1025, %v1023
    %v1174 = vpack.c.b16 %v1028, %v1026
    %v1175 = vpack.c.b16 %v1029, %v1027
    %v1176 = vpack.c.b16 %v1032, %v1030
    %v1177 = vpack.c.b16 %v1033, %v1031
    %v1178 = vpack.c.b16 %v1036, %v1034
    %v1179 = vpack.c.b16 %v1037, %v1035
    %v1180 = vpack.c.b16 %v1040, %v1038
    %v1181 = vpack.c.b16 %v1041, %v1039
    %v1182 = vpack.c.b16 %v1044, %v1042
    %v1183 = vpack.c.b16 %v1045, %v1043
    %v1184 = vpack.c.b16 %v1048, %v1046
    %v1185 = vpack.c.b16 %v1049, %v1047
    %v1186 = vpack.c.b16 %v1052, %v1050
    %v1187 = vpack.c.b16 %v1053, %v1051
    %v1188 = vpack.c.b16 %v1056, %v1054
    %v1189 = vpack.c.b16 %v1057, %v1055
    %v1190 = vpack.c.b16 %v1060, %v1058
    %v1191 = vpack.c.b16 %v1061, %v1059
    %v1192 = vpack.c.b16 %v1064, %v1062
    %v1193 = vpack.c.b16 %v1065, %v1063
    %v1194 = vpack.c.b16 %v1068, %v1066
    %v1195 = vpack.c.b16 %v1069, %v1067
    %v1196 = vpack.c.b16 %v1072, %v1070
    %v1197 = vpack.c.b16 %v1073, %v1071
    %v1198 = vpack.c.b16 %v1076, %v1074
    %v1199 = vpack.c.b16 %v1077, %v1075
    %v1200 = vpack.c.b16 %v1080, %v1078
    %v1201 = vpack.c.b16 %v1081, %v1079
    %v1202 = vpack.c.b16 %v1084, %v1082
    %v1203 = vpack.c.b16 %v1085, %v1083
    %v1204 = vpack.c.b16 %v1088, %v1086
    %v1205 = vpack.c.b16 %v1089, %v1087
    %v1206 = vpack.c.b16 %v1092, %v1090
    %v1207 = vpack.c.b16 %v1093, %v1091
    %v1208 = vpack.c.b16 %v1096, %v1094
    %v1209 = vpack.c.b16 %v1097, %v1095
    %v1210 = vpack.c.b16 %v1100, %v1098
    %v1211 = vpack.c.b16 %v1101, %v1099
    %v1212 = vpack.c.b16 %v1104, %v1102
    %v1213 = vpack.c.b16 %v1105, %v1103
    %v1214 = vpack.c.b16 %v1108, %v1106
    %v1215 = vpack.c.b16 %v1109, %v1107
    %v1216 = vpack.c.b16 %v1112, %v1110
    %v1217 = vpack.c.b16 %v1113, %v1111
    %v1218 = vpack.c.b16 %v1116, %v1114
    %v1219 = vpack.c.b16 %v1117, %v1115
    %v1220 = vpack.c.b16 %v1120, %v1118
    %v1221 = vpack.c.b16 %v1121, %v1119
    %v1222 = vpack.c.b16 %v1124, %v1122
    %v1223 = vpack.c.b16 %v1125, %v1123
    %vm1322 = vcmask 130048
    %v1324 = vsel %vm1322, %v630, 0
    %v1327 = vsel %vm1322, %v637, 0
    %v1330 = vsel %vm1322, %v644, 0
    %v1333 = vsel %vm1322, %v651, 0
    %v1336 = vsel %vm1322, %v658, 0
    %v1339 = vsel %vm1322, %v665, 0
    %v1342 = vsel %vm1322, %v672, 0
    %v1345 = vsel %vm1322, %v679, 0
    %v1348 = vsel %vm1322, %v686, 0
    %v1351 = vsel %vm1322, %v693, 0
    %v1354 = vsel %vm1322, %v700, 0
    %v1357 = vsel %vm1322, %v707, 0
    %v1360 = vsel %vm1322, %v714, 0
    %v1363 = vsel %vm1322, %v721, 0
    %v1366 = vsel %vm1322, %v728, 0
    %v1369 = vsel %vm1322, %v735, 0
    %1371 = vmatprep.subr.bf16.mxu0 %v1127
    %1372 = vmatpush1.bf16.msra.mxu0 %v1126
    %1373 = vmatprep.subr.bf16.mxu0 %v1129
    %1374 = vmatpush1.bf16.msra.mxu0 %v1128
    %1375 = vmatprep.subr.bf16.mxu0 %v1131
    %1376 = vmatpush1.bf16.msra.mxu0 %v1130
    %1377 = vmatprep.subr.bf16.mxu0 %v1133
    %1378 = vmatpush1.bf16.msra.mxu0 %v1132
    %1379 = vmatprep.subr.bf16.mxu0 %v1135
    %1380 = vmatpush1.bf16.msra.mxu0 %v1134
    %1381 = vmatprep.subr.bf16.mxu0 %v1137
    %1382 = vmatpush1.bf16.msra.mxu0 %v1136
    %1383 = vmatprep.subr.bf16.mxu0 %v1139
    %1384 = vmatpush1.bf16.msra.mxu0 %v1138
    %1385 = vmatprep.subr.bf16.mxu0 %v1141
    %1386 = vmatpush1.bf16.msra.mxu0 %v1140
    %1387 = vmatprep.subr.bf16.mxu0 %v1143
    %1388 = vmatpush1.bf16.msra.mxu0 %v1142
    %1389 = vmatprep.subr.bf16.mxu0 %v1145
    %1390 = vmatpush1.bf16.msra.mxu0 %v1144
    %1391 = vmatprep.subr.bf16.mxu0 %v1147
    %1392 = vmatpush1.bf16.msra.mxu0 %v1146
    %1393 = vmatprep.subr.bf16.mxu0 %v1149
    %1394 = vmatpush1.bf16.msra.mxu0 %v1148
    %1395 = vmatprep.subr.bf16.mxu0 %v1151
    %1396 = vmatpush1.bf16.msra.mxu0 %v1150
    %1397 = vmatprep.subr.bf16.mxu0 %v1153
    %1398 = vmatpush1.bf16.msra.mxu0 %v1152
    %1399 = vmatprep.subr.bf16.mxu0 %v1155
    %1400 = vmatpush1.bf16.msra.mxu0 %v1154
    %1401 = vmatprep.subr.bf16.mxu0 %v1157
    %1402 = vmatpush1.bf16.msra.mxu0 %v1156
    %1403 = vmatprep.mubr.bf16.mxu0 %v625
    %1404 = vmatmul.mubr.bf16.gmra.mrb[0].mxu0 %v624
    %v1405 = vpop.f32.mrb[0].mxu0
    %v1406 = vadd.f32 %v265, %v1405
    %v1407 = vpop.f32.mrb[0].mxu0
    %v1408 = vadd.f32 %v269, %v1407
    %v1409 = vpop.f32.mrb[0].mxu0
    %v1410 = vadd.f32 %v265, %v1409
    %v1411 = vpop.f32.mrb[0].mxu0
    %v1412 = vadd.f32 %v269, %v1411
    %1413 = vmatprep.mubr.bf16.mxu0 %v632
    %1414 = vmatmul.mubr.bf16.gmra.mrb[0].mxu0 %v631
    %v1415 = vpop.f32.mrb[0].mxu0
    %v1416 = vadd.f32 %v265, %v1415
    %v1417 = vpop.f32.mrb[0].mxu0
    %v1418 = vadd.f32 %v269, %v1417
    %v1419 = vpop.f32.mrb[0].mxu0
    %v1420 = vadd.f32 %v265, %v1419
    %v1421 = vpop.f32.mrb[0].mxu0
    %v1422 = vadd.f32 %v269, %v1421
    %1423 = vmatprep.mubr.bf16.mxu0 %v639
    %1424 = vmatmul.mubr.bf16.gmra.mrb[0].mxu0 %v638
    %v1425 = vpop.f32.mrb[0].mxu0
    %v1426 = vadd.f32 %v265, %v1425
    %v1427 = vpop.f32.mrb[0].mxu0
    %v1428 = vadd.f32 %v269, %v1427
    %v1429 = vpop.f32.mrb[0].mxu0
    %v1430 = vadd.f32 %v265, %v1429
    %v1431 = vpop.f32.mrb[0].mxu0
    %v1432 = vadd.f32 %v269, %v1431
    %1433 = vmatprep.mubr.bf16.mxu0 %v646
    %1434 = vmatmul.mubr.bf16.gmra.mrb[0].mxu0 %v645
    %v1435 = vpop.f32.mrb[0].mxu0
    %v1436 = vadd.f32 %v265, %v1435
    %v1437 = vpop.f32.mrb[0].mxu0
    %v1438 = vadd.f32 %v269, %v1437
    %v1439 = vpop.f32.mrb[0].mxu0
    %v1440 = vadd.f32 %v265, %v1439
    %v1441 = vpop.f32.mrb[0].mxu0
    %v1442 = vadd.f32 %v269, %v1441
    %1443 = vmatprep.mubr.bf16.mxu0 %v653
    %1444 = vmatmul.mubr.bf16.gmra.mrb[0].mxu0 %v652
    %v1445 = vpop.f32.mrb[0].mxu0
    %v1446 = vadd.f32 %v265, %v1445
    %v1447 = vpop.f32.mrb[0].mxu0
    %v1448 = vadd.f32 %v269, %v1447
    %v1449 = vpop.f32.mrb[0].mxu0
    %v1450 = vadd.f32 %v265, %v1449
    %v1451 = vpop.f32.mrb[0].mxu0
    %v1452 = vadd.f32 %v269, %v1451
    %1453 = vmatprep.mubr.bf16.mxu0 %v660
    %1454 = vmatmul.mubr.bf16.gmra.mrb[0].mxu0 %v659
    %v1455 = vpop.f32.mrb[0].mxu0
    %v1456 = vadd.f32 %v265, %v1455
    %v1457 = vpop.f32.mrb[0].mxu0
    %v1458 = vadd.f32 %v269, %v1457
    %v1459 = vpop.f32.mrb[0].mxu0
    %v1460 = vadd.f32 %v265, %v1459
    %v1461 = vpop.f32.mrb[0].mxu0
    %v1462 = vadd.f32 %v269, %v1461
    %1463 = vmatprep.mubr.bf16.mxu0 %v667
    %1464 = vmatmul.mubr.bf16.gmra.mrb[0].mxu0 %v666
    %v1465 = vpop.f32.mrb[0].mxu0
    %v1466 = vadd.f32 %v265, %v1465
    %v1467 = vpop.f32.mrb[0].mxu0
    %v1468 = vadd.f32 %v269, %v1467
    %v1469 = vpop.f32.mrb[0].mxu0
    %v1470 = vadd.f32 %v265, %v1469
    %v1471 = vpop.f32.mrb[0].mxu0
    %v1472 = vadd.f32 %v269, %v1471
    %1473 = vmatprep.mubr.bf16.mxu0 %v674
    %1474 = vmatmul.mubr.bf16.gmra.mrb[0].mxu0 %v673
    %v1475 = vpop.f32.mrb[0].mxu0
    %v1476 = vadd.f32 %v265, %v1475
    %v1477 = vpop.f32.mrb[0].mxu0
    %v1478 = vadd.f32 %v269, %v1477
    %v1479 = vpop.f32.mrb[0].mxu0
    %v1480 = vadd.f32 %v265, %v1479
    %v1481 = vpop.f32.mrb[0].mxu0
    %v1482 = vadd.f32 %v269, %v1481
    %1483 = vmatprep.mubr.bf16.mxu0 %v681
    %1484 = vmatmul.mubr.bf16.gmra.mrb[0].mxu0 %v680
    %v1485 = vpop.f32.mrb[0].mxu0
    %v1486 = vadd.f32 %v265, %v1485
    %v1487 = vpop.f32.mrb[0].mxu0
    %v1488 = vadd.f32 %v269, %v1487
    %v1489 = vpop.f32.mrb[0].mxu0
    %v1490 = vadd.f32 %v265, %v1489
    %v1491 = vpop.f32.mrb[0].mxu0
    %v1492 = vadd.f32 %v269, %v1491
    %1493 = vmatprep.mubr.bf16.mxu0 %v688
    %1494 = vmatmul.mubr.bf16.gmra.mrb[0].mxu0 %v687
    %v1495 = vpop.f32.mrb[0].mxu0
    %v1496 = vadd.f32 %v265, %v1495
    %v1497 = vpop.f32.mrb[0].mxu0
    %v1498 = vadd.f32 %v269, %v1497
    %v1499 = vpop.f32.mrb[0].mxu0
    %v1500 = vadd.f32 %v265, %v1499
    %v1501 = vpop.f32.mrb[0].mxu0
    %v1502 = vadd.f32 %v269, %v1501
    %1503 = vmatprep.mubr.bf16.mxu0 %v695
    %1504 = vmatmul.mubr.bf16.gmra.mrb[0].mxu0 %v694
    %v1505 = vpop.f32.mrb[0].mxu0
    %v1506 = vadd.f32 %v265, %v1505
    %v1507 = vpop.f32.mrb[0].mxu0
    %v1508 = vadd.f32 %v269, %v1507
    %v1509 = vpop.f32.mrb[0].mxu0
    %v1510 = vadd.f32 %v265, %v1509
    %v1511 = vpop.f32.mrb[0].mxu0
    %v1512 = vadd.f32 %v269, %v1511
    %1513 = vmatprep.mubr.bf16.mxu0 %v702
    %1514 = vmatmul.mubr.bf16.gmra.mrb[0].mxu0 %v701
    %v1515 = vpop.f32.mrb[0].mxu0
    %v1516 = vadd.f32 %v265, %v1515
    %v1517 = vpop.f32.mrb[0].mxu0
    %v1518 = vadd.f32 %v269, %v1517
    %v1519 = vpop.f32.mrb[0].mxu0
    %v1520 = vadd.f32 %v265, %v1519
    %v1521 = vpop.f32.mrb[0].mxu0
    %v1522 = vadd.f32 %v269, %v1521
    %1523 = vmatprep.mubr.bf16.mxu0 %v709
    %1524 = vmatmul.mubr.bf16.gmra.mrb[0].mxu0 %v708
    %v1525 = vpop.f32.mrb[0].mxu0
    %v1526 = vadd.f32 %v265, %v1525
    %v1527 = vpop.f32.mrb[0].mxu0
    %v1528 = vadd.f32 %v269, %v1527
    %v1529 = vpop.f32.mrb[0].mxu0
    %v1530 = vadd.f32 %v265, %v1529
    %v1531 = vpop.f32.mrb[0].mxu0
    %v1532 = vadd.f32 %v269, %v1531
    %1533 = vmatprep.mubr.bf16.mxu0 %v716
    %1534 = vmatmul.mubr.bf16.gmra.mrb[0].mxu0 %v715
    %v1535 = vpop.f32.mrb[0].mxu0
    %v1536 = vadd.f32 %v265, %v1535
    %v1537 = vpop.f32.mrb[0].mxu0
    %v1538 = vadd.f32 %v269, %v1537
    %v1539 = vpop.f32.mrb[0].mxu0
    %v1540 = vadd.f32 %v265, %v1539
    %v1541 = vpop.f32.mrb[0].mxu0
    %v1542 = vadd.f32 %v269, %v1541
    %1543 = vmatprep.mubr.bf16.mxu0 %v723
    %1544 = vmatmul.mubr.bf16.gmra.mrb[0].mxu0 %v722
    %v1545 = vpop.f32.mrb[0].mxu0
    %v1546 = vadd.f32 %v265, %v1545
    %v1547 = vpop.f32.mrb[0].mxu0
    %v1548 = vadd.f32 %v269, %v1547
    %v1549 = vpop.f32.mrb[0].mxu0
    %v1550 = vadd.f32 %v265, %v1549
    %v1551 = vpop.f32.mrb[0].mxu0
    %v1552 = vadd.f32 %v269, %v1551
    %1553 = vmatprep.mubr.bf16.mxu0 %v730
    %1554 = vmatmul.mubr.bf16.gmra.mrb[0].mxu0 %v729
    %v1555 = vpop.f32.mrb[0].mxu0
    %v1556 = vadd.f32 %v265, %v1555
    %v1557 = vpop.f32.mrb[0].mxu0
    %v1558 = vadd.f32 %v269, %v1557
    %v1559 = vpop.f32.mrb[0].mxu0
    %v1560 = vadd.f32 %v265, %v1559
    %v1561 = vpop.f32.mrb[0].mxu0
    %v1562 = vadd.f32 %v269, %v1561
    %1563 = vdwg.mxu0
    %1564 = vmatprep.subr.bf16.mxu0 %v1159
    %1565 = vmatpush1.bf16.msra.mxu0 %v1158
    %1566 = vmatprep.subr.bf16.mxu0 %v1161
    %1567 = vmatpush1.bf16.msra.mxu0 %v1160
    %1568 = vmatprep.subr.bf16.mxu0 %v1163
    %1569 = vmatpush1.bf16.msra.mxu0 %v1162
    %1570 = vmatprep.subr.bf16.mxu0 %v1165
    %1571 = vmatpush1.bf16.msra.mxu0 %v1164
    %1572 = vmatprep.subr.bf16.mxu0 %v1167
    %1573 = vmatpush1.bf16.msra.mxu0 %v1166
    %1574 = vmatprep.subr.bf16.mxu0 %v1169
    %1575 = vmatpush1.bf16.msra.mxu0 %v1168
    %1576 = vmatprep.subr.bf16.mxu0 %v1171
    %1577 = vmatpush1.bf16.msra.mxu0 %v1170
    %1578 = vmatprep.subr.bf16.mxu0 %v1173
    %1579 = vmatpush1.bf16.msra.mxu0 %v1172
    %1580 = vmatprep.subr.bf16.mxu0 %v1175
    %1581 = vmatpush1.bf16.msra.mxu0 %v1174
    %1582 = vmatprep.subr.bf16.mxu0 %v1177
    %1583 = vmatpush1.bf16.msra.mxu0 %v1176
    %1584 = vmatprep.subr.bf16.mxu0 %v1179
    %1585 = vmatpush1.bf16.msra.mxu0 %v1178
    %1586 = vmatprep.subr.bf16.mxu0 %v1181
    %1587 = vmatpush1.bf16.msra.mxu0 %v1180
    %1588 = vmatprep.subr.bf16.mxu0 %v1183
    %1589 = vmatpush1.bf16.msra.mxu0 %v1182
    %1590 = vmatprep.subr.bf16.mxu0 %v1185
    %1591 = vmatpush1.bf16.msra.mxu0 %v1184
    %1592 = vmatprep.subr.bf16.mxu0 %v1187
    %1593 = vmatpush1.bf16.msra.mxu0 %v1186
    %1594 = vmatprep.subr.bf16.mxu0 %v1189
    %1595 = vmatpush1.bf16.msra.mxu0 %v1188
    %1596 = vmatprep.mubr.bf16.mxu0 %v627
    %1597 = vmatmul.mubr.bf16.gmra.mrb[0].mxu0 %v626
    %v1598 = vpop.f32.mrb[0].mxu0
    %v1599 = vadd.f32 %v1406, %v1598
    %v1600 = vpop.f32.mrb[0].mxu0
    %v1601 = vadd.f32 %v1408, %v1600
    %v1602 = vpop.f32.mrb[0].mxu0
    %v1603 = vadd.f32 %v1410, %v1602
    %v1604 = vpop.f32.mrb[0].mxu0
    %v1605 = vadd.f32 %v1412, %v1604
    %1606 = vmatprep.mubr.bf16.mxu0 %v634
    %1607 = vmatmul.mubr.bf16.gmra.mrb[0].mxu0 %v633
    %v1608 = vpop.f32.mrb[0].mxu0
    %v1609 = vadd.f32 %v1416, %v1608
    %v1610 = vpop.f32.mrb[0].mxu0
    %v1611 = vadd.f32 %v1418, %v1610
    %v1612 = vpop.f32.mrb[0].mxu0
    %v1613 = vadd.f32 %v1420, %v1612
    %v1614 = vpop.f32.mrb[0].mxu0
    %v1615 = vadd.f32 %v1422, %v1614
    %1616 = vmatprep.mubr.bf16.mxu0 %v641
    %1617 = vmatmul.mubr.bf16.gmra.mrb[0].mxu0 %v640
    %v1618 = vpop.f32.mrb[0].mxu0
    %v1619 = vadd.f32 %v1426, %v1618
    %v1620 = vpop.f32.mrb[0].mxu0
    %v1621 = vadd.f32 %v1428, %v1620
    %v1622 = vpop.f32.mrb[0].mxu0
    %v1623 = vadd.f32 %v1430, %v1622
    %v1624 = vpop.f32.mrb[0].mxu0
    %v1625 = vadd.f32 %v1432, %v1624
    %1626 = vmatprep.mubr.bf16.mxu0 %v648
    %1627 = vmatmul.mubr.bf16.gmra.mrb[0].mxu0 %v647
    %v1628 = vpop.f32.mrb[0].mxu0
    %v1629 = vadd.f32 %v1436, %v1628
    %v1630 = vpop.f32.mrb[0].mxu0
    %v1631 = vadd.f32 %v1438, %v1630
    %v1632 = vpop.f32.mrb[0].mxu0
    %v1633 = vadd.f32 %v1440, %v1632
    %v1634 = vpop.f32.mrb[0].mxu0
    %v1635 = vadd.f32 %v1442, %v1634
    %1636 = vmatprep.mubr.bf16.mxu0 %v655
    %1637 = vmatmul.mubr.bf16.gmra.mrb[0].mxu0 %v654
    %v1638 = vpop.f32.mrb[0].mxu0
    %v1639 = vadd.f32 %v1446, %v1638
    %v1640 = vpop.f32.mrb[0].mxu0
    %v1641 = vadd.f32 %v1448, %v1640
    %v1642 = vpop.f32.mrb[0].mxu0
    %v1643 = vadd.f32 %v1450, %v1642
    %v1644 = vpop.f32.mrb[0].mxu0
    %v1645 = vadd.f32 %v1452, %v1644
    %1646 = vmatprep.mubr.bf16.mxu0 %v662
    %1647 = vmatmul.mubr.bf16.gmra.mrb[0].mxu0 %v661
    %v1648 = vpop.f32.mrb[0].mxu0
    %v1649 = vadd.f32 %v1456, %v1648
    %v1650 = vpop.f32.mrb[0].mxu0
    %v1651 = vadd.f32 %v1458, %v1650
    %v1652 = vpop.f32.mrb[0].mxu0
    %v1653 = vadd.f32 %v1460, %v1652
    %v1654 = vpop.f32.mrb[0].mxu0
    %v1655 = vadd.f32 %v1462, %v1654
    %1656 = vmatprep.mubr.bf16.mxu0 %v669
    %1657 = vmatmul.mubr.bf16.gmra.mrb[0].mxu0 %v668
    %v1658 = vpop.f32.mrb[0].mxu0
    %v1659 = vadd.f32 %v1466, %v1658
    %v1660 = vpop.f32.mrb[0].mxu0
    %v1661 = vadd.f32 %v1468, %v1660
    %v1662 = vpop.f32.mrb[0].mxu0
    %v1663 = vadd.f32 %v1470, %v1662
    %v1664 = vpop.f32.mrb[0].mxu0
    %v1665 = vadd.f32 %v1472, %v1664
    %1666 = vmatprep.mubr.bf16.mxu0 %v676
    %1667 = vmatmul.mubr.bf16.gmra.mrb[0].mxu0 %v675
    %v1668 = vpop.f32.mrb[0].mxu0
    %v1669 = vadd.f32 %v1476, %v1668
    %v1670 = vpop.f32.mrb[0].mxu0
    %v1671 = vadd.f32 %v1478, %v1670
    %v1672 = vpop.f32.mrb[0].mxu0
    %v1673 = vadd.f32 %v1480, %v1672
    %v1674 = vpop.f32.mrb[0].mxu0
    %v1675 = vadd.f32 %v1482, %v1674
    %1676 = vmatprep.mubr.bf16.mxu0 %v683
    %1677 = vmatmul.mubr.bf16.gmra.mrb[0].mxu0 %v682
    %v1678 = vpop.f32.mrb[0].mxu0
    %v1679 = vadd.f32 %v1486, %v1678
    %v1680 = vpop.f32.mrb[0].mxu0
    %v1681 = vadd.f32 %v1488, %v1680
    %v1682 = vpop.f32.mrb[0].mxu0
    %v1683 = vadd.f32 %v1490, %v1682
    %v1684 = vpop.f32.mrb[0].mxu0
    %v1685 = vadd.f32 %v1492, %v1684
    %1686 = vmatprep.mubr.bf16.mxu0 %v690
    %1687 = vmatmul.mubr.bf16.gmra.mrb[0].mxu0 %v689
    %v1688 = vpop.f32.mrb[0].mxu0
    %v1689 = vadd.f32 %v1496, %v1688
    %v1690 = vpop.f32.mrb[0].mxu0
    %v1691 = vadd.f32 %v1498, %v1690
    %v1692 = vpop.f32.mrb[0].mxu0
    %v1693 = vadd.f32 %v1500, %v1692
    %v1694 = vpop.f32.mrb[0].mxu0
    %v1695 = vadd.f32 %v1502, %v1694
    %1696 = vmatprep.mubr.bf16.mxu0 %v697
    %1697 = vmatmul.mubr.bf16.gmra.mrb[0].mxu0 %v696
    %v1698 = vpop.f32.mrb[0].mxu0
    %v1699 = vadd.f32 %v1506, %v1698
    %v1700 = vpop.f32.mrb[0].mxu0
    %v1701 = vadd.f32 %v1508, %v1700
    %v1702 = vpop.f32.mrb[0].mxu0
    %v1703 = vadd.f32 %v1510, %v1702
    %v1704 = vpop.f32.mrb[0].mxu0
    %v1705 = vadd.f32 %v1512, %v1704
    %1706 = vmatprep.mubr.bf16.mxu0 %v704
    %1707 = vmatmul.mubr.bf16.gmra.mrb[0].mxu0 %v703
    %v1708 = vpop.f32.mrb[0].mxu0
    %v1709 = vadd.f32 %v1516, %v1708
    %v1710 = vpop.f32.mrb[0].mxu0
    %v1711 = vadd.f32 %v1518, %v1710
    %v1712 = vpop.f32.mrb[0].mxu0
    %v1713 = vadd.f32 %v1520, %v1712
    %v1714 = vpop.f32.mrb[0].mxu0
    %v1715 = vadd.f32 %v1522, %v1714
    %1716 = vmatprep.mubr.bf16.mxu0 %v711
    %1717 = vmatmul.mubr.bf16.gmra.mrb[0].mxu0 %v710
    %v1718 = vpop.f32.mrb[0].mxu0
    %v1719 = vadd.f32 %v1526, %v1718
    %v1720 = vpop.f32.mrb[0].mxu0
    %v1721 = vadd.f32 %v1528, %v1720
    %v1722 = vpop.f32.mrb[0].mxu0
    %v1723 = vadd.f32 %v1530, %v1722
    %v1724 = vpop.f32.mrb[0].mxu0
    %v1725 = vadd.f32 %v1532, %v1724
    %1726 = vmatprep.mubr.bf16.mxu0 %v718
    %1727 = vmatmul.mubr.bf16.gmra.mrb[0].mxu0 %v717
    %v1728 = vpop.f32.mrb[0].mxu0
    %v1729 = vadd.f32 %v1536, %v1728
    %v1730 = vpop.f32.mrb[0].mxu0
    %v1731 = vadd.f32 %v1538, %v1730
    %v1732 = vpop.f32.mrb[0].mxu0
    %v1733 = vadd.f32 %v1540, %v1732
    %v1734 = vpop.f32.mrb[0].mxu0
    %v1735 = vadd.f32 %v1542, %v1734
    %1736 = vmatprep.mubr.bf16.mxu0 %v725
    %1737 = vmatmul.mubr.bf16.gmra.mrb[0].mxu0 %v724
    %v1738 = vpop.f32.mrb[0].mxu0
    %v1739 = vadd.f32 %v1546, %v1738
    %v1740 = vpop.f32.mrb[0].mxu0
    %v1741 = vadd.f32 %v1548, %v1740
    %v1742 = vpop.f32.mrb[0].mxu0
    %v1743 = vadd.f32 %v1550, %v1742
    %v1744 = vpop.f32.mrb[0].mxu0
    %v1745 = vadd.f32 %v1552, %v1744
    %1746 = vmatprep.mubr.bf16.mxu0 %v732
    %1747 = vmatmul.mubr.bf16.gmra.mrb[0].mxu0 %v731
    %v1748 = vpop.f32.mrb[0].mxu0
    %v1749 = vadd.f32 %v1556, %v1748
    %v1750 = vpop.f32.mrb[0].mxu0
    %v1751 = vadd.f32 %v1558, %v1750
    %v1752 = vpop.f32.mrb[0].mxu0
    %v1753 = vadd.f32 %v1560, %v1752
    %v1754 = vpop.f32.mrb[0].mxu0
    %v1755 = vadd.f32 %v1562, %v1754
    %1756 = vdwg.mxu0
    %1757 = vmatprep.subr.bf16.mxu0 %v1191
    %1758 = vmatpush1.bf16.msra.mxu0 %v1190
    %1759 = vmatprep.subr.bf16.mxu0 %v1193
    %1760 = vmatpush1.bf16.msra.mxu0 %v1192
    %1761 = vmatprep.subr.bf16.mxu0 %v1195
    %1762 = vmatpush1.bf16.msra.mxu0 %v1194
    %1763 = vmatprep.subr.bf16.mxu0 %v1197
    %1764 = vmatpush1.bf16.msra.mxu0 %v1196
    %1765 = vmatprep.subr.bf16.mxu0 %v1199
    %1766 = vmatpush1.bf16.msra.mxu0 %v1198
    %1767 = vmatprep.subr.bf16.mxu0 %v1201
    %1768 = vmatpush1.bf16.msra.mxu0 %v1200
    %1769 = vmatprep.subr.bf16.mxu0 %v1203
    %1770 = vmatpush1.bf16.msra.mxu0 %v1202
    %1771 = vmatprep.subr.bf16.mxu0 %v1205
    %1772 = vmatpush1.bf16.msra.mxu0 %v1204
    %1773 = vmatprep.subr.bf16.mxu0 %v1207
    %1774 = vmatpush1.bf16.msra.mxu0 %v1206
    %1775 = vmatprep.subr.bf16.mxu0 %v1209
    %1776 = vmatpush1.bf16.msra.mxu0 %v1208
    %1777 = vmatprep.subr.bf16.mxu0 %v1211
    %1778 = vmatpush1.bf16.msra.mxu0 %v1210
    %1779 = vmatprep.subr.bf16.mxu0 %v1213
    %1780 = vmatpush1.bf16.msra.mxu0 %v1212
    %1781 = vmatprep.subr.bf16.mxu0 %v1215
    %1782 = vmatpush1.bf16.msra.mxu0 %v1214
    %1783 = vmatprep.subr.bf16.mxu0 %v1217
    %1784 = vmatpush1.bf16.msra.mxu0 %v1216
    %1785 = vmatprep.subr.bf16.mxu0 %v1219
    %1786 = vmatpush1.bf16.msra.mxu0 %v1218
    %1787 = vmatprep.subr.bf16.mxu0 %v1221
    %1788 = vmatpush1.bf16.msra.mxu0 %v1220
    %1789 = vmatprep.mubr.bf16.mxu0 %v629
    %1790 = vmatmul.mubr.bf16.gmra.mrb[0].mxu0 %v628
    %v1791 = vpop.f32.mrb[0].mxu0
    %v1792 = vadd.f32 %v1599, %v1791
    %v1793 = vpop.f32.mrb[0].mxu0
    %v1794 = vadd.f32 %v1601, %v1793
    %v1795 = vpop.f32.mrb[0].mxu0
    %v1796 = vadd.f32 %v1603, %v1795
    %v1797 = vpop.f32.mrb[0].mxu0
    %v1798 = vadd.f32 %v1605, %v1797
    %1799 = vmatprep.mubr.bf16.mxu0 %v636
    %1800 = vmatmul.mubr.bf16.gmra.mrb[0].mxu0 %v635
    %v1801 = vpop.f32.mrb[0].mxu0
    %v1802 = vadd.f32 %v1609, %v1801
    %v1803 = vpop.f32.mrb[0].mxu0
    %v1804 = vadd.f32 %v1611, %v1803
    %v1805 = vpop.f32.mrb[0].mxu0
    %v1806 = vadd.f32 %v1613, %v1805
    %v1807 = vpop.f32.mrb[0].mxu0
    %v1808 = vadd.f32 %v1615, %v1807
    %1809 = vmatprep.mubr.bf16.mxu0 %v643
    %1810 = vmatmul.mubr.bf16.gmra.mrb[0].mxu0 %v642
    %v1811 = vpop.f32.mrb[0].mxu0
    %v1812 = vadd.f32 %v1619, %v1811
    %v1813 = vpop.f32.mrb[0].mxu0
    %v1814 = vadd.f32 %v1621, %v1813
    %v1815 = vpop.f32.mrb[0].mxu0
    %v1816 = vadd.f32 %v1623, %v1815
    %v1817 = vpop.f32.mrb[0].mxu0
    %v1818 = vadd.f32 %v1625, %v1817
    %1819 = vmatprep.mubr.bf16.mxu0 %v650
    %1820 = vmatmul.mubr.bf16.gmra.mrb[0].mxu0 %v649
    %v1821 = vpop.f32.mrb[0].mxu0
    %v1822 = vadd.f32 %v1629, %v1821
    %v1823 = vpop.f32.mrb[0].mxu0
    %v1824 = vadd.f32 %v1631, %v1823
    %v1825 = vpop.f32.mrb[0].mxu0
    %v1826 = vadd.f32 %v1633, %v1825
    %v1827 = vpop.f32.mrb[0].mxu0
    %v1828 = vadd.f32 %v1635, %v1827
    %1829 = vmatprep.mubr.bf16.mxu0 %v657
    %1830 = vmatmul.mubr.bf16.gmra.mrb[0].mxu0 %v656
    %v1831 = vpop.f32.mrb[0].mxu0
    %v1832 = vadd.f32 %v1639, %v1831
    %v1833 = vpop.f32.mrb[0].mxu0
    %v1834 = vadd.f32 %v1641, %v1833
    %v1835 = vpop.f32.mrb[0].mxu0
    %v1836 = vadd.f32 %v1643, %v1835
    %v1837 = vpop.f32.mrb[0].mxu0
    %v1838 = vadd.f32 %v1645, %v1837
    %1839 = vmatprep.mubr.bf16.mxu0 %v664
    %1840 = vmatmul.mubr.bf16.gmra.mrb[0].mxu0 %v663
    %v1841 = vpop.f32.mrb[0].mxu0
    %v1842 = vadd.f32 %v1649, %v1841
    %v1843 = vpop.f32.mrb[0].mxu0
    %v1844 = vadd.f32 %v1651, %v1843
    %v1845 = vpop.f32.mrb[0].mxu0
    %v1846 = vadd.f32 %v1653, %v1845
    %v1847 = vpop.f32.mrb[0].mxu0
    %v1848 = vadd.f32 %v1655, %v1847
    %1849 = vmatprep.mubr.bf16.mxu0 %v671
    %1850 = vmatmul.mubr.bf16.gmra.mrb[0].mxu0 %v670
    %v1851 = vpop.f32.mrb[0].mxu0
    %v1852 = vadd.f32 %v1659, %v1851
    %v1853 = vpop.f32.mrb[0].mxu0
    %v1854 = vadd.f32 %v1661, %v1853
    %v1855 = vpop.f32.mrb[0].mxu0
    %v1856 = vadd.f32 %v1663, %v1855
    %v1857 = vpop.f32.mrb[0].mxu0
    %v1858 = vadd.f32 %v1665, %v1857
    %1859 = vmatprep.mubr.bf16.mxu0 %v678
    %1860 = vmatmul.mubr.bf16.gmra.mrb[0].mxu0 %v677
    %v1861 = vpop.f32.mrb[0].mxu0
    %v1862 = vadd.f32 %v1669, %v1861
    %v1863 = vpop.f32.mrb[0].mxu0
    %v1864 = vadd.f32 %v1671, %v1863
    %v1865 = vpop.f32.mrb[0].mxu0
    %v1866 = vadd.f32 %v1673, %v1865
    %v1867 = vpop.f32.mrb[0].mxu0
    %v1868 = vadd.f32 %v1675, %v1867
    %1869 = vmatprep.mubr.bf16.mxu0 %v685
    %1870 = vmatmul.mubr.bf16.gmra.mrb[0].mxu0 %v684
    %v1871 = vpop.f32.mrb[0].mxu0
    %v1872 = vadd.f32 %v1679, %v1871
    %v1873 = vpop.f32.mrb[0].mxu0
    %v1874 = vadd.f32 %v1681, %v1873
    %v1875 = vpop.f32.mrb[0].mxu0
    %v1876 = vadd.f32 %v1683, %v1875
    %v1877 = vpop.f32.mrb[0].mxu0
    %v1878 = vadd.f32 %v1685, %v1877
    %1879 = vmatprep.mubr.bf16.mxu0 %v692
    %1880 = vmatmul.mubr.bf16.gmra.mrb[0].mxu0 %v691
    %v1881 = vpop.f32.mrb[0].mxu0
    %v1882 = vadd.f32 %v1689, %v1881
    %v1883 = vpop.f32.mrb[0].mxu0
    %v1884 = vadd.f32 %v1691, %v1883
    %v1885 = vpop.f32.mrb[0].mxu0
    %v1886 = vadd.f32 %v1693, %v1885
    %v1887 = vpop.f32.mrb[0].mxu0
    %v1888 = vadd.f32 %v1695, %v1887
    %1889 = vmatprep.mubr.bf16.mxu0 %v699
    %1890 = vmatmul.mubr.bf16.gmra.mrb[0].mxu0 %v698
    %v1891 = vpop.f32.mrb[0].mxu0
    %v1892 = vadd.f32 %v1699, %v1891
    %v1893 = vpop.f32.mrb[0].mxu0
    %v1894 = vadd.f32 %v1701, %v1893
    %v1895 = vpop.f32.mrb[0].mxu0
    %v1896 = vadd.f32 %v1703, %v1895
    %v1897 = vpop.f32.mrb[0].mxu0
    %v1898 = vadd.f32 %v1705, %v1897
    %1899 = vmatprep.mubr.bf16.mxu0 %v706
    %1900 = vmatmul.mubr.bf16.gmra.mrb[0].mxu0 %v705
    %v1901 = vpop.f32.mrb[0].mxu0
    %v1902 = vadd.f32 %v1709, %v1901
    %v1903 = vpop.f32.mrb[0].mxu0
    %v1904 = vadd.f32 %v1711, %v1903
    %v1905 = vpop.f32.mrb[0].mxu0
    %v1906 = vadd.f32 %v1713, %v1905
    %v1907 = vpop.f32.mrb[0].mxu0
    %v1908 = vadd.f32 %v1715, %v1907
    %1909 = vmatprep.mubr.bf16.mxu0 %v713
    %1910 = vmatmul.mubr.bf16.gmra.mrb[0].mxu0 %v712
    %v1911 = vpop.f32.mrb[0].mxu0
    %v1912 = vadd.f32 %v1719, %v1911
    %v1913 = vpop.f32.mrb[0].mxu0
    %v1914 = vadd.f32 %v1721, %v1913
    %v1915 = vpop.f32.mrb[0].mxu0
    %v1916 = vadd.f32 %v1723, %v1915
    %v1917 = vpop.f32.mrb[0].mxu0
    %v1918 = vadd.f32 %v1725, %v1917
    %1919 = vmatprep.mubr.bf16.mxu0 %v720
    %1920 = vmatmul.mubr.bf16.gmra.mrb[0].mxu0 %v719
    %v1921 = vpop.f32.mrb[0].mxu0
    %v1922 = vadd.f32 %v1729, %v1921
    %v1923 = vpop.f32.mrb[0].mxu0
    %v1924 = vadd.f32 %v1731, %v1923
    %v1925 = vpop.f32.mrb[0].mxu0
    %v1926 = vadd.f32 %v1733, %v1925
    %v1927 = vpop.f32.mrb[0].mxu0
    %v1928 = vadd.f32 %v1735, %v1927
    %1929 = vmatprep.mubr.bf16.mxu0 %v727
    %1930 = vmatmul.mubr.bf16.gmra.mrb[0].mxu0 %v726
    %v1931 = vpop.f32.mrb[0].mxu0
    %v1932 = vadd.f32 %v1739, %v1931
    %v1933 = vpop.f32.mrb[0].mxu0
    %v1934 = vadd.f32 %v1741, %v1933
    %v1935 = vpop.f32.mrb[0].mxu0
    %v1936 = vadd.f32 %v1743, %v1935
    %v1937 = vpop.f32.mrb[0].mxu0
    %v1938 = vadd.f32 %v1745, %v1937
    %1939 = vmatprep.mubr.bf16.mxu0 %v734
    %1940 = vmatmul.mubr.bf16.gmra.mrb[0].mxu0 %v733
    %v1941 = vpop.f32.mrb[0].mxu0
    %v1942 = vadd.f32 %v1749, %v1941
    %v1943 = vpop.f32.mrb[0].mxu0
    %v1944 = vadd.f32 %v1751, %v1943
    %v1945 = vpop.f32.mrb[0].mxu0
    %v1946 = vadd.f32 %v1753, %v1945
    %v1947 = vpop.f32.mrb[0].mxu0
    %v1948 = vadd.f32 %v1755, %v1947
    %1949 = vdwg.mxu0
    %1950 = vmatprep.subr.bf16.mxu0 %v1223
    %1951 = vmatpush1.bf16.msra.mxu0 %v1222
    %1952 = vmatprep.subr.bf16.mxu0 0
    %1953 = vmatpush1.bf16.msra.mxu0 0
    %1954 = vmatprep.subr.bf16.mxu0 0
    %1955 = vmatpush1.bf16.msra.mxu0 0
    %1956 = vmatprep.subr.bf16.mxu0 0
    %1957 = vmatpush1.bf16.msra.mxu0 0
    %1958 = vmatprep.subr.bf16.mxu0 0
    %1959 = vmatpush1.bf16.msra.mxu0 0
    %1960 = vmatprep.subr.bf16.mxu0 0
    %1961 = vmatpush1.bf16.msra.mxu0 0
    %1962 = vmatprep.subr.bf16.mxu0 0
    %1963 = vmatpush1.bf16.msra.mxu0 0
    %1964 = vmatprep.subr.bf16.mxu0 0
    %1965 = vmatpush1.bf16.msra.mxu0 0
    %1966 = vmatprep.subr.bf16.mxu0 0
    %1967 = vmatpush1.bf16.msra.mxu0 0
    %1968 = vmatprep.subr.bf16.mxu0 0
    %1969 = vmatpush1.bf16.msra.mxu0 0
    %1970 = vmatprep.subr.bf16.mxu0 0
    %1971 = vmatpush1.bf16.msra.mxu0 0
    %1972 = vmatprep.subr.bf16.mxu0 0
    %1973 = vmatpush1.bf16.msra.mxu0 0
    %1974 = vmatprep.subr.bf16.mxu0 0
    %1975 = vmatpush1.bf16.msra.mxu0 0
    %1976 = vmatprep.subr.bf16.mxu0 0
    %1977 = vmatpush1.bf16.msra.mxu0 0
    %1978 = vmatprep.subr.bf16.mxu0 0
    %1979 = vmatpush1.bf16.msra.mxu0 0
    %1980 = vmatprep.subr.bf16.mxu0 0
    %1981 = vmatpush1.bf16.msra.mxu0 0
    %1982 = vmatprep.mubr.bf16.mxu0 0
    %1983 = vmatmul.mubr.bf16.gmra.mrb[0].mxu0 %v1324
    %v1984 = vpop.f32.mrb[0].mxu0
    %v1985 = vadd.f32 %v1792, %v1984
    %v1986 = vpop.f32.mrb[0].mxu0
    %v1987 = vadd.f32 %v1794, %v1986
    %v1988 = vpop.f32.mrb[0].mxu0
    %v1989 = vadd.f32 %v1796, %v1988
    %v1990 = vpop.f32.mrb[0].mxu0
    %v1991 = vadd.f32 %v1798, %v1990
    %1992 = vmatprep.mubr.bf16.mxu0 0
    %1993 = vmatmul.mubr.bf16.gmra.mrb[0].mxu0 %v1327
    %v1994 = vpop.f32.mrb[0].mxu0
    %v1995 = vadd.f32 %v1802, %v1994
    %v1996 = vpop.f32.mrb[0].mxu0
    %v1997 = vadd.f32 %v1804, %v1996
    %v1998 = vpop.f32.mrb[0].mxu0
    %v1999 = vadd.f32 %v1806, %v1998
    %v2000 = vpop.f32.mrb[0].mxu0
    %v2001 = vadd.f32 %v1808, %v2000
    %2002 = vmatprep.mubr.bf16.mxu0 0
    %2003 = vmatmul.mubr.bf16.gmra.mrb[0].mxu0 %v1330
    %v2004 = vpop.f32.mrb[0].mxu0
    %v2005 = vadd.f32 %v1812, %v2004
    %v2006 = vpop.f32.mrb[0].mxu0
    %v2007 = vadd.f32 %v1814, %v2006
    %v2008 = vpop.f32.mrb[0].mxu0
    %v2009 = vadd.f32 %v1816, %v2008
    %v2010 = vpop.f32.mrb[0].mxu0
    %v2011 = vadd.f32 %v1818, %v2010
    %2012 = vmatprep.mubr.bf16.mxu0 0
    %2013 = vmatmul.mubr.bf16.gmra.mrb[0].mxu0 %v1333
    %v2014 = vpop.f32.mrb[0].mxu0
    %v2015 = vadd.f32 %v1822, %v2014
    %v2016 = vpop.f32.mrb[0].mxu0
    %v2017 = vadd.f32 %v1824, %v2016
    %v2018 = vpop.f32.mrb[0].mxu0
    %v2019 = vadd.f32 %v1826, %v2018
    %v2020 = vpop.f32.mrb[0].mxu0
    %v2021 = vadd.f32 %v1828, %v2020
    %2022 = vmatprep.mubr.bf16.mxu0 0
    %2023 = vmatmul.mubr.bf16.gmra.mrb[0].mxu0 %v1336
    %v2024 = vpop.f32.mrb[0].mxu0
    %v2025 = vadd.f32 %v1832, %v2024
    %v2026 = vpop.f32.mrb[0].mxu0
    %v2027 = vadd.f32 %v1834, %v2026
    %v2028 = vpop.f32.mrb[0].mxu0
    %v2029 = vadd.f32 %v1836, %v2028
    %v2030 = vpop.f32.mrb[0].mxu0
    %v2031 = vadd.f32 %v1838, %v2030
    %2032 = vmatprep.mubr.bf16.mxu0 0
    %2033 = vmatmul.mubr.bf16.gmra.mrb[0].mxu0 %v1339
    %v2034 = vpop.f32.mrb[0].mxu0
    %v2035 = vadd.f32 %v1842, %v2034
    %v2036 = vpop.f32.mrb[0].mxu0
    %v2037 = vadd.f32 %v1844, %v2036
    %v2038 = vpop.f32.mrb[0].mxu0
    %v2039 = vadd.f32 %v1846, %v2038
    %v2040 = vpop.f32.mrb[0].mxu0
    %v2041 = vadd.f32 %v1848, %v2040
    %2042 = vmatprep.mubr.bf16.mxu0 0
    %2043 = vmatmul.mubr.bf16.gmra.mrb[0].mxu0 %v1342
    %v2044 = vpop.f32.mrb[0].mxu0
    %v2045 = vadd.f32 %v1852, %v2044
    %v2046 = vpop.f32.mrb[0].mxu0
    %v2047 = vadd.f32 %v1854, %v2046
    %v2048 = vpop.f32.mrb[0].mxu0
    %v2049 = vadd.f32 %v1856, %v2048
    %v2050 = vpop.f32.mrb[0].mxu0
    %v2051 = vadd.f32 %v1858, %v2050
    %2052 = vmatprep.mubr.bf16.mxu0 0
    %2053 = vmatmul.mubr.bf16.gmra.mrb[0].mxu0 %v1345
    %v2054 = vpop.f32.mrb[0].mxu0
    %v2055 = vadd.f32 %v1862, %v2054
    %v2056 = vpop.f32.mrb[0].mxu0
    %v2057 = vadd.f32 %v1864, %v2056
    %v2058 = vpop.f32.mrb[0].mxu0
    %v2059 = vadd.f32 %v1866, %v2058
    %v2060 = vpop.f32.mrb[0].mxu0
    %v2061 = vadd.f32 %v1868, %v2060
    %2062 = vmatprep.mubr.bf16.mxu0 0
    %2063 = vmatmul.mubr.bf16.gmra.mrb[0].mxu0 %v1348
    %v2064 = vpop.f32.mrb[0].mxu0
    %v2065 = vadd.f32 %v1872, %v2064
    %v2066 = vpop.f32.mrb[0].mxu0
    %v2067 = vadd.f32 %v1874, %v2066
    %v2068 = vpop.f32.mrb[0].mxu0
    %v2069 = vadd.f32 %v1876, %v2068
    %v2070 = vpop.f32.mrb[0].mxu0
    %v2071 = vadd.f32 %v1878, %v2070
    %2072 = vmatprep.mubr.bf16.mxu0 0
    %2073 = vmatmul.mubr.bf16.gmra.mrb[0].mxu0 %v1351
    %v2074 = vpop.f32.mrb[0].mxu0
    %v2075 = vadd.f32 %v1882, %v2074
    %v2076 = vpop.f32.mrb[0].mxu0
    %v2077 = vadd.f32 %v1884, %v2076
    %v2078 = vpop.f32.mrb[0].mxu0
    %v2079 = vadd.f32 %v1886, %v2078
    %v2080 = vpop.f32.mrb[0].mxu0
    %v2081 = vadd.f32 %v1888, %v2080
    %2082 = vmatprep.mubr.bf16.mxu0 0
    %2083 = vmatmul.mubr.bf16.gmra.mrb[0].mxu0 %v1354
    %v2084 = vpop.f32.mrb[0].mxu0
    %v2085 = vadd.f32 %v1892, %v2084
    %v2086 = vpop.f32.mrb[0].mxu0
    %v2087 = vadd.f32 %v1894, %v2086
    %v2088 = vpop.f32.mrb[0].mxu0
    %v2089 = vadd.f32 %v1896, %v2088
    %v2090 = vpop.f32.mrb[0].mxu0
    %v2091 = vadd.f32 %v1898, %v2090
    %2092 = vmatprep.mubr.bf16.mxu0 0
    %2093 = vmatmul.mubr.bf16.gmra.mrb[0].mxu0 %v1357
    %v2094 = vpop.f32.mrb[0].mxu0
    %v2095 = vadd.f32 %v1902, %v2094
    %v2096 = vpop.f32.mrb[0].mxu0
    %v2097 = vadd.f32 %v1904, %v2096
    %v2098 = vpop.f32.mrb[0].mxu0
    %v2099 = vadd.f32 %v1906, %v2098
    %v2100 = vpop.f32.mrb[0].mxu0
    %v2101 = vadd.f32 %v1908, %v2100
    %2102 = vmatprep.mubr.bf16.mxu0 0
    %2103 = vmatmul.mubr.bf16.gmra.mrb[0].mxu0 %v1360
    %v2104 = vpop.f32.mrb[0].mxu0
    %v2105 = vadd.f32 %v1912, %v2104
    %v2106 = vpop.f32.mrb[0].mxu0
    %v2107 = vadd.f32 %v1914, %v2106
    %v2108 = vpop.f32.mrb[0].mxu0
    %v2109 = vadd.f32 %v1916, %v2108
    %v2110 = vpop.f32.mrb[0].mxu0
    %v2111 = vadd.f32 %v1918, %v2110
    %2112 = vmatprep.mubr.bf16.mxu0 0
    %2113 = vmatmul.mubr.bf16.gmra.mrb[0].mxu0 %v1363
    %v2114 = vpop.f32.mrb[0].mxu0
    %v2115 = vadd.f32 %v1922, %v2114
    %v2116 = vpop.f32.mrb[0].mxu0
    %v2117 = vadd.f32 %v1924, %v2116
    %v2118 = vpop.f32.mrb[0].mxu0
    %v2119 = vadd.f32 %v1926, %v2118
    %v2120 = vpop.f32.mrb[0].mxu0
    %v2121 = vadd.f32 %v1928, %v2120
    %2122 = vmatprep.mubr.bf16.mxu0 0
    %2123 = vmatmul.mubr.bf16.gmra.mrb[0].mxu0 %v1366
    %v2124 = vpop.f32.mrb[0].mxu0
    %v2125 = vadd.f32 %v1932, %v2124
    %v2126 = vpop.f32.mrb[0].mxu0
    %v2127 = vadd.f32 %v1934, %v2126
    %v2128 = vpop.f32.mrb[0].mxu0
    %v2129 = vadd.f32 %v1936, %v2128
    %v2130 = vpop.f32.mrb[0].mxu0
    %v2131 = vadd.f32 %v1938, %v2130
    %2132 = vmatprep.mubr.bf16.mxu0 0
    %2133 = vmatmul.mubr.bf16.gmra.mrb[0].mxu0 %v1369
    %v2134 = vpop.f32.mrb[0].mxu0
    %v2135 = vadd.f32 %v1942, %v2134
    %v2136 = vpop.f32.mrb[0].mxu0
    %v2137 = vadd.f32 %v1944, %v2136
    %v2138 = vpop.f32.mrb[0].mxu0
    %v2139 = vadd.f32 %v1946, %v2138
    %v2140 = vpop.f32.mrb[0].mxu0
    %v2141 = vadd.f32 %v1948, %v2140
    %2142 = vdwg.mxu0
    %v2143 = vmax.f32 %v1985, 0.0
    %v2144 = vmax.f32 %v1987, 0.0
    %v2145 = vmax.f32 %v1989, 0.0
    %v2146 = vmax.f32 %v1991, 0.0
    %v2147 = vmax.f32 %v1995, 0.0
    %v2148 = vmax.f32 %v1997, 0.0
    %v2149 = vmax.f32 %v1999, 0.0
    %v2150 = vmax.f32 %v2001, 0.0
    %v2151 = vmax.f32 %v2005, 0.0
    %v2152 = vmax.f32 %v2007, 0.0
    %v2153 = vmax.f32 %v2009, 0.0
    %v2154 = vmax.f32 %v2011, 0.0
    %v2155 = vmax.f32 %v2015, 0.0
    %v2156 = vmax.f32 %v2017, 0.0
    %v2157 = vmax.f32 %v2019, 0.0
    %v2158 = vmax.f32 %v2021, 0.0
    %v2159 = vmax.f32 %v2025, 0.0
    %v2160 = vmax.f32 %v2027, 0.0
    %v2161 = vmax.f32 %v2029, 0.0
    %v2162 = vmax.f32 %v2031, 0.0
    %v2163 = vmax.f32 %v2035, 0.0
    %v2164 = vmax.f32 %v2037, 0.0
    %v2165 = vmax.f32 %v2039, 0.0
    %v2166 = vmax.f32 %v2041, 0.0
    %v2167 = vmax.f32 %v2045, 0.0
    %v2168 = vmax.f32 %v2047, 0.0
    %v2169 = vmax.f32 %v2049, 0.0
    %v2170 = vmax.f32 %v2051, 0.0
    %v2171 = vmax.f32 %v2055, 0.0
    %v2172 = vmax.f32 %v2057, 0.0
    %v2173 = vmax.f32 %v2059, 0.0
    %v2174 = vmax.f32 %v2061, 0.0
    %v2175 = vmax.f32 %v2065, 0.0
    %v2176 = vmax.f32 %v2067, 0.0
    %v2177 = vmax.f32 %v2069, 0.0
    %v2178 = vmax.f32 %v2071, 0.0
    %v2179 = vmax.f32 %v2075, 0.0
    %v2180 = vmax.f32 %v2077, 0.0
    %v2181 = vmax.f32 %v2079, 0.0
    %v2182 = vmax.f32 %v2081, 0.0
    %v2183 = vmax.f32 %v2085, 0.0
    %v2184 = vmax.f32 %v2087, 0.0
    %v2185 = vmax.f32 %v2089, 0.0
    %v2186 = vmax.f32 %v2091, 0.0
    %v2187 = vmax.f32 %v2095, 0.0
    %v2188 = vmax.f32 %v2097, 0.0
    %v2189 = vmax.f32 %v2099, 0.0
    %v2190 = vmax.f32 %v2101, 0.0
    %v2191 = vmax.f32 %v2105, 0.0
    %v2192 = vmax.f32 %v2107, 0.0
    %v2193 = vmax.f32 %v2109, 0.0
    %v2194 = vmax.f32 %v2111, 0.0
    %v2195 = vmax.f32 %v2115, 0.0
    %v2196 = vmax.f32 %v2117, 0.0
    %v2197 = vmax.f32 %v2119, 0.0
    %v2198 = vmax.f32 %v2121, 0.0
    %v2199 = vmax.f32 %v2125, 0.0
    %v2200 = vmax.f32 %v2127, 0.0
    %v2201 = vmax.f32 %v2129, 0.0
    %v2202 = vmax.f32 %v2131, 0.0
    %v2203 = vmax.f32 %v2135, 0.0
    %v2204 = vmax.f32 %v2137, 0.0
    %v2205 = vmax.f32 %v2139, 0.0
    %v2206 = vmax.f32 %v2141, 0.0
    %v2207 = vpack.c.bf16 %v2145, %v2143
    %v2208 = vpack.c.bf16 %v2146, %v2144
    %v2209 = vpack.c.bf16 %v2149, %v2147
    %v2210 = vpack.c.bf16 %v2150, %v2148
    %v2211 = vpack.c.bf16 %v2153, %v2151
    %v2212 = vpack.c.bf16 %v2154, %v2152
    %v2213 = vpack.c.bf16 %v2157, %v2155
    %v2214 = vpack.c.bf16 %v2158, %v2156
    %v2215 = vpack.c.bf16 %v2161, %v2159
    %v2216 = vpack.c.bf16 %v2162, %v2160
    %v2217 = vpack.c.bf16 %v2165, %v2163
    %v2218 = vpack.c.bf16 %v2166, %v2164
    %v2219 = vpack.c.bf16 %v2169, %v2167
    %v2220 = vpack.c.bf16 %v2170, %v2168
    %v2221 = vpack.c.bf16 %v2173, %v2171
    %v2222 = vpack.c.bf16 %v2174, %v2172
    %v2223 = vpack.c.bf16 %v2177, %v2175
    %v2224 = vpack.c.bf16 %v2178, %v2176
    %v2225 = vpack.c.bf16 %v2181, %v2179
    %v2226 = vpack.c.bf16 %v2182, %v2180
    %v2227 = vpack.c.bf16 %v2185, %v2183
    %v2228 = vpack.c.bf16 %v2186, %v2184
    %v2229 = vpack.c.bf16 %v2189, %v2187
    %v2230 = vpack.c.bf16 %v2190, %v2188
    %v2231 = vpack.c.bf16 %v2193, %v2191
    %v2232 = vpack.c.bf16 %v2194, %v2192
    %v2233 = vpack.c.bf16 %v2197, %v2195
    %v2234 = vpack.c.bf16 %v2198, %v2196
    %v2235 = vpack.c.bf16 %v2201, %v2199
    %v2236 = vpack.c.bf16 %v2202, %v2200
    %v2237 = vpack.c.bf16 %v2205, %v2203
    %v2238 = vpack.c.bf16 %v2206, %v2204
    %v2239 = vld [vmem:[%s3] sm:$0xff]
    %v2240 = vld [vmem:[%s3 + $0x8] sm:$0xff]
    %v2241 = vld [vmem:[%s3 + $0x10] sm:$0xff]
    %v2242 = vld [vmem:[%s3 + $0x18] sm:$0xff]
    %v2243 = vld [vmem:[%s3 + $0x20] sm:$0xff]
    %v2244 = vld [vmem:[%s3 + $0x28] sm:$0xff]
    %v2245 = vld [vmem:[%s3 + $0x30] sm:$0xff]
    %v2246 = vld [vmem:[%s3 + $0x38] sm:$0xff]
    %v2247 = vld [vmem:[%s3 + $0x40] sm:$0xff]
    %v2248 = vld [vmem:[%s3 + $0x48] sm:$0xff]
    %v2249 = vld [vmem:[%s3 + $0x50] sm:$0xff]
    %v2250 = vld [vmem:[%s3 + $0x58] sm:$0xff]
    %v2251 = vld [vmem:[%s3 + $0x60] sm:$0xff]
    %v2252 = vld [vmem:[%s3 + $0x68] sm:$0xff]
    %v2253 = vld [vmem:[%s3 + $0x70] sm:$0xff]
    %v2254 = vld [vmem:[%s3 + $0x78] sm:$0xff]
    %v2255 = vld [vmem:[%s3 + $0x80] sm:$0xff]
    %v2256 = vld [vmem:[%s3 + $0x88] sm:$0xff]
    %v2257 = vld [vmem:[%s3 + $0x90] sm:$0xff]
    %v2258 = vld [vmem:[%s3 + $0x98] sm:$0xff]
    %v2259 = vld [vmem:[%s3 + $0xa0] sm:$0xff]
    %v2260 = vld [vmem:[%s3 + $0xa8] sm:$0xff]
    %v2261 = vld [vmem:[%s3 + $0xb0] sm:$0xff]
    %v2262 = vld [vmem:[%s3 + $0xb8] sm:$0xff]
    %v2263 = vld [vmem:[%s3 + $0xc0] sm:$0xff]
    %v2264 = vld [vmem:[%s3 + $0xc8] sm:$0xff]
    %v2265 = vld [vmem:[%s3 + $0xd0] sm:$0xff]
    %v2266 = vld [vmem:[%s3 + $0xd8] sm:$0xff]
    %v2267 = vld [vmem:[%s3 + $0xe0] sm:$0xff]
    %v2268 = vld [vmem:[%s3 + $0xe8] sm:$0xff]
    %v2269 = vld [vmem:[%s3 + $0xf0] sm:$0xff]
    %v2270 = vld [vmem:[%s3 + $0xf8] sm:$0xff]
    %v2271 = vld [vmem:[%s4] sm:$0x3]
    %v2273 = vlaneseq
    %v2274 = vshrl.u32 %v2273, 7
    %v2275 = vsub.s32 0, %v2274
    %v2276 = vrot.slane %v2271, %v2275
    %v2277 = vlaneseq
    %v2278 = vshrl.u32 %v2277, 7
    %v2279 = vsub.s32 1, %v2278
    %v2280 = vrot.slane %v2271, %v2279
    %v2315 = vunpack.c.l.b16 %v2239
    %v2316 = vunpack.c.h.b16 %v2239
    %v2317 = vunpack.c.l.b16 %v2240
    %v2318 = vunpack.c.h.b16 %v2240
    %v2319 = vunpack.c.l.b16 %v2241
    %v2320 = vunpack.c.h.b16 %v2241
    %v2321 = vunpack.c.l.b16 %v2242
    %v2322 = vunpack.c.h.b16 %v2242
    %v2323 = vunpack.c.l.b16 %v2243
    %v2324 = vunpack.c.h.b16 %v2243
    %v2325 = vunpack.c.l.b16 %v2244
    %v2326 = vunpack.c.h.b16 %v2244
    %v2327 = vunpack.c.l.b16 %v2245
    %v2328 = vunpack.c.h.b16 %v2245
    %v2329 = vunpack.c.l.b16 %v2246
    %v2330 = vunpack.c.h.b16 %v2246
    %v2331 = vunpack.c.l.b16 %v2247
    %v2332 = vunpack.c.h.b16 %v2247
    %v2333 = vunpack.c.l.b16 %v2248
    %v2334 = vunpack.c.h.b16 %v2248
    %v2335 = vunpack.c.l.b16 %v2249
    %v2336 = vunpack.c.h.b16 %v2249
    %v2337 = vunpack.c.l.b16 %v2250
    %v2338 = vunpack.c.h.b16 %v2250
    %v2339 = vunpack.c.l.b16 %v2251
    %v2340 = vunpack.c.h.b16 %v2251
    %v2341 = vunpack.c.l.b16 %v2252
    %v2342 = vunpack.c.h.b16 %v2252
    %v2343 = vunpack.c.l.b16 %v2253
    %v2344 = vunpack.c.h.b16 %v2253
    %v2345 = vunpack.c.l.b16 %v2254
    %v2346 = vunpack.c.h.b16 %v2254
    %v2347 = vunpack.c.l.b16 %v2255
    %v2348 = vunpack.c.h.b16 %v2255
    %v2349 = vunpack.c.l.b16 %v2256
    %v2350 = vunpack.c.h.b16 %v2256
    %v2351 = vunpack.c.l.b16 %v2257
    %v2352 = vunpack.c.h.b16 %v2257
    %v2353 = vunpack.c.l.b16 %v2258
    %v2354 = vunpack.c.h.b16 %v2258
    %v2355 = vunpack.c.l.b16 %v2259
    %v2356 = vunpack.c.h.b16 %v2259
    %v2357 = vunpack.c.l.b16 %v2260
    %v2358 = vunpack.c.h.b16 %v2260
    %v2359 = vunpack.c.l.b16 %v2261
    %v2360 = vunpack.c.h.b16 %v2261
    %v2361 = vunpack.c.l.b16 %v2262
    %v2362 = vunpack.c.h.b16 %v2262
    %v2363 = vunpack.c.l.b16 %v2263
    %v2364 = vunpack.c.h.b16 %v2263
    %v2365 = vunpack.c.l.b16 %v2264
    %v2366 = vunpack.c.h.b16 %v2264
    %v2367 = vunpack.c.l.b16 %v2265
    %v2368 = vunpack.c.h.b16 %v2265
    %v2369 = vunpack.c.l.b16 %v2266
    %v2370 = vunpack.c.h.b16 %v2266
    %v2371 = vunpack.c.l.b16 %v2267
    %v2372 = vunpack.c.h.b16 %v2267
    %v2373 = vunpack.c.l.b16 %v2268
    %v2374 = vunpack.c.h.b16 %v2268
    %v2375 = vunpack.c.l.b16 %v2269
    %v2376 = vunpack.c.h.b16 %v2269
    %v2377 = vunpack.c.l.b16 %v2270
    %v2378 = vunpack.c.h.b16 %v2270
    %v2379 = vpack.c.b16 %v2317, %v2315
    %v2380 = vpack.c.b16 %v2318, %v2316
    %v2381 = vpack.c.b16 %v2321, %v2319
    %v2382 = vpack.c.b16 %v2322, %v2320
    %v2383 = vpack.c.b16 %v2325, %v2323
    %v2384 = vpack.c.b16 %v2326, %v2324
    %v2385 = vpack.c.b16 %v2329, %v2327
    %v2386 = vpack.c.b16 %v2330, %v2328
    %v2387 = vpack.c.b16 %v2333, %v2331
    %v2388 = vpack.c.b16 %v2334, %v2332
    %v2389 = vpack.c.b16 %v2337, %v2335
    %v2390 = vpack.c.b16 %v2338, %v2336
    %v2391 = vpack.c.b16 %v2341, %v2339
    %v2392 = vpack.c.b16 %v2342, %v2340
    %v2393 = vpack.c.b16 %v2345, %v2343
    %v2394 = vpack.c.b16 %v2346, %v2344
    %v2395 = vpack.c.b16 %v2349, %v2347
    %v2396 = vpack.c.b16 %v2350, %v2348
    %v2397 = vpack.c.b16 %v2353, %v2351
    %v2398 = vpack.c.b16 %v2354, %v2352
    %v2399 = vpack.c.b16 %v2357, %v2355
    %v2400 = vpack.c.b16 %v2358, %v2356
    %v2401 = vpack.c.b16 %v2361, %v2359
    %v2402 = vpack.c.b16 %v2362, %v2360
    %v2403 = vpack.c.b16 %v2365, %v2363
    %v2404 = vpack.c.b16 %v2366, %v2364
    %v2405 = vpack.c.b16 %v2369, %v2367
    %v2406 = vpack.c.b16 %v2370, %v2368
    %v2407 = vpack.c.b16 %v2373, %v2371
    %v2408 = vpack.c.b16 %v2374, %v2372
    %v2409 = vpack.c.b16 %v2377, %v2375
    %v2410 = vpack.c.b16 %v2378, %v2376
    %2443 = vmatprep.subr.bf16.mxu0 %v2380
    %2444 = vmatpush1.bf16.msra.mxu0 %v2379
    %2445 = vmatprep.subr.bf16.mxu0 %v2382
    %2446 = vmatpush1.bf16.msra.mxu0 %v2381
    %2447 = vmatprep.subr.bf16.mxu0 %v2384
    %2448 = vmatpush1.bf16.msra.mxu0 %v2383
    %2449 = vmatprep.subr.bf16.mxu0 %v2386
    %2450 = vmatpush1.bf16.msra.mxu0 %v2385
    %2451 = vmatprep.subr.bf16.mxu0 %v2388
    %2452 = vmatpush1.bf16.msra.mxu0 %v2387
    %2453 = vmatprep.subr.bf16.mxu0 %v2390
    %2454 = vmatpush1.bf16.msra.mxu0 %v2389
    %2455 = vmatprep.subr.bf16.mxu0 %v2392
    %2456 = vmatpush1.bf16.msra.mxu0 %v2391
    %2457 = vmatprep.subr.bf16.mxu0 %v2394
    %2458 = vmatpush1.bf16.msra.mxu0 %v2393
    %2459 = vmatprep.subr.bf16.mxu0 %v2396
    %2460 = vmatpush1.bf16.msra.mxu0 %v2395
    %2461 = vmatprep.subr.bf16.mxu0 %v2398
    %2462 = vmatpush1.bf16.msra.mxu0 %v2397
    %2463 = vmatprep.subr.bf16.mxu0 %v2400
    %2464 = vmatpush1.bf16.msra.mxu0 %v2399
    %2465 = vmatprep.subr.bf16.mxu0 %v2402
    %2466 = vmatpush1.bf16.msra.mxu0 %v2401
    %2467 = vmatprep.subr.bf16.mxu0 %v2404
    %2468 = vmatpush1.bf16.msra.mxu0 %v2403
    %2469 = vmatprep.subr.bf16.mxu0 %v2406
    %2470 = vmatpush1.bf16.msra.mxu0 %v2405
    %2471 = vmatprep.subr.bf16.mxu0 %v2408
    %2472 = vmatpush1.bf16.msra.mxu0 %v2407
    %2473 = vmatprep.subr.bf16.mxu0 %v2410
    %2474 = vmatpush1.bf16.msra.mxu0 %v2409
    %2475 = vmatprep.mubr.bf16.mxu0 %v2208
    %2476 = vmatmul.mubr.bf16.gmra.mrb[0].mxu0 %v2207
    %v2477 = vpop.f32.mrb[0].mxu0
    %v2478 = vadd.f32 %v2276, %v2477
    %v2479 = vpop.f32.mrb[0].mxu0
    %v2480 = vadd.f32 %v2280, %v2479
    %v2481 = vpop.f32.mrb[0].mxu0
    %v2482 = vadd.f32 %v2276, %v2481
    %v2483 = vpop.f32.mrb[0].mxu0
    %v2484 = vadd.f32 %v2280, %v2483
    %2485 = vmatprep.mubr.bf16.mxu0 %v2210
    %2486 = vmatmul.mubr.bf16.gmra.mrb[0].mxu0 %v2209
    %v2487 = vpop.f32.mrb[0].mxu0
    %v2488 = vadd.f32 %v2276, %v2487
    %v2489 = vpop.f32.mrb[0].mxu0
    %v2490 = vadd.f32 %v2280, %v2489
    %v2491 = vpop.f32.mrb[0].mxu0
    %v2492 = vadd.f32 %v2276, %v2491
    %v2493 = vpop.f32.mrb[0].mxu0
    %v2494 = vadd.f32 %v2280, %v2493
    %2495 = vmatprep.mubr.bf16.mxu0 %v2212
    %2496 = vmatmul.mubr.bf16.gmra.mrb[0].mxu0 %v2211
    %v2497 = vpop.f32.mrb[0].mxu0
    %v2498 = vadd.f32 %v2276, %v2497
    %v2499 = vpop.f32.mrb[0].mxu0
    %v2500 = vadd.f32 %v2280, %v2499
    %v2501 = vpop.f32.mrb[0].mxu0
    %v2502 = vadd.f32 %v2276, %v2501
    %v2503 = vpop.f32.mrb[0].mxu0
    %v2504 = vadd.f32 %v2280, %v2503
    %2505 = vmatprep.mubr.bf16.mxu0 %v2214
    %2506 = vmatmul.mubr.bf16.gmra.mrb[0].mxu0 %v2213
    %v2507 = vpop.f32.mrb[0].mxu0
    %v2508 = vadd.f32 %v2276, %v2507
    %v2509 = vpop.f32.mrb[0].mxu0
    %v2510 = vadd.f32 %v2280, %v2509
    %v2511 = vpop.f32.mrb[0].mxu0
    %v2512 = vadd.f32 %v2276, %v2511
    %v2513 = vpop.f32.mrb[0].mxu0
    %v2514 = vadd.f32 %v2280, %v2513
    %2515 = vmatprep.mubr.bf16.mxu0 %v2216
    %2516 = vmatmul.mubr.bf16.gmra.mrb[0].mxu0 %v2215
    %v2517 = vpop.f32.mrb[0].mxu0
    %v2518 = vadd.f32 %v2276, %v2517
    %v2519 = vpop.f32.mrb[0].mxu0
    %v2520 = vadd.f32 %v2280, %v2519
    %v2521 = vpop.f32.mrb[0].mxu0
    %v2522 = vadd.f32 %v2276, %v2521
    %v2523 = vpop.f32.mrb[0].mxu0
    %v2524 = vadd.f32 %v2280, %v2523
    %2525 = vmatprep.mubr.bf16.mxu0 %v2218
    %2526 = vmatmul.mubr.bf16.gmra.mrb[0].mxu0 %v2217
    %v2527 = vpop.f32.mrb[0].mxu0
    %v2528 = vadd.f32 %v2276, %v2527
    %v2529 = vpop.f32.mrb[0].mxu0
    %v2530 = vadd.f32 %v2280, %v2529
    %v2531 = vpop.f32.mrb[0].mxu0
    %v2532 = vadd.f32 %v2276, %v2531
    %v2533 = vpop.f32.mrb[0].mxu0
    %v2534 = vadd.f32 %v2280, %v2533
    %2535 = vmatprep.mubr.bf16.mxu0 %v2220
    %2536 = vmatmul.mubr.bf16.gmra.mrb[0].mxu0 %v2219
    %v2537 = vpop.f32.mrb[0].mxu0
    %v2538 = vadd.f32 %v2276, %v2537
    %v2539 = vpop.f32.mrb[0].mxu0
    %v2540 = vadd.f32 %v2280, %v2539
    %v2541 = vpop.f32.mrb[0].mxu0
    %v2542 = vadd.f32 %v2276, %v2541
    %v2543 = vpop.f32.mrb[0].mxu0
    %v2544 = vadd.f32 %v2280, %v2543
    %2545 = vmatprep.mubr.bf16.mxu0 %v2222
    %2546 = vmatmul.mubr.bf16.gmra.mrb[0].mxu0 %v2221
    %v2547 = vpop.f32.mrb[0].mxu0
    %v2548 = vadd.f32 %v2276, %v2547
    %v2549 = vpop.f32.mrb[0].mxu0
    %v2550 = vadd.f32 %v2280, %v2549
    %v2551 = vpop.f32.mrb[0].mxu0
    %v2552 = vadd.f32 %v2276, %v2551
    %v2553 = vpop.f32.mrb[0].mxu0
    %v2554 = vadd.f32 %v2280, %v2553
    %2555 = vmatprep.mubr.bf16.mxu0 %v2224
    %2556 = vmatmul.mubr.bf16.gmra.mrb[0].mxu0 %v2223
    %v2557 = vpop.f32.mrb[0].mxu0
    %v2558 = vadd.f32 %v2276, %v2557
    %v2559 = vpop.f32.mrb[0].mxu0
    %v2560 = vadd.f32 %v2280, %v2559
    %v2561 = vpop.f32.mrb[0].mxu0
    %v2562 = vadd.f32 %v2276, %v2561
    %v2563 = vpop.f32.mrb[0].mxu0
    %v2564 = vadd.f32 %v2280, %v2563
    %2565 = vmatprep.mubr.bf16.mxu0 %v2226
    %2566 = vmatmul.mubr.bf16.gmra.mrb[0].mxu0 %v2225
    %v2567 = vpop.f32.mrb[0].mxu0
    %v2568 = vadd.f32 %v2276, %v2567
    %v2569 = vpop.f32.mrb[0].mxu0
    %v2570 = vadd.f32 %v2280, %v2569
    %v2571 = vpop.f32.mrb[0].mxu0
    %v2572 = vadd.f32 %v2276, %v2571
    %v2573 = vpop.f32.mrb[0].mxu0
    %v2574 = vadd.f32 %v2280, %v2573
    %2575 = vmatprep.mubr.bf16.mxu0 %v2228
    %2576 = vmatmul.mubr.bf16.gmra.mrb[0].mxu0 %v2227
    %v2577 = vpop.f32.mrb[0].mxu0
    %v2578 = vadd.f32 %v2276, %v2577
    %v2579 = vpop.f32.mrb[0].mxu0
    %v2580 = vadd.f32 %v2280, %v2579
    %v2581 = vpop.f32.mrb[0].mxu0
    %v2582 = vadd.f32 %v2276, %v2581
    %v2583 = vpop.f32.mrb[0].mxu0
    %v2584 = vadd.f32 %v2280, %v2583
    %2585 = vmatprep.mubr.bf16.mxu0 %v2230
    %2586 = vmatmul.mubr.bf16.gmra.mrb[0].mxu0 %v2229
    %v2587 = vpop.f32.mrb[0].mxu0
    %v2588 = vadd.f32 %v2276, %v2587
    %v2589 = vpop.f32.mrb[0].mxu0
    %v2590 = vadd.f32 %v2280, %v2589
    %v2591 = vpop.f32.mrb[0].mxu0
    %v2592 = vadd.f32 %v2276, %v2591
    %v2593 = vpop.f32.mrb[0].mxu0
    %v2594 = vadd.f32 %v2280, %v2593
    %2595 = vmatprep.mubr.bf16.mxu0 %v2232
    %2596 = vmatmul.mubr.bf16.gmra.mrb[0].mxu0 %v2231
    %v2597 = vpop.f32.mrb[0].mxu0
    %v2598 = vadd.f32 %v2276, %v2597
    %v2599 = vpop.f32.mrb[0].mxu0
    %v2600 = vadd.f32 %v2280, %v2599
    %v2601 = vpop.f32.mrb[0].mxu0
    %v2602 = vadd.f32 %v2276, %v2601
    %v2603 = vpop.f32.mrb[0].mxu0
    %v2604 = vadd.f32 %v2280, %v2603
    %2605 = vmatprep.mubr.bf16.mxu0 %v2234
    %2606 = vmatmul.mubr.bf16.gmra.mrb[0].mxu0 %v2233
    %v2607 = vpop.f32.mrb[0].mxu0
    %v2608 = vadd.f32 %v2276, %v2607
    %v2609 = vpop.f32.mrb[0].mxu0
    %v2610 = vadd.f32 %v2280, %v2609
    %v2611 = vpop.f32.mrb[0].mxu0
    %v2612 = vadd.f32 %v2276, %v2611
    %v2613 = vpop.f32.mrb[0].mxu0
    %v2614 = vadd.f32 %v2280, %v2613
    %2615 = vmatprep.mubr.bf16.mxu0 %v2236
    %2616 = vmatmul.mubr.bf16.gmra.mrb[0].mxu0 %v2235
    %v2617 = vpop.f32.mrb[0].mxu0
    %v2618 = vadd.f32 %v2276, %v2617
    %v2619 = vpop.f32.mrb[0].mxu0
    %v2620 = vadd.f32 %v2280, %v2619
    %v2621 = vpop.f32.mrb[0].mxu0
    %v2622 = vadd.f32 %v2276, %v2621
    %v2623 = vpop.f32.mrb[0].mxu0
    %v2624 = vadd.f32 %v2280, %v2623
    %2625 = vmatprep.mubr.bf16.mxu0 %v2238
    %2626 = vmatmul.mubr.bf16.gmra.mrb[0].mxu0 %v2237
    %v2627 = vpop.f32.mrb[0].mxu0
    %v2628 = vadd.f32 %v2276, %v2627
    %v2629 = vpop.f32.mrb[0].mxu0
    %v2630 = vadd.f32 %v2280, %v2629
    %v2631 = vpop.f32.mrb[0].mxu0
    %v2632 = vadd.f32 %v2276, %v2631
    %v2633 = vpop.f32.mrb[0].mxu0
    %v2634 = vadd.f32 %v2280, %v2633
    %2635 = vdwg.mxu0
    %v2636 = vmax.f32 %v2478, 0.0
    %v2637 = vmax.f32 %v2480, 0.0
    %v2638 = vmax.f32 %v2482, 0.0
    %v2639 = vmax.f32 %v2484, 0.0
    %v2640 = vmax.f32 %v2488, 0.0
    %v2641 = vmax.f32 %v2490, 0.0
    %v2642 = vmax.f32 %v2492, 0.0
    %v2643 = vmax.f32 %v2494, 0.0
    %v2644 = vmax.f32 %v2498, 0.0
    %v2645 = vmax.f32 %v2500, 0.0
    %v2646 = vmax.f32 %v2502, 0.0
    %v2647 = vmax.f32 %v2504, 0.0
    %v2648 = vmax.f32 %v2508, 0.0
    %v2649 = vmax.f32 %v2510, 0.0
    %v2650 = vmax.f32 %v2512, 0.0
    %v2651 = vmax.f32 %v2514, 0.0
    %v2652 = vmax.f32 %v2518, 0.0
    %v2653 = vmax.f32 %v2520, 0.0
    %v2654 = vmax.f32 %v2522, 0.0
    %v2655 = vmax.f32 %v2524, 0.0
    %v2656 = vmax.f32 %v2528, 0.0
    %v2657 = vmax.f32 %v2530, 0.0
    %v2658 = vmax.f32 %v2532, 0.0
    %v2659 = vmax.f32 %v2534, 0.0
    %v2660 = vmax.f32 %v2538, 0.0
    %v2661 = vmax.f32 %v2540, 0.0
    %v2662 = vmax.f32 %v2542, 0.0
    %v2663 = vmax.f32 %v2544, 0.0
    %v2664 = vmax.f32 %v2548, 0.0
    %v2665 = vmax.f32 %v2550, 0.0
    %v2666 = vmax.f32 %v2552, 0.0
    %v2667 = vmax.f32 %v2554, 0.0
    %v2668 = vmax.f32 %v2558, 0.0
    %v2669 = vmax.f32 %v2560, 0.0
    %v2670 = vmax.f32 %v2562, 0.0
    %v2671 = vmax.f32 %v2564, 0.0
    %v2672 = vmax.f32 %v2568, 0.0
    %v2673 = vmax.f32 %v2570, 0.0
    %v2674 = vmax.f32 %v2572, 0.0
    %v2675 = vmax.f32 %v2574, 0.0
    %v2676 = vmax.f32 %v2578, 0.0
    %v2677 = vmax.f32 %v2580, 0.0
    %v2678 = vmax.f32 %v2582, 0.0
    %v2679 = vmax.f32 %v2584, 0.0
    %v2680 = vmax.f32 %v2588, 0.0
    %v2681 = vmax.f32 %v2590, 0.0
    %v2682 = vmax.f32 %v2592, 0.0
    %v2683 = vmax.f32 %v2594, 0.0
    %v2684 = vmax.f32 %v2598, 0.0
    %v2685 = vmax.f32 %v2600, 0.0
    %v2686 = vmax.f32 %v2602, 0.0
    %v2687 = vmax.f32 %v2604, 0.0
    %v2688 = vmax.f32 %v2608, 0.0
    %v2689 = vmax.f32 %v2610, 0.0
    %v2690 = vmax.f32 %v2612, 0.0
    %v2691 = vmax.f32 %v2614, 0.0
    %v2692 = vmax.f32 %v2618, 0.0
    %v2693 = vmax.f32 %v2620, 0.0
    %v2694 = vmax.f32 %v2622, 0.0
    %v2695 = vmax.f32 %v2624, 0.0
    %v2696 = vmax.f32 %v2628, 0.0
    %v2697 = vmax.f32 %v2630, 0.0
    %v2698 = vmax.f32 %v2632, 0.0
    %v2699 = vmax.f32 %v2634, 0.0
    %v2700 = vpack.c.bf16 %v2638, %v2636
    %v2701 = vpack.c.bf16 %v2639, %v2637
    %v2702 = vpack.c.bf16 %v2642, %v2640
    %v2703 = vpack.c.bf16 %v2643, %v2641
    %v2704 = vpack.c.bf16 %v2646, %v2644
    %v2705 = vpack.c.bf16 %v2647, %v2645
    %v2706 = vpack.c.bf16 %v2650, %v2648
    %v2707 = vpack.c.bf16 %v2651, %v2649
    %v2708 = vpack.c.bf16 %v2654, %v2652
    %v2709 = vpack.c.bf16 %v2655, %v2653
    %v2710 = vpack.c.bf16 %v2658, %v2656
    %v2711 = vpack.c.bf16 %v2659, %v2657
    %v2712 = vpack.c.bf16 %v2662, %v2660
    %v2713 = vpack.c.bf16 %v2663, %v2661
    %v2714 = vpack.c.bf16 %v2666, %v2664
    %v2715 = vpack.c.bf16 %v2667, %v2665
    %v2716 = vpack.c.bf16 %v2670, %v2668
    %v2717 = vpack.c.bf16 %v2671, %v2669
    %v2718 = vpack.c.bf16 %v2674, %v2672
    %v2719 = vpack.c.bf16 %v2675, %v2673
    %v2720 = vpack.c.bf16 %v2678, %v2676
    %v2721 = vpack.c.bf16 %v2679, %v2677
    %v2722 = vpack.c.bf16 %v2682, %v2680
    %v2723 = vpack.c.bf16 %v2683, %v2681
    %v2724 = vpack.c.bf16 %v2686, %v2684
    %v2725 = vpack.c.bf16 %v2687, %v2685
    %v2726 = vpack.c.bf16 %v2690, %v2688
    %v2727 = vpack.c.bf16 %v2691, %v2689
    %v2728 = vpack.c.bf16 %v2694, %v2692
    %v2729 = vpack.c.bf16 %v2695, %v2693
    %v2730 = vpack.c.bf16 %v2698, %v2696
    %v2731 = vpack.c.bf16 %v2699, %v2697
    %v2732 = vld [vmem:[%s5] sm:$0xff]
    %v2733 = vld [vmem:[%s5 + $0x8] sm:$0xff]
    %v2734 = vld [vmem:[%s5 + $0x10] sm:$0xff]
    %v2735 = vld [vmem:[%s5 + $0x18] sm:$0xff]
    %v2736 = vld [vmem:[%s5 + $0x20] sm:$0xff]
    %v2737 = vld [vmem:[%s5 + $0x28] sm:$0xff]
    %v2738 = vld [vmem:[%s5 + $0x30] sm:$0xff]
    %v2739 = vld [vmem:[%s5 + $0x38] sm:$0xff]
    %v2740 = vld [vmem:[%s5 + $0x40] sm:$0xff]
    %v2741 = vld [vmem:[%s5 + $0x48] sm:$0xff]
    %v2742 = vld [vmem:[%s5 + $0x50] sm:$0xff]
    %v2743 = vld [vmem:[%s5 + $0x58] sm:$0xff]
    %v2744 = vld [vmem:[%s5 + $0x60] sm:$0xff]
    %v2745 = vld [vmem:[%s5 + $0x68] sm:$0xff]
    %v2746 = vld [vmem:[%s5 + $0x70] sm:$0xff]
    %v2747 = vld [vmem:[%s5 + $0x78] sm:$0xff]
    %v2748 = vld [vmem:[%s5 + $0x80] sm:$0xff]
    %v2749 = vld [vmem:[%s5 + $0x88] sm:$0xff]
    %v2750 = vld [vmem:[%s5 + $0x90] sm:$0xff]
    %v2751 = vld [vmem:[%s5 + $0x98] sm:$0xff]
    %v2752 = vld [vmem:[%s5 + $0xa0] sm:$0xff]
    %v2753 = vld [vmem:[%s5 + $0xa8] sm:$0xff]
    %v2754 = vld [vmem:[%s5 + $0xb0] sm:$0xff]
    %v2755 = vld [vmem:[%s5 + $0xb8] sm:$0xff]
    %v2756 = vld [vmem:[%s5 + $0xc0] sm:$0xff]
    %v2757 = vld [vmem:[%s5 + $0xc8] sm:$0xff]
    %v2758 = vld [vmem:[%s5 + $0xd0] sm:$0xff]
    %v2759 = vld [vmem:[%s5 + $0xd8] sm:$0xff]
    %v2760 = vld [vmem:[%s5 + $0xe0] sm:$0xff]
    %v2761 = vld [vmem:[%s5 + $0xe8] sm:$0xff]
    %v2762 = vld [vmem:[%s5 + $0xf0] sm:$0xff]
    %v2763 = vld [vmem:[%s5 + $0xf8] sm:$0xff]
    %v2764 = vld [vmem:[%s6] sm:$0x3]
    %v2766 = vlaneseq
    %v2767 = vshrl.u32 %v2766, 7
    %v2768 = vsub.s32 0, %v2767
    %v2769 = vrot.slane %v2764, %v2768
    %v2770 = vlaneseq
    %v2771 = vshrl.u32 %v2770, 7
    %v2772 = vsub.s32 1, %v2771
    %v2773 = vrot.slane %v2764, %v2772
    %v2808 = vunpack.c.l.b16 %v2732
    %v2809 = vunpack.c.h.b16 %v2732
    %v2810 = vunpack.c.l.b16 %v2733
    %v2811 = vunpack.c.h.b16 %v2733
    %v2812 = vunpack.c.l.b16 %v2734
    %v2813 = vunpack.c.h.b16 %v2734
    %v2814 = vunpack.c.l.b16 %v2735
    %v2815 = vunpack.c.h.b16 %v2735
    %v2816 = vunpack.c.l.b16 %v2736
    %v2817 = vunpack.c.h.b16 %v2736
    %v2818 = vunpack.c.l.b16 %v2737
    %v2819 = vunpack.c.h.b16 %v2737
    %v2820 = vunpack.c.l.b16 %v2738
    %v2821 = vunpack.c.h.b16 %v2738
    %v2822 = vunpack.c.l.b16 %v2739
    %v2823 = vunpack.c.h.b16 %v2739
    %v2824 = vunpack.c.l.b16 %v2740
    %v2825 = vunpack.c.h.b16 %v2740
    %v2826 = vunpack.c.l.b16 %v2741
    %v2827 = vunpack.c.h.b16 %v2741
    %v2828 = vunpack.c.l.b16 %v2742
    %v2829 = vunpack.c.h.b16 %v2742
    %v2830 = vunpack.c.l.b16 %v2743
    %v2831 = vunpack.c.h.b16 %v2743
    %v2832 = vunpack.c.l.b16 %v2744
    %v2833 = vunpack.c.h.b16 %v2744
    %v2834 = vunpack.c.l.b16 %v2745
    %v2835 = vunpack.c.h.b16 %v2745
    %v2836 = vunpack.c.l.b16 %v2746
    %v2837 = vunpack.c.h.b16 %v2746
    %v2838 = vunpack.c.l.b16 %v2747
    %v2839 = vunpack.c.h.b16 %v2747
    %v2840 = vunpack.c.l.b16 %v2748
    %v2841 = vunpack.c.h.b16 %v2748
    %v2842 = vunpack.c.l.b16 %v2749
    %v2843 = vunpack.c.h.b16 %v2749
    %v2844 = vunpack.c.l.b16 %v2750
    %v2845 = vunpack.c.h.b16 %v2750
    %v2846 = vunpack.c.l.b16 %v2751
    %v2847 = vunpack.c.h.b16 %v2751
    %v2848 = vunpack.c.l.b16 %v2752
    %v2849 = vunpack.c.h.b16 %v2752
    %v2850 = vunpack.c.l.b16 %v2753
    %v2851 = vunpack.c.h.b16 %v2753
    %v2852 = vunpack.c.l.b16 %v2754
    %v2853 = vunpack.c.h.b16 %v2754
    %v2854 = vunpack.c.l.b16 %v2755
    %v2855 = vunpack.c.h.b16 %v2755
    %v2856 = vunpack.c.l.b16 %v2756
    %v2857 = vunpack.c.h.b16 %v2756
    %v2858 = vunpack.c.l.b16 %v2757
    %v2859 = vunpack.c.h.b16 %v2757
    %v2860 = vunpack.c.l.b16 %v2758
    %v2861 = vunpack.c.h.b16 %v2758
    %v2862 = vunpack.c.l.b16 %v2759
    %v2863 = vunpack.c.h.b16 %v2759
    %v2864 = vunpack.c.l.b16 %v2760
    %v2865 = vunpack.c.h.b16 %v2760
    %v2866 = vunpack.c.l.b16 %v2761
    %v2867 = vunpack.c.h.b16 %v2761
    %v2868 = vunpack.c.l.b16 %v2762
    %v2869 = vunpack.c.h.b16 %v2762
    %v2870 = vunpack.c.l.b16 %v2763
    %v2871 = vunpack.c.h.b16 %v2763
    %v2872 = vpack.c.b16 %v2810, %v2808
    %v2873 = vpack.c.b16 %v2811, %v2809
    %v2874 = vpack.c.b16 %v2814, %v2812
    %v2875 = vpack.c.b16 %v2815, %v2813
    %v2876 = vpack.c.b16 %v2818, %v2816
    %v2877 = vpack.c.b16 %v2819, %v2817
    %v2878 = vpack.c.b16 %v2822, %v2820
    %v2879 = vpack.c.b16 %v2823, %v2821
    %v2880 = vpack.c.b16 %v2826, %v2824
    %v2881 = vpack.c.b16 %v2827, %v2825
    %v2882 = vpack.c.b16 %v2830, %v2828
    %v2883 = vpack.c.b16 %v2831, %v2829
    %v2884 = vpack.c.b16 %v2834, %v2832
    %v2885 = vpack.c.b16 %v2835, %v2833
    %v2886 = vpack.c.b16 %v2838, %v2836
    %v2887 = vpack.c.b16 %v2839, %v2837
    %v2888 = vpack.c.b16 %v2842, %v2840
    %v2889 = vpack.c.b16 %v2843, %v2841
    %v2890 = vpack.c.b16 %v2846, %v2844
    %v2891 = vpack.c.b16 %v2847, %v2845
    %v2892 = vpack.c.b16 %v2850, %v2848
    %v2893 = vpack.c.b16 %v2851, %v2849
    %v2894 = vpack.c.b16 %v2854, %v2852
    %v2895 = vpack.c.b16 %v2855, %v2853
    %v2896 = vpack.c.b16 %v2858, %v2856
    %v2897 = vpack.c.b16 %v2859, %v2857
    %v2898 = vpack.c.b16 %v2862, %v2860
    %v2899 = vpack.c.b16 %v2863, %v2861
    %v2900 = vpack.c.b16 %v2866, %v2864
    %v2901 = vpack.c.b16 %v2867, %v2865
    %v2902 = vpack.c.b16 %v2870, %v2868
    %v2903 = vpack.c.b16 %v2871, %v2869
    %2936 = vmatprep.subr.bf16.mxu0 %v2873
    %2937 = vmatpush1.bf16.msra.mxu0 %v2872
    %2938 = vmatprep.subr.bf16.mxu0 %v2875
    %2939 = vmatpush1.bf16.msra.mxu0 %v2874
    %2940 = vmatprep.subr.bf16.mxu0 %v2877
    %2941 = vmatpush1.bf16.msra.mxu0 %v2876
    %2942 = vmatprep.subr.bf16.mxu0 %v2879
    %2943 = vmatpush1.bf16.msra.mxu0 %v2878
    %2944 = vmatprep.subr.bf16.mxu0 %v2881
    %2945 = vmatpush1.bf16.msra.mxu0 %v2880
    %2946 = vmatprep.subr.bf16.mxu0 %v2883
    %2947 = vmatpush1.bf16.msra.mxu0 %v2882
    %2948 = vmatprep.subr.bf16.mxu0 %v2885
    %2949 = vmatpush1.bf16.msra.mxu0 %v2884
    %2950 = vmatprep.subr.bf16.mxu0 %v2887
    %2951 = vmatpush1.bf16.msra.mxu0 %v2886
    %2952 = vmatprep.subr.bf16.mxu0 %v2889
    %2953 = vmatpush1.bf16.msra.mxu0 %v2888
    %2954 = vmatprep.subr.bf16.mxu0 %v2891
    %2955 = vmatpush1.bf16.msra.mxu0 %v2890
    %2956 = vmatprep.subr.bf16.mxu0 %v2893
    %2957 = vmatpush1.bf16.msra.mxu0 %v2892
    %2958 = vmatprep.subr.bf16.mxu0 %v2895
    %2959 = vmatpush1.bf16.msra.mxu0 %v2894
    %2960 = vmatprep.subr.bf16.mxu0 %v2897
    %2961 = vmatpush1.bf16.msra.mxu0 %v2896
    %2962 = vmatprep.subr.bf16.mxu0 %v2899
    %2963 = vmatpush1.bf16.msra.mxu0 %v2898
    %2964 = vmatprep.subr.bf16.mxu0 %v2901
    %2965 = vmatpush1.bf16.msra.mxu0 %v2900
    %2966 = vmatprep.subr.bf16.mxu0 %v2903
    %2967 = vmatpush1.bf16.msra.mxu0 %v2902
    %2968 = vmatprep.mubr.bf16.mxu0 %v2701
    %2969 = vmatmul.mubr.bf16.gmra.mrb[0].mxu0 %v2700
    %v2970 = vpop.f32.mrb[0].mxu0
    %v2971 = vadd.f32 %v2769, %v2970
    %v2972 = vpop.f32.mrb[0].mxu0
    %v2973 = vadd.f32 %v2773, %v2972
    %v2974 = vpop.f32.mrb[0].mxu0
    %v2975 = vadd.f32 %v2769, %v2974
    %v2976 = vpop.f32.mrb[0].mxu0
    %v2977 = vadd.f32 %v2773, %v2976
    %2978 = vmatprep.mubr.bf16.mxu0 %v2703
    %2979 = vmatmul.mubr.bf16.gmra.mrb[0].mxu0 %v2702
    %v2980 = vpop.f32.mrb[0].mxu0
    %v2981 = vadd.f32 %v2769, %v2980
    %v2982 = vpop.f32.mrb[0].mxu0
    %v2983 = vadd.f32 %v2773, %v2982
    %v2984 = vpop.f32.mrb[0].mxu0
    %v2985 = vadd.f32 %v2769, %v2984
    %v2986 = vpop.f32.mrb[0].mxu0
    %v2987 = vadd.f32 %v2773, %v2986
    %2988 = vmatprep.mubr.bf16.mxu0 %v2705
    %2989 = vmatmul.mubr.bf16.gmra.mrb[0].mxu0 %v2704
    %v2990 = vpop.f32.mrb[0].mxu0
    %v2991 = vadd.f32 %v2769, %v2990
    %v2992 = vpop.f32.mrb[0].mxu0
    %v2993 = vadd.f32 %v2773, %v2992
    %v2994 = vpop.f32.mrb[0].mxu0
    %v2995 = vadd.f32 %v2769, %v2994
    %v2996 = vpop.f32.mrb[0].mxu0
    %v2997 = vadd.f32 %v2773, %v2996
    %2998 = vmatprep.mubr.bf16.mxu0 %v2707
    %2999 = vmatmul.mubr.bf16.gmra.mrb[0].mxu0 %v2706
    %v3000 = vpop.f32.mrb[0].mxu0
    %v3001 = vadd.f32 %v2769, %v3000
    %v3002 = vpop.f32.mrb[0].mxu0
    %v3003 = vadd.f32 %v2773, %v3002
    %v3004 = vpop.f32.mrb[0].mxu0
    %v3005 = vadd.f32 %v2769, %v3004
    %v3006 = vpop.f32.mrb[0].mxu0
    %v3007 = vadd.f32 %v2773, %v3006
    %3008 = vmatprep.mubr.bf16.mxu0 %v2709
    %3009 = vmatmul.mubr.bf16.gmra.mrb[0].mxu0 %v2708
    %v3010 = vpop.f32.mrb[0].mxu0
    %v3011 = vadd.f32 %v2769, %v3010
    %v3012 = vpop.f32.mrb[0].mxu0
    %v3013 = vadd.f32 %v2773, %v3012
    %v3014 = vpop.f32.mrb[0].mxu0
    %v3015 = vadd.f32 %v2769, %v3014
    %v3016 = vpop.f32.mrb[0].mxu0
    %v3017 = vadd.f32 %v2773, %v3016
    %3018 = vmatprep.mubr.bf16.mxu0 %v2711
    %3019 = vmatmul.mubr.bf16.gmra.mrb[0].mxu0 %v2710
    %v3020 = vpop.f32.mrb[0].mxu0
    %v3021 = vadd.f32 %v2769, %v3020
    %v3022 = vpop.f32.mrb[0].mxu0
    %v3023 = vadd.f32 %v2773, %v3022
    %v3024 = vpop.f32.mrb[0].mxu0
    %v3025 = vadd.f32 %v2769, %v3024
    %v3026 = vpop.f32.mrb[0].mxu0
    %v3027 = vadd.f32 %v2773, %v3026
    %3028 = vmatprep.mubr.bf16.mxu0 %v2713
    %3029 = vmatmul.mubr.bf16.gmra.mrb[0].mxu0 %v2712
    %v3030 = vpop.f32.mrb[0].mxu0
    %v3031 = vadd.f32 %v2769, %v3030
    %v3032 = vpop.f32.mrb[0].mxu0
    %v3033 = vadd.f32 %v2773, %v3032
    %v3034 = vpop.f32.mrb[0].mxu0
    %v3035 = vadd.f32 %v2769, %v3034
    %v3036 = vpop.f32.mrb[0].mxu0
    %v3037 = vadd.f32 %v2773, %v3036
    %3038 = vmatprep.mubr.bf16.mxu0 %v2715
    %3039 = vmatmul.mubr.bf16.gmra.mrb[0].mxu0 %v2714
    %v3040 = vpop.f32.mrb[0].mxu0
    %v3041 = vadd.f32 %v2769, %v3040
    %v3042 = vpop.f32.mrb[0].mxu0
    %v3043 = vadd.f32 %v2773, %v3042
    %v3044 = vpop.f32.mrb[0].mxu0
    %v3045 = vadd.f32 %v2769, %v3044
    %v3046 = vpop.f32.mrb[0].mxu0
    %v3047 = vadd.f32 %v2773, %v3046
    %3048 = vmatprep.mubr.bf16.mxu0 %v2717
    %3049 = vmatmul.mubr.bf16.gmra.mrb[0].mxu0 %v2716
    %v3050 = vpop.f32.mrb[0].mxu0
    %v3051 = vadd.f32 %v2769, %v3050
    %v3052 = vpop.f32.mrb[0].mxu0
    %v3053 = vadd.f32 %v2773, %v3052
    %v3054 = vpop.f32.mrb[0].mxu0
    %v3055 = vadd.f32 %v2769, %v3054
    %v3056 = vpop.f32.mrb[0].mxu0
    %v3057 = vadd.f32 %v2773, %v3056
    %3058 = vmatprep.mubr.bf16.mxu0 %v2719
    %3059 = vmatmul.mubr.bf16.gmra.mrb[0].mxu0 %v2718
    %v3060 = vpop.f32.mrb[0].mxu0
    %v3061 = vadd.f32 %v2769, %v3060
    %v3062 = vpop.f32.mrb[0].mxu0
    %v3063 = vadd.f32 %v2773, %v3062
    %v3064 = vpop.f32.mrb[0].mxu0
    %v3065 = vadd.f32 %v2769, %v3064
    %v3066 = vpop.f32.mrb[0].mxu0
    %v3067 = vadd.f32 %v2773, %v3066
    %3068 = vmatprep.mubr.bf16.mxu0 %v2721
    %3069 = vmatmul.mubr.bf16.gmra.mrb[0].mxu0 %v2720
    %v3070 = vpop.f32.mrb[0].mxu0
    %v3071 = vadd.f32 %v2769, %v3070
    %v3072 = vpop.f32.mrb[0].mxu0
    %v3073 = vadd.f32 %v2773, %v3072
    %v3074 = vpop.f32.mrb[0].mxu0
    %v3075 = vadd.f32 %v2769, %v3074
    %v3076 = vpop.f32.mrb[0].mxu0
    %v3077 = vadd.f32 %v2773, %v3076
    %3078 = vmatprep.mubr.bf16.mxu0 %v2723
    %3079 = vmatmul.mubr.bf16.gmra.mrb[0].mxu0 %v2722
    %v3080 = vpop.f32.mrb[0].mxu0
    %v3081 = vadd.f32 %v2769, %v3080
    %v3082 = vpop.f32.mrb[0].mxu0
    %v3083 = vadd.f32 %v2773, %v3082
    %v3084 = vpop.f32.mrb[0].mxu0
    %v3085 = vadd.f32 %v2769, %v3084
    %v3086 = vpop.f32.mrb[0].mxu0
    %v3087 = vadd.f32 %v2773, %v3086
    %3088 = vmatprep.mubr.bf16.mxu0 %v2725
    %3089 = vmatmul.mubr.bf16.gmra.mrb[0].mxu0 %v2724
    %v3090 = vpop.f32.mrb[0].mxu0
    %v3091 = vadd.f32 %v2769, %v3090
    %v3092 = vpop.f32.mrb[0].mxu0
    %v3093 = vadd.f32 %v2773, %v3092
    %v3094 = vpop.f32.mrb[0].mxu0
    %v3095 = vadd.f32 %v2769, %v3094
    %v3096 = vpop.f32.mrb[0].mxu0
    %v3097 = vadd.f32 %v2773, %v3096
    %3098 = vmatprep.mubr.bf16.mxu0 %v2727
    %3099 = vmatmul.mubr.bf16.gmra.mrb[0].mxu0 %v2726
    %v3100 = vpop.f32.mrb[0].mxu0
    %v3101 = vadd.f32 %v2769, %v3100
    %v3102 = vpop.f32.mrb[0].mxu0
    %v3103 = vadd.f32 %v2773, %v3102
    %v3104 = vpop.f32.mrb[0].mxu0
    %v3105 = vadd.f32 %v2769, %v3104
    %v3106 = vpop.f32.mrb[0].mxu0
    %v3107 = vadd.f32 %v2773, %v3106
    %3108 = vmatprep.mubr.bf16.mxu0 %v2729
    %3109 = vmatmul.mubr.bf16.gmra.mrb[0].mxu0 %v2728
    %v3110 = vpop.f32.mrb[0].mxu0
    %v3111 = vadd.f32 %v2769, %v3110
    %v3112 = vpop.f32.mrb[0].mxu0
    %v3113 = vadd.f32 %v2773, %v3112
    %v3114 = vpop.f32.mrb[0].mxu0
    %v3115 = vadd.f32 %v2769, %v3114
    %v3116 = vpop.f32.mrb[0].mxu0
    %v3117 = vadd.f32 %v2773, %v3116
    %3118 = vmatprep.mubr.bf16.mxu0 %v2731
    %3119 = vmatmul.mubr.bf16.gmra.mrb[0].mxu0 %v2730
    %v3120 = vpop.f32.mrb[0].mxu0
    %v3121 = vadd.f32 %v2769, %v3120
    %v3122 = vpop.f32.mrb[0].mxu0
    %v3123 = vadd.f32 %v2773, %v3122
    %v3124 = vpop.f32.mrb[0].mxu0
    %v3125 = vadd.f32 %v2769, %v3124
    %v3126 = vpop.f32.mrb[0].mxu0
    %v3127 = vadd.f32 %v2773, %v3126
    %3128 = vdwg.mxu0
    %v3129 = vmax.f32 %v2971, 0.0
    %v3130 = vmax.f32 %v2973, 0.0
    %v3131 = vmax.f32 %v2975, 0.0
    %v3132 = vmax.f32 %v2977, 0.0
    %v3133 = vmax.f32 %v2981, 0.0
    %v3134 = vmax.f32 %v2983, 0.0
    %v3135 = vmax.f32 %v2985, 0.0
    %v3136 = vmax.f32 %v2987, 0.0
    %v3137 = vmax.f32 %v2991, 0.0
    %v3138 = vmax.f32 %v2993, 0.0
    %v3139 = vmax.f32 %v2995, 0.0
    %v3140 = vmax.f32 %v2997, 0.0
    %v3141 = vmax.f32 %v3001, 0.0
    %v3142 = vmax.f32 %v3003, 0.0
    %v3143 = vmax.f32 %v3005, 0.0
    %v3144 = vmax.f32 %v3007, 0.0
    %v3145 = vmax.f32 %v3011, 0.0
    %v3146 = vmax.f32 %v3013, 0.0
    %v3147 = vmax.f32 %v3015, 0.0
    %v3148 = vmax.f32 %v3017, 0.0
    %v3149 = vmax.f32 %v3021, 0.0
    %v3150 = vmax.f32 %v3023, 0.0
    %v3151 = vmax.f32 %v3025, 0.0
    %v3152 = vmax.f32 %v3027, 0.0
    %v3153 = vmax.f32 %v3031, 0.0
    %v3154 = vmax.f32 %v3033, 0.0
    %v3155 = vmax.f32 %v3035, 0.0
    %v3156 = vmax.f32 %v3037, 0.0
    %v3157 = vmax.f32 %v3041, 0.0
    %v3158 = vmax.f32 %v3043, 0.0
    %v3159 = vmax.f32 %v3045, 0.0
    %v3160 = vmax.f32 %v3047, 0.0
    %v3161 = vmax.f32 %v3051, 0.0
    %v3162 = vmax.f32 %v3053, 0.0
    %v3163 = vmax.f32 %v3055, 0.0
    %v3164 = vmax.f32 %v3057, 0.0
    %v3165 = vmax.f32 %v3061, 0.0
    %v3166 = vmax.f32 %v3063, 0.0
    %v3167 = vmax.f32 %v3065, 0.0
    %v3168 = vmax.f32 %v3067, 0.0
    %v3169 = vmax.f32 %v3071, 0.0
    %v3170 = vmax.f32 %v3073, 0.0
    %v3171 = vmax.f32 %v3075, 0.0
    %v3172 = vmax.f32 %v3077, 0.0
    %v3173 = vmax.f32 %v3081, 0.0
    %v3174 = vmax.f32 %v3083, 0.0
    %v3175 = vmax.f32 %v3085, 0.0
    %v3176 = vmax.f32 %v3087, 0.0
    %v3177 = vmax.f32 %v3091, 0.0
    %v3178 = vmax.f32 %v3093, 0.0
    %v3179 = vmax.f32 %v3095, 0.0
    %v3180 = vmax.f32 %v3097, 0.0
    %v3181 = vmax.f32 %v3101, 0.0
    %v3182 = vmax.f32 %v3103, 0.0
    %v3183 = vmax.f32 %v3105, 0.0
    %v3184 = vmax.f32 %v3107, 0.0
    %v3185 = vmax.f32 %v3111, 0.0
    %v3186 = vmax.f32 %v3113, 0.0
    %v3187 = vmax.f32 %v3115, 0.0
    %v3188 = vmax.f32 %v3117, 0.0
    %v3189 = vmax.f32 %v3121, 0.0
    %v3190 = vmax.f32 %v3123, 0.0
    %v3191 = vmax.f32 %v3125, 0.0
    %v3192 = vmax.f32 %v3127, 0.0
    %v3193 = vpack.c.bf16 %v3131, %v3129
    %v3194 = vpack.c.bf16 %v3132, %v3130
    %v3195 = vpack.c.bf16 %v3135, %v3133
    %v3196 = vpack.c.bf16 %v3136, %v3134
    %v3197 = vpack.c.bf16 %v3139, %v3137
    %v3198 = vpack.c.bf16 %v3140, %v3138
    %v3199 = vpack.c.bf16 %v3143, %v3141
    %v3200 = vpack.c.bf16 %v3144, %v3142
    %v3201 = vpack.c.bf16 %v3147, %v3145
    %v3202 = vpack.c.bf16 %v3148, %v3146
    %v3203 = vpack.c.bf16 %v3151, %v3149
    %v3204 = vpack.c.bf16 %v3152, %v3150
    %v3205 = vpack.c.bf16 %v3155, %v3153
    %v3206 = vpack.c.bf16 %v3156, %v3154
    %v3207 = vpack.c.bf16 %v3159, %v3157
    %v3208 = vpack.c.bf16 %v3160, %v3158
    %v3209 = vpack.c.bf16 %v3163, %v3161
    %v3210 = vpack.c.bf16 %v3164, %v3162
    %v3211 = vpack.c.bf16 %v3167, %v3165
    %v3212 = vpack.c.bf16 %v3168, %v3166
    %v3213 = vpack.c.bf16 %v3171, %v3169
    %v3214 = vpack.c.bf16 %v3172, %v3170
    %v3215 = vpack.c.bf16 %v3175, %v3173
    %v3216 = vpack.c.bf16 %v3176, %v3174
    %v3217 = vpack.c.bf16 %v3179, %v3177
    %v3218 = vpack.c.bf16 %v3180, %v3178
    %v3219 = vpack.c.bf16 %v3183, %v3181
    %v3220 = vpack.c.bf16 %v3184, %v3182
    %v3221 = vpack.c.bf16 %v3187, %v3185
    %v3222 = vpack.c.bf16 %v3188, %v3186
    %v3223 = vpack.c.bf16 %v3191, %v3189
    %v3224 = vpack.c.bf16 %v3192, %v3190
    %v3225 = vld [vmem:[%s7] sm:$0xf]
    %v3226 = vld [vmem:[%s7 + $0x4] sm:$0xf]
    %v3227 = vld [vmem:[%s7 + $0x8] sm:$0xf]
    %v3228 = vld [vmem:[%s7 + $0xc] sm:$0xf]
    %v3229 = vld [vmem:[%s7 + $0x10] sm:$0xf]
    %v3230 = vld [vmem:[%s7 + $0x14] sm:$0xf]
    %v3231 = vld [vmem:[%s7 + $0x18] sm:$0xf]
    %v3232 = vld [vmem:[%s7 + $0x1c] sm:$0xf]
    %v3233 = vld [vmem:[%s7 + $0x20] sm:$0xf]
    %v3234 = vld [vmem:[%s7 + $0x24] sm:$0xf]
    %v3235 = vld [vmem:[%s7 + $0x28] sm:$0xf]
    %v3236 = vld [vmem:[%s7 + $0x2c] sm:$0xf]
    %v3237 = vld [vmem:[%s7 + $0x30] sm:$0xf]
    %v3238 = vld [vmem:[%s7 + $0x34] sm:$0xf]
    %v3239 = vld [vmem:[%s7 + $0x38] sm:$0xf]
    %v3240 = vld [vmem:[%s7 + $0x3c] sm:$0xf]
    %v3241 = vld [vmem:[%s7 + $0x40] sm:$0xf]
    %v3242 = vld [vmem:[%s7 + $0x44] sm:$0xf]
    %v3243 = vld [vmem:[%s7 + $0x48] sm:$0xf]
    %v3244 = vld [vmem:[%s7 + $0x4c] sm:$0xf]
    %v3245 = vld [vmem:[%s7 + $0x50] sm:$0xf]
    %v3246 = vld [vmem:[%s7 + $0x54] sm:$0xf]
    %v3247 = vld [vmem:[%s7 + $0x58] sm:$0xf]
    %v3248 = vld [vmem:[%s7 + $0x5c] sm:$0xf]
    %v3249 = vld [vmem:[%s7 + $0x60] sm:$0xf]
    %v3250 = vld [vmem:[%s7 + $0x64] sm:$0xf]
    %v3251 = vld [vmem:[%s7 + $0x68] sm:$0xf]
    %v3252 = vld [vmem:[%s7 + $0x6c] sm:$0xf]
    %v3253 = vld [vmem:[%s7 + $0x70] sm:$0xf]
    %v3254 = vld [vmem:[%s7 + $0x74] sm:$0xf]
    %v3255 = vld [vmem:[%s7 + $0x78] sm:$0xf]
    %v3256 = vld [vmem:[%s7 + $0x7c] sm:$0xf]
    %v3257 = vld [vmem:[%s8] sm:$0x1]
    %v3259 = vlaneseq
    %v3260 = vshrl.u32 %v3259, 7
    %v3261 = vsub.s32 0, %v3260
    %v3262 = vrot.slane %v3257, %v3261
    %v3296 = vunpack.c.l.b16 %v3225
    %v3297 = vunpack.c.l.b16 %v3226
    %v3298 = vunpack.c.l.b16 %v3227
    %v3299 = vunpack.c.l.b16 %v3228
    %v3300 = vunpack.c.l.b16 %v3229
    %v3301 = vunpack.c.l.b16 %v3230
    %v3302 = vunpack.c.l.b16 %v3231
    %v3303 = vunpack.c.l.b16 %v3232
    %v3304 = vunpack.c.l.b16 %v3233
    %v3305 = vunpack.c.l.b16 %v3234
    %v3306 = vunpack.c.l.b16 %v3235
    %v3307 = vunpack.c.l.b16 %v3236
    %v3308 = vunpack.c.l.b16 %v3237
    %v3309 = vunpack.c.l.b16 %v3238
    %v3310 = vunpack.c.l.b16 %v3239
    %v3311 = vunpack.c.l.b16 %v3240
    %v3312 = vunpack.c.l.b16 %v3241
    %v3313 = vunpack.c.l.b16 %v3242
    %v3314 = vunpack.c.l.b16 %v3243
    %v3315 = vunpack.c.l.b16 %v3244
    %v3316 = vunpack.c.l.b16 %v3245
    %v3317 = vunpack.c.l.b16 %v3246
    %v3318 = vunpack.c.l.b16 %v3247
    %v3319 = vunpack.c.l.b16 %v3248
    %v3320 = vunpack.c.l.b16 %v3249
    %v3321 = vunpack.c.l.b16 %v3250
    %v3322 = vunpack.c.l.b16 %v3251
    %v3323 = vunpack.c.l.b16 %v3252
    %v3324 = vunpack.c.l.b16 %v3253
    %v3325 = vunpack.c.l.b16 %v3254
    %v3326 = vunpack.c.l.b16 %v3255
    %v3327 = vunpack.c.l.b16 %v3256
    %v3328 = vpack.c.b16 %v3297, %v3296
    %v3329 = vpack.c.b16 %v3299, %v3298
    %v3330 = vpack.c.b16 %v3301, %v3300
    %v3331 = vpack.c.b16 %v3303, %v3302
    %v3332 = vpack.c.b16 %v3305, %v3304
    %v3333 = vpack.c.b16 %v3307, %v3306
    %v3334 = vpack.c.b16 %v3309, %v3308
    %v3335 = vpack.c.b16 %v3311, %v3310
    %v3336 = vpack.c.b16 %v3313, %v3312
    %v3337 = vpack.c.b16 %v3315, %v3314
    %v3338 = vpack.c.b16 %v3317, %v3316
    %v3339 = vpack.c.b16 %v3319, %v3318
    %v3340 = vpack.c.b16 %v3321, %v3320
    %v3341 = vpack.c.b16 %v3323, %v3322
    %v3342 = vpack.c.b16 %v3325, %v3324
    %v3343 = vpack.c.b16 %v3327, %v3326
    %3360 = vmatprep.subr.bf16.mxu0 0
    %3361 = vmatpush1.bf16.msra.mxu0 %v3328
    %3362 = vmatprep.subr.bf16.mxu0 0
    %3363 = vmatpush1.bf16.msra.mxu0 %v3329
    %3364 = vmatprep.subr.bf16.mxu0 0
    %3365 = vmatpush1.bf16.msra.mxu0 %v3330
    %3366 = vmatprep.subr.bf16.mxu0 0
    %3367 = vmatpush1.bf16.msra.mxu0 %v3331
    %3368 = vmatprep.subr.bf16.mxu0 0
    %3369 = vmatpush1.bf16.msra.mxu0 %v3332
    %3370 = vmatprep.subr.bf16.mxu0 0
    %3371 = vmatpush1.bf16.msra.mxu0 %v3333
    %3372 = vmatprep.subr.bf16.mxu0 0
    %3373 = vmatpush1.bf16.msra.mxu0 %v3334
    %3374 = vmatprep.subr.bf16.mxu0 0
    %3375 = vmatpush1.bf16.msra.mxu0 %v3335
    %3376 = vmatprep.subr.bf16.mxu0 0
    %3377 = vmatpush1.bf16.msra.mxu0 %v3336
    %3378 = vmatprep.subr.bf16.mxu0 0
    %3379 = vmatpush1.bf16.msra.mxu0 %v3337
    %3380 = vmatprep.subr.bf16.mxu0 0
    %3381 = vmatpush1.bf16.msra.mxu0 %v3338
    %3382 = vmatprep.subr.bf16.mxu0 0
    %3383 = vmatpush1.bf16.msra.mxu0 %v3339
    %3384 = vmatprep.subr.bf16.mxu0 0
    %3385 = vmatpush1.bf16.msra.mxu0 %v3340
    %3386 = vmatprep.subr.bf16.mxu0 0
    %3387 = vmatpush1.bf16.msra.mxu0 %v3341
    %3388 = vmatprep.subr.bf16.mxu0 0
    %3389 = vmatpush1.bf16.msra.mxu0 %v3342
    %3390 = vmatprep.subr.bf16.mxu0 0
    %3391 = vmatpush1.bf16.msra.mxu0 %v3343
    %3392 = vmatprep.mubr.bf16.mxu0 %v3194
    %3393 = vmatmul.mubr.bf16.gmra.mrb[0].mxu0 %v3193
    %v3394 = vpop.f32.mrb[0].mxu0
    %v3395 = vadd.f32 %v3262, %v3394
    %v3396 = vpop.f32.mrb[0].mxu0
    %v3397 = vpop.f32.mrb[0].mxu0
    %v3398 = vadd.f32 %v3262, %v3397
    %v3399 = vpop.f32.mrb[0].mxu0
    %3400 = vmatprep.mubr.bf16.mxu0 %v3196
    %3401 = vmatmul.mubr.bf16.gmra.mrb[0].mxu0 %v3195
    %v3402 = vpop.f32.mrb[0].mxu0
    %v3403 = vadd.f32 %v3262, %v3402
    %v3404 = vpop.f32.mrb[0].mxu0
    %v3405 = vpop.f32.mrb[0].mxu0
    %v3406 = vadd.f32 %v3262, %v3405
    %v3407 = vpop.f32.mrb[0].mxu0
    %3408 = vmatprep.mubr.bf16.mxu0 %v3198
    %3409 = vmatmul.mubr.bf16.gmra.mrb[0].mxu0 %v3197
    %v3410 = vpop.f32.mrb[0].mxu0
    %v3411 = vadd.f32 %v3262, %v3410
    %v3412 = vpop.f32.mrb[0].mxu0
    %v3413 = vpop.f32.mrb[0].mxu0
    %v3414 = vadd.f32 %v3262, %v3413
    %v3415 = vpop.f32.mrb[0].mxu0
    %3416 = vmatprep.mubr.bf16.mxu0 %v3200
    %3417 = vmatmul.mubr.bf16.gmra.mrb[0].mxu0 %v3199
    %v3418 = vpop.f32.mrb[0].mxu0
    %v3419 = vadd.f32 %v3262, %v3418
    %v3420 = vpop.f32.mrb[0].mxu0
    %v3421 = vpop.f32.mrb[0].mxu0
    %v3422 = vadd.f32 %v3262, %v3421
    %v3423 = vpop.f32.mrb[0].mxu0
    %3424 = vmatprep.mubr.bf16.mxu0 %v3202
    %3425 = vmatmul.mubr.bf16.gmra.mrb[0].mxu0 %v3201
    %v3426 = vpop.f32.mrb[0].mxu0
    %v3427 = vadd.f32 %v3262, %v3426
    %v3428 = vpop.f32.mrb[0].mxu0
    %v3429 = vpop.f32.mrb[0].mxu0
    %v3430 = vadd.f32 %v3262, %v3429
    %v3431 = vpop.f32.mrb[0].mxu0
    %3432 = vmatprep.mubr.bf16.mxu0 %v3204
    %3433 = vmatmul.mubr.bf16.gmra.mrb[0].mxu0 %v3203
    %v3434 = vpop.f32.mrb[0].mxu0
    %v3435 = vadd.f32 %v3262, %v3434
    %v3436 = vpop.f32.mrb[0].mxu0
    %v3437 = vpop.f32.mrb[0].mxu0
    %v3438 = vadd.f32 %v3262, %v3437
    %v3439 = vpop.f32.mrb[0].mxu0
    %3440 = vmatprep.mubr.bf16.mxu0 %v3206
    %3441 = vmatmul.mubr.bf16.gmra.mrb[0].mxu0 %v3205
    %v3442 = vpop.f32.mrb[0].mxu0
    %v3443 = vadd.f32 %v3262, %v3442
    %v3444 = vpop.f32.mrb[0].mxu0
    %v3445 = vpop.f32.mrb[0].mxu0
    %v3446 = vadd.f32 %v3262, %v3445
    %v3447 = vpop.f32.mrb[0].mxu0
    %3448 = vmatprep.mubr.bf16.mxu0 %v3208
    %3449 = vmatmul.mubr.bf16.gmra.mrb[0].mxu0 %v3207
    %v3450 = vpop.f32.mrb[0].mxu0
    %v3451 = vadd.f32 %v3262, %v3450
    %v3452 = vpop.f32.mrb[0].mxu0
    %v3453 = vpop.f32.mrb[0].mxu0
    %v3454 = vadd.f32 %v3262, %v3453
    %v3455 = vpop.f32.mrb[0].mxu0
    %3456 = vmatprep.mubr.bf16.mxu0 %v3210
    %3457 = vmatmul.mubr.bf16.gmra.mrb[0].mxu0 %v3209
    %v3458 = vpop.f32.mrb[0].mxu0
    %v3459 = vadd.f32 %v3262, %v3458
    %v3460 = vpop.f32.mrb[0].mxu0
    %v3461 = vpop.f32.mrb[0].mxu0
    %v3462 = vadd.f32 %v3262, %v3461
    %v3463 = vpop.f32.mrb[0].mxu0
    %3464 = vmatprep.mubr.bf16.mxu0 %v3212
    %3465 = vmatmul.mubr.bf16.gmra.mrb[0].mxu0 %v3211
    %v3466 = vpop.f32.mrb[0].mxu0
    %v3467 = vadd.f32 %v3262, %v3466
    %v3468 = vpop.f32.mrb[0].mxu0
    %v3469 = vpop.f32.mrb[0].mxu0
    %v3470 = vadd.f32 %v3262, %v3469
    %v3471 = vpop.f32.mrb[0].mxu0
    %3472 = vmatprep.mubr.bf16.mxu0 %v3214
    %3473 = vmatmul.mubr.bf16.gmra.mrb[0].mxu0 %v3213
    %v3474 = vpop.f32.mrb[0].mxu0
    %v3475 = vadd.f32 %v3262, %v3474
    %v3476 = vpop.f32.mrb[0].mxu0
    %v3477 = vpop.f32.mrb[0].mxu0
    %v3478 = vadd.f32 %v3262, %v3477
    %v3479 = vpop.f32.mrb[0].mxu0
    %3480 = vmatprep.mubr.bf16.mxu0 %v3216
    %3481 = vmatmul.mubr.bf16.gmra.mrb[0].mxu0 %v3215
    %v3482 = vpop.f32.mrb[0].mxu0
    %v3483 = vadd.f32 %v3262, %v3482
    %v3484 = vpop.f32.mrb[0].mxu0
    %v3485 = vpop.f32.mrb[0].mxu0
    %v3486 = vadd.f32 %v3262, %v3485
    %v3487 = vpop.f32.mrb[0].mxu0
    %3488 = vmatprep.mubr.bf16.mxu0 %v3218
    %3489 = vmatmul.mubr.bf16.gmra.mrb[0].mxu0 %v3217
    %v3490 = vpop.f32.mrb[0].mxu0
    %v3491 = vadd.f32 %v3262, %v3490
    %v3492 = vpop.f32.mrb[0].mxu0
    %v3493 = vpop.f32.mrb[0].mxu0
    %v3494 = vadd.f32 %v3262, %v3493
    %v3495 = vpop.f32.mrb[0].mxu0
    %3496 = vmatprep.mubr.bf16.mxu0 %v3220
    %3497 = vmatmul.mubr.bf16.gmra.mrb[0].mxu0 %v3219
    %v3498 = vpop.f32.mrb[0].mxu0
    %v3499 = vadd.f32 %v3262, %v3498
    %v3500 = vpop.f32.mrb[0].mxu0
    %v3501 = vpop.f32.mrb[0].mxu0
    %v3502 = vadd.f32 %v3262, %v3501
    %v3503 = vpop.f32.mrb[0].mxu0
    %3504 = vmatprep.mubr.bf16.mxu0 %v3222
    %3505 = vmatmul.mubr.bf16.gmra.mrb[0].mxu0 %v3221
    %v3506 = vpop.f32.mrb[0].mxu0
    %v3507 = vadd.f32 %v3262, %v3506
    %v3508 = vpop.f32.mrb[0].mxu0
    %v3509 = vpop.f32.mrb[0].mxu0
    %v3510 = vadd.f32 %v3262, %v3509
    %v3511 = vpop.f32.mrb[0].mxu0
    %3512 = vmatprep.mubr.bf16.mxu0 %v3224
    %3513 = vmatmul.mubr.bf16.gmra.mrb[0].mxu0 %v3223
    %v3514 = vpop.f32.mrb[0].mxu0
    %v3515 = vadd.f32 %v3262, %v3514
    %v3516 = vpop.f32.mrb[0].mxu0
    %v3517 = vpop.f32.mrb[0].mxu0
    %v3518 = vadd.f32 %v3262, %v3517
    %v3519 = vpop.f32.mrb[0].mxu0
    %3520 = vdwg.mxu0
    %v3521 = vmax.f32 %v3395, 0.0
    %v3522 = vmax.f32 %v3398, 0.0
    %v3523 = vmax.f32 %v3403, 0.0
    %v3524 = vmax.f32 %v3406, 0.0
    %v3525 = vmax.f32 %v3411, 0.0
    %v3526 = vmax.f32 %v3414, 0.0
    %v3527 = vmax.f32 %v3419, 0.0
    %v3528 = vmax.f32 %v3422, 0.0
    %v3529 = vmax.f32 %v3427, 0.0
    %v3530 = vmax.f32 %v3430, 0.0
    %v3531 = vmax.f32 %v3435, 0.0
    %v3532 = vmax.f32 %v3438, 0.0
    %v3533 = vmax.f32 %v3443, 0.0
    %v3534 = vmax.f32 %v3446, 0.0
    %v3535 = vmax.f32 %v3451, 0.0
    %v3536 = vmax.f32 %v3454, 0.0
    %v3537 = vmax.f32 %v3459, 0.0
    %v3538 = vmax.f32 %v3462, 0.0
    %v3539 = vmax.f32 %v3467, 0.0
    %v3540 = vmax.f32 %v3470, 0.0
    %v3541 = vmax.f32 %v3475, 0.0
    %v3542 = vmax.f32 %v3478, 0.0
    %v3543 = vmax.f32 %v3483, 0.0
    %v3544 = vmax.f32 %v3486, 0.0
    %v3545 = vmax.f32 %v3491, 0.0
    %v3546 = vmax.f32 %v3494, 0.0
    %v3547 = vmax.f32 %v3499, 0.0
    %v3548 = vmax.f32 %v3502, 0.0
    %v3549 = vmax.f32 %v3507, 0.0
    %v3550 = vmax.f32 %v3510, 0.0
    %v3551 = vmax.f32 %v3515, 0.0
    %v3552 = vmax.f32 %v3518, 0.0
    %v3553 = vpack.c.bf16 %v3522, %v3521
    %v3554 = vpack.c.bf16 %v3524, %v3523
    %v3555 = vpack.c.bf16 %v3526, %v3525
    %v3556 = vpack.c.bf16 %v3528, %v3527
    %v3557 = vpack.c.bf16 %v3530, %v3529
    %v3558 = vpack.c.bf16 %v3532, %v3531
    %v3559 = vpack.c.bf16 %v3534, %v3533
    %v3560 = vpack.c.bf16 %v3536, %v3535
    %v3561 = vpack.c.bf16 %v3538, %v3537
    %v3562 = vpack.c.bf16 %v3540, %v3539
    %v3563 = vpack.c.bf16 %v3542, %v3541
    %v3564 = vpack.c.bf16 %v3544, %v3543
    %v3565 = vpack.c.bf16 %v3546, %v3545
    %v3566 = vpack.c.bf16 %v3548, %v3547
    %v3567 = vpack.c.bf16 %v3550, %v3549
    %v3568 = vpack.c.bf16 %v3552, %v3551
    %v3585 = vunpack.c.l.b16 %v3553
    %v3586 = vunpack.c.h.b16 %v3553
    %v3587 = vunpack.c.l.b16 %v3554
    %v3588 = vunpack.c.h.b16 %v3554
    %v3589 = vunpack.c.l.b16 %v3555
    %v3590 = vunpack.c.h.b16 %v3555
    %v3591 = vunpack.c.l.b16 %v3556
    %v3592 = vunpack.c.h.b16 %v3556
    %v3593 = vunpack.c.l.b16 %v3557
    %v3594 = vunpack.c.h.b16 %v3557
    %v3595 = vunpack.c.l.b16 %v3558
    %v3596 = vunpack.c.h.b16 %v3558
    %v3597 = vunpack.c.l.b16 %v3559
    %v3598 = vunpack.c.h.b16 %v3559
    %v3599 = vunpack.c.l.b16 %v3560
    %v3600 = vunpack.c.h.b16 %v3560
    %v3601 = vunpack.c.l.b16 %v3561
    %v3602 = vunpack.c.h.b16 %v3561
    %v3603 = vunpack.c.l.b16 %v3562
    %v3604 = vunpack.c.h.b16 %v3562
    %v3605 = vunpack.c.l.b16 %v3563
    %v3606 = vunpack.c.h.b16 %v3563
    %v3607 = vunpack.c.l.b16 %v3564
    %v3608 = vunpack.c.h.b16 %v3564
    %v3609 = vunpack.c.l.b16 %v3565
    %v3610 = vunpack.c.h.b16 %v3565
    %v3611 = vunpack.c.l.b16 %v3566
    %v3612 = vunpack.c.h.b16 %v3566
    %v3613 = vunpack.c.l.b16 %v3567
    %v3614 = vunpack.c.h.b16 %v3567
    %v3615 = vunpack.c.l.b16 %v3568
    %v3616 = vunpack.c.h.b16 %v3568
    %v3617 = vpack.c.b16 %v3585, %v3585
    %v3618 = vpack.c.b16 %v3586, %v3586
    %v3619 = vpack.c.b16 %v3587, %v3587
    %v3620 = vpack.c.b16 %v3588, %v3588
    %v3621 = vpack.c.b16 %v3589, %v3589
    %v3622 = vpack.c.b16 %v3590, %v3590
    %v3623 = vpack.c.b16 %v3591, %v3591
    %v3624 = vpack.c.b16 %v3592, %v3592
    %v3625 = vpack.c.b16 %v3593, %v3593
    %v3626 = vpack.c.b16 %v3594, %v3594
    %v3627 = vpack.c.b16 %v3595, %v3595
    %v3628 = vpack.c.b16 %v3596, %v3596
    %v3629 = vpack.c.b16 %v3597, %v3597
    %v3630 = vpack.c.b16 %v3598, %v3598
    %v3631 = vpack.c.b16 %v3599, %v3599
    %v3632 = vpack.c.b16 %v3600, %v3600
    %v3633 = vpack.c.b16 %v3601, %v3601
    %v3634 = vpack.c.b16 %v3602, %v3602
    %v3635 = vpack.c.b16 %v3603, %v3603
    %v3636 = vpack.c.b16 %v3604, %v3604
    %v3637 = vpack.c.b16 %v3605, %v3605
    %v3638 = vpack.c.b16 %v3606, %v3606
    %v3639 = vpack.c.b16 %v3607, %v3607
    %v3640 = vpack.c.b16 %v3608, %v3608
    %v3641 = vpack.c.b16 %v3609, %v3609
    %v3642 = vpack.c.b16 %v3610, %v3610
    %v3643 = vpack.c.b16 %v3611, %v3611
    %v3644 = vpack.c.b16 %v3612, %v3612
    %v3645 = vpack.c.b16 %v3613, %v3613
    %v3646 = vpack.c.b16 %v3614, %v3614
    %v3647 = vpack.c.b16 %v3615, %v3615
    %v3648 = vpack.c.b16 %v3616, %v3616
    %3681 = vst [vmem:[#allocation2] sm:$0xf] %v3617
    %3682 = vst [vmem:[#allocation2 + $0x4] sm:$0xf] %v3618
    %3683 = vst [vmem:[#allocation2 + $0x8] sm:$0xf] %v3619
    %3684 = vst [vmem:[#allocation2 + $0xc] sm:$0xf] %v3620
    %3685 = vst [vmem:[#allocation2 + $0x10] sm:$0xf] %v3621
    %3686 = vst [vmem:[#allocation2 + $0x14] sm:$0xf] %v3622
    %3687 = vst [vmem:[#allocation2 + $0x18] sm:$0xf] %v3623
    %3688 = vst [vmem:[#allocation2 + $0x1c] sm:$0xf] %v3624
    %3689 = vst [vmem:[#allocation2 + $0x20] sm:$0xf] %v3625
    %3690 = vst [vmem:[#allocation2 + $0x24] sm:$0xf] %v3626
    %3691 = vst [vmem:[#allocation2 + $0x28] sm:$0xf] %v3627
    %3692 = vst [vmem:[#allocation2 + $0x2c] sm:$0xf] %v3628
    %3693 = vst [vmem:[#allocation2 + $0x30] sm:$0xf] %v3629
    %3694 = vst [vmem:[#allocation2 + $0x34] sm:$0xf] %v3630
    %3695 = vst [vmem:[#allocation2 + $0x38] sm:$0xf] %v3631
    %3696 = vst [vmem:[#allocation2 + $0x3c] sm:$0xf] %v3632
    %3697 = vst [vmem:[#allocation2 + $0x40] sm:$0xf] %v3633
    %3698 = vst [vmem:[#allocation2 + $0x44] sm:$0xf] %v3634
    %3699 = vst [vmem:[#allocation2 + $0x48] sm:$0xf] %v3635
    %3700 = vst [vmem:[#allocation2 + $0x4c] sm:$0xf] %v3636
    %3701 = vst [vmem:[#allocation2 + $0x50] sm:$0xf] %v3637
    %3702 = vst [vmem:[#allocation2 + $0x54] sm:$0xf] %v3638
    %3703 = vst [vmem:[#allocation2 + $0x58] sm:$0xf] %v3639
    %3704 = vst [vmem:[#allocation2 + $0x5c] sm:$0xf] %v3640
    %3705 = vst [vmem:[#allocation2 + $0x60] sm:$0xf] %v3641
    %3706 = vst [vmem:[#allocation2 + $0x64] sm:$0xf] %v3642
    %3707 = vst [vmem:[#allocation2 + $0x68] sm:$0xf] %v3643
    %3708 = vst [vmem:[#allocation2 + $0x6c] sm:$0xf] %v3644
    %3709 = vst [vmem:[#allocation2 + $0x70] sm:$0xf] %v3645
    %3710 = vst [vmem:[#allocation2 + $0x74] sm:$0xf] %v3646
    %3711 = vst [vmem:[#allocation2 + $0x78] sm:$0xf] %v3647
    %3712 = vst [vmem:[#allocation2 + $0x7c] sm:$0xf] %v3648
    // Predicated region
    $region38: #{tpu_custom_call.1} parent=1 // pred_check
      _
    $region39: #{tpu_custom_call.1} parent=1 // pred_check_branch
      %3714 = sbr.rel (0) target = $region41
    $region40: #{tpu_custom_call.1} parent=1 // pred_region
      %s3716 = ssub.s32 2048, 2048
      %3717 = vsyncadd [#allocation3], %s3716
      %s3718 = sshll.u32 [#allocation2], 4
      %s3719 = int_to_ptr.vmem [resolvable:$true] %s3718
      %3724 = dma.vmem_to_hbm [thread:$0]  %s3719, 2048, %s9, [#allocation3], 64, 64, 4
    $region41: #{tpu_custom_call.1} parent=1 // pred_fallthru
      _
    // Predicated region
    $region42: #{tpu_custom_call.1} parent=1 // pred_check
      _
    $region43: #{tpu_custom_call.1} parent=1 // pred_check_branch
      %3726 = sbr.rel (0) target = $region45
    $region44: #{tpu_custom_call.1} parent=1 // pred_region
      %3727 = dma.done [#allocation3], 2048
    $region45: #{tpu_custom_call.1} parent=1 // pred_fallthru
      _
    %3728 = vsyncpa [#allocation3], 1

</llo_original>
